<compile_context>
chip_gen: v6e
topology: v6e:2x2x1
jax: 0.10.0
libtpu: 0.0.40
codegen_flags: <defaults>
</compile_context>

<pallas_src>
import jax
import jax.numpy as jnp
from jax import lax
from jax.experimental import pallas as pl
from jax.experimental.pallas import tpu as pltpu

# ---------------- small Qwen3-like config ----------------
T = 128               # num_tokens (128-row MXU-aligned tile)
HIDDEN = 64           # hidden_size
NUM_HEADS = 4         # num_attention_heads
NUM_KV_HEADS = 2      # num_key_value_heads
HEAD_DIM = 32         # config.head_dim (explicit, like Qwen3)
INTERMEDIATE = 128    # intermediate_size
EPS = 1e-6            # rms_norm_eps
ROPE_THETA = 1000000.0

Q_SIZE = NUM_HEADS * HEAD_DIM        # 128
KV_SIZE = NUM_KV_HEADS * HEAD_DIM    # 64
GROUP = NUM_HEADS // NUM_KV_HEADS
SCALING = HEAD_DIM ** -0.5

F32 = jnp.float32
BF16 = jnp.bfloat16


def _rmsnorm(x, w, eps=EPS):
    var = jnp.mean(x * x, axis=-1, keepdims=True)
    return x * lax.rsqrt(var + eps) * w


def decoder_layer_kernel(h_ref, bias_ref,
                         cos_q_ref, sin_q_ref, cos_k_ref, sin_k_ref,
                         mq_ref, mk_ref, pq_ref, pk_ref,
                         w_in_ref, wqkv_ref, wq_ref, wk_ref, wo_ref,
                         w_post_ref, w_gu_ref, w_down_ref,
                         out_ref):
    h = h_ref[...]                                        # [T, H] f32
    residual = h
    n_tok = h.shape[0]

    # ---- input_layernorm (residual is None on entry) ----
    x = _rmsnorm(h, w_in_ref[...])

    # ---- fused QKV projection (bf16 operands, f32 accumulate) ----
    qkv = jnp.dot(x.astype(BF16), wqkv_ref[...], preferred_element_type=F32)
    q = qkv[:, :Q_SIZE]                                   # [T, 128]
    k = qkv[:, Q_SIZE:Q_SIZE + KV_SIZE]                   # [T, 64]
    v = qkv[:, Q_SIZE + KV_SIZE:]                         # [T, 64]

    # ---- per-head q/k RMSNorm, vectorized over heads ----
    # block-ones matmul broadcasts each head's sum-of-squares back to full width
    # (pure MXU work, no per-head lane slices / relayouts).
    def head_rmsnorm(t, m_ref, w_ref):
        ss = jnp.dot(t * t, m_ref[...], preferred_element_type=F32)
        return t * lax.rsqrt(ss * (1.0 / HEAD_DIM) + EPS) * w_ref[...]

    qn = head_rmsnorm(q, mq_ref, wq_ref)
    kn = head_rmsnorm(k, mk_ref, wk_ref)

    # ---- neox RoPE, vectorized over heads ----
    # rotate-half is a signed block-diagonal permutation matmul; cos/sin are
    # pre-tiled to full q/k width in the wrapper (broadcasts hoisted).
    def rope(t, p_ref, cos, sin):
        return t * cos + jnp.dot(t, p_ref[...], preferred_element_type=F32) * sin

    q_r = rope(qn, pq_ref, cos_q_ref[...], sin_q_ref[...])
    k_r = rope(kn, pk_ref, cos_k_ref[...], sin_k_ref[...])

    # ---- causal GQA attention ----
    bias = bias_ref[...]                                  # [T, T] additive mask (from positions)

    # KV head slices hoisted out of the query-head loop (2 slices each, not per q-head)
    k_heads = [k_r[:, i * HEAD_DIM:(i + 1) * HEAD_DIM].astype(BF16)
               for i in range(NUM_KV_HEADS)]
    v_heads = [v[:, i * HEAD_DIM:(i + 1) * HEAD_DIM].astype(BF16)
               for i in range(NUM_KV_HEADS)]
    wo = wo_ref[...]                                      # [Q_SIZE, HIDDEN] bf16

    o = jnp.zeros((n_tok, HIDDEN), F32)
    for hq in range(NUM_HEADS):
        kv = hq // GROUP
        qh = q_r[:, hq * HEAD_DIM:(hq + 1) * HEAD_DIM].astype(BF16)
        # scores: q @ k^T (bf16 in, f32 out), scaled, plus additive causal bias
        s = lax.dot_general(qh, k_heads[kv], (((1,), (1,)), ((), ())),
                            preferred_element_type=F32) * SCALING + bias
        m = jnp.max(s, axis=-1, keepdims=True)
        p = jnp.exp(s - m)
        # EUP reciprocal instead of a VALU divide
        p = p * pl.reciprocal(jnp.sum(p, axis=-1, keepdims=True), approx=True)
        oh = jnp.dot(p.astype(BF16), v_heads[kv], preferred_element_type=F32)  # [T, D]
        # fold o_proj per head: accumulate into [T, HIDDEN], skip the lane concat
        o = o + jnp.dot(oh.astype(BF16), wo[hq * HEAD_DIM:(hq + 1) * HEAD_DIM, :],
                        preferred_element_type=F32)

    # ---- post_attention_layernorm (fused add + norm, vLLM semantics) ----
    residual2 = o + residual
    x2 = _rmsnorm(residual2, w_post_ref[...])

    # ---- Qwen3MLP: SwiGLU ----
    gu = jnp.dot(x2.astype(BF16), w_gu_ref[...], preferred_element_type=F32)  # [T, 2I]
    gate = gu[:, :INTERMEDIATE]
    up = gu[:, INTERMEDIATE:]
    act = gate * jax.nn.sigmoid(gate) * up                # SiLU(gate) * up, f32
    mlp = jnp.dot(act.astype(BF16), w_down_ref[...], preferred_element_type=F32)

    # ---- lane-dense packed output: one full-width [T, 2*HIDDEN] store ----
    out_ref[...] = jnp.concatenate([mlp, residual2], axis=-1)


# ---------------- wrapper-side constant tables ----------------
def _rot_half_matrix(d):
    """Signed permutation P with x @ P == rotate_half(x) = [-x2, x1]."""
    half = d // 2
    p = jnp.zeros((d, d), F32)
    p = p.at[jnp.arange(half) + half, jnp.arange(half)].set(-1.0)
    p = p.at[jnp.arange(half), jnp.arange(half) + half].set(1.0)
    return p


def _rope_tables(positions):
    inv_freq = 1.0 / (ROPE_THETA ** (
        jnp.arange(0, HEAD_DIM, 2, dtype=F32) / HEAD_DIM))
    freqs = positions.astype(F32)[:, None] * inv_freq[None, :]      # [T, D/2]
    cos = jnp.cos(freqs)
    sin = jnp.sin(freqs)
    cos_h = jnp.concatenate([cos, cos], axis=-1)                    # [T, D]
    sin_h = jnp.concatenate([sin, sin], axis=-1)                    # [T, D]
    cos_q = jnp.tile(cos_h, (1, NUM_HEADS))                         # [T, Q_SIZE]
    sin_q = jnp.tile(sin_h, (1, NUM_HEADS))
    cos_k = jnp.tile(cos_h, (1, NUM_KV_HEADS))                      # [T, KV_SIZE]
    sin_k = jnp.tile(sin_h, (1, NUM_KV_HEADS))
    return cos_q, sin_q, cos_k, sin_k


@jax.jit
def qwen3_decoder_layer(positions, hidden_states, params):
    n_tok = hidden_states.shape[0]

    cos_q, sin_q, cos_k, sin_k = _rope_tables(positions)

    # causal additive bias built from positions (correct for non-arange positions)
    pos = positions.astype(jnp.int32)
    bias = jnp.where(pos[:, None] >= pos[None, :], 0.0, -1e30).astype(F32)

    # constant per-head helper matrices (block-ones for norm, signed perm for RoPE)
    p_head = _rot_half_matrix(HEAD_DIM)
    pq = jnp.kron(jnp.eye(NUM_HEADS, dtype=F32), p_head)            # [128, 128]
    pk = jnp.kron(jnp.eye(NUM_KV_HEADS, dtype=F32), p_head)         # [64, 64]
    ones_blk = jnp.ones((HEAD_DIM, HEAD_DIM), F32)
    mq = jnp.kron(jnp.eye(NUM_HEADS, dtype=F32), ones_blk)          # [128, 128]
    mk = jnp.kron(jnp.eye(NUM_KV_HEADS, dtype=F32), ones_blk)       # [64, 64]

    wq_full = jnp.tile(params["wq_norm"], (1, NUM_HEADS))           # [1, Q_SIZE]
    wk_full = jnp.tile(params["wk_norm"], (1, NUM_KV_HEADS))        # [1, KV_SIZE]

    vmem = pl.BlockSpec(memory_space=pltpu.MemorySpace.VMEM)

    packed = pl.pallas_call(
        decoder_layer_kernel,
        out_shape=jax.ShapeDtypeStruct((n_tok, 2 * HIDDEN), F32),
        in_specs=[vmem] * 18,
        out_specs=vmem,
    )(hidden_states, bias,
      cos_q, sin_q, cos_k, sin_k,
      mq, mk, pq, pk,
      params["w_in"], params["wqkv"].astype(BF16), wq_full, wk_full,
      params["wo"].astype(BF16), params["w_post"],
      params["w_gate_up"].astype(BF16), params["w_down"].astype(BF16))

    return packed[:, :HIDDEN], packed[:, HIDDEN:]


def make_params():
    key = jax.random.PRNGKey(0)
    ks = jax.random.split(key, 8)
    s = 0.05
    return {
        "w_in":      jnp.ones((1, HIDDEN), F32),
        "w_post":    jnp.ones((1, HIDDEN), F32),
        "wq_norm":   jnp.ones((1, HEAD_DIM), F32),
        "wk_norm":   jnp.ones((1, HEAD_DIM), F32),
        "wqkv":      (jax.random.normal(ks[0], (HIDDEN, Q_SIZE + 2 * KV_SIZE)) * s
                      ).astype(F32),
        "wo":        (jax.random.normal(ks[1], (Q_SIZE, HIDDEN)) * s).astype(F32),
        "w_gate_up": (jax.random.normal(ks[2], (HIDDEN, 2 * INTERMEDIATE)) * s
                      ).astype(F32),
        "w_down":    (jax.random.normal(ks[3], (INTERMEDIATE, HIDDEN)) * s
                      ).astype(F32),
    }


def reference(positions, h, p):
    """Pure-JAX f32 reference (vLLM residual semantics) for correctness check."""
    n_tok = h.shape[0]
    inv_freq = 1.0 / (ROPE_THETA ** (
        jnp.arange(0, HEAD_DIM, 2, dtype=F32) / HEAD_DIM))
    freqs = positions.astype(F32)[:, None] * inv_freq[None, :]
    cos, sin = jnp.cos(freqs), jnp.sin(freqs)

    def rms(x, w):
        return x * lax.rsqrt(jnp.mean(x * x, -1, keepdims=True) + EPS) * w

    residual = h
    x = rms(h, p["w_in"])
    qkv = x @ p["wqkv"]
    q, k, v = (qkv[:, :Q_SIZE],
               qkv[:, Q_SIZE:Q_SIZE + KV_SIZE],
               qkv[:, Q_SIZE + KV_SIZE:])

    def per_head(t, n_heads, w):
        t = t.reshape(n_tok, n_heads, HEAD_DIM)
        t = rms(t, w[0])
        x1, x2 = t[..., :HEAD_DIM // 2], t[..., HEAD_DIM // 2:]
        c, s_ = cos[:, None, :], sin[:, None, :]
        return jnp.concatenate([x1 * c - x2 * s_, x2 * c + x1 * s_], -1)

    qh = per_head(q, NUM_HEADS, p["wq_norm"])
    kh = per_head(k, NUM_KV_HEADS, p["wk_norm"])
    vh = v.reshape(n_tok, NUM_KV_HEADS, HEAD_DIM)
    kh = jnp.repeat(kh, GROUP, axis=1)
    vh = jnp.repeat(vh, GROUP, axis=1)
    s_ = jnp.einsum("qhd,khd->hqk", qh, kh) * SCALING
    mask = positions[:, None] >= positions[None, :]
    s_ = jnp.where(mask[None], s_, -1e30)
    pw = jax.nn.softmax(s_, axis=-1)
    o = jnp.einsum("hqk,khd->qhd", pw, vh).reshape(n_tok, Q_SIZE) @ p["wo"]

    residual2 = o + residual
    x2 = rms(residual2, p["w_post"])
    gu = x2 @ p["w_gate_up"]
    g, u = gu[:, :INTERMEDIATE], gu[:, INTERMEDIATE:]
    mlp = (g * jax.nn.sigmoid(g) * u) @ p["w_down"]
    return mlp, residual2


# TODO(synk): vLLM's Attention backend (paged KV cache, decode with prior context)
# has no equivalent here; this kernel implements single-sequence causal prefill.

if __name__ == "__main__":
    key = jax.random.PRNGKey(0)
    positions = jnp.arange(T, dtype=jnp.int32)
    hidden_states = jax.random.normal(jax.random.fold_in(key, 123),
                                      (T, HIDDEN), F32)
    params = make_params()

    out_h, out_res = qwen3_decoder_layer(positions, hidden_states, params)
    jax.block_until_ready((out_h, out_res))

    ref_h, ref_res = reference(positions, hidden_states, params)
    assert jnp.max(jnp.abs(out_h - ref_h)) < 5e-2, float(jnp.max(jnp.abs(out_h - ref_h)))
    assert jnp.max(jnp.abs(out_res - ref_res)) < 5e-2, float(jnp.max(jnp.abs(out_res - ref_res)))

    print("KERNEL_OK")
</pallas_src>

<mosaic_0001>
module attributes {stable_mosaic.version = 11 : i64} {
  func.func @decoder_layer_kernel(%arg0: memref<128x64xf32, #tpu.memory_space<vmem>>, %arg1: memref<128x128xf32, #tpu.memory_space<vmem>>, %arg2: memref<128x128xf32, #tpu.memory_space<vmem>>, %arg3: memref<128x128xf32, #tpu.memory_space<vmem>>, %arg4: memref<128x64xf32, #tpu.memory_space<vmem>>, %arg5: memref<128x64xf32, #tpu.memory_space<vmem>>, %arg6: memref<128x128xf32, #tpu.memory_space<vmem>>, %arg7: memref<64x64xf32, #tpu.memory_space<vmem>>, %arg8: memref<128x128xf32, #tpu.memory_space<vmem>>, %arg9: memref<64x64xf32, #tpu.memory_space<vmem>>, %arg10: memref<1x64xf32, #tpu.memory_space<vmem>>, %arg11: memref<64x256xbf16, #tpu.memory_space<vmem>>, %arg12: memref<1x128xf32, #tpu.memory_space<vmem>>, %arg13: memref<1x64xf32, #tpu.memory_space<vmem>>, %arg14: memref<128x64xbf16, #tpu.memory_space<vmem>>, %arg15: memref<1x64xf32, #tpu.memory_space<vmem>>, %arg16: memref<64x256xbf16, #tpu.memory_space<vmem>>, %arg17: memref<128x64xbf16, #tpu.memory_space<vmem>>, %arg18: memref<128x128xf32, #tpu.memory_space<vmem>>) attributes {dimension_semantics = [], scalar_prefetch = 0 : i64, scratch_operands = 0 : i64, tpu.core_type = #tpu.core_type<tc>} {
    %c0 = arith.constant 0 : index
    %c0_0 = arith.constant 0 : index
    %0 = vector.load %arg0[%c0, %c0_0] : memref<128x64xf32, #tpu.memory_space<vmem>>, vector<128x64xf32>
    %c0_1 = arith.constant 0 : index
    %c0_2 = arith.constant 0 : index
    %1 = vector.load %arg10[%c0_1, %c0_2] : memref<1x64xf32, #tpu.memory_space<vmem>>, vector<1x64xf32>
    %2 = arith.mulf %0, %0 : vector<128x64xf32>
    %cst = arith.constant dense<0.000000e+00> : vector<128xf32>
    %3 = vector.multi_reduction <add>, %2, %cst [1] : vector<128x64xf32> to vector<128xf32>
    %4 = vector.shape_cast %3 : vector<128xf32> to vector<128x1xf32>
    %cst_3 = arith.constant 6.400000e+01 : f32
    %5 = vector.broadcast %cst_3 : f32 to vector<128x1xf32>
    %6 = arith.divf %4, %5 : vector<128x1xf32>
    %cst_4 = arith.constant 9.99999997E-7 : f32
    %7 = vector.broadcast %cst_4 : f32 to vector<128x1xf32>
    %8 = arith.addf %6, %7 : vector<128x1xf32>
    %9 = math.rsqrt %8 : vector<128x1xf32>
    %10 = vector.broadcast %9 : vector<128x1xf32> to vector<128x64xf32>
    %11 = arith.mulf %0, %10 : vector<128x64xf32>
    %12 = vector.broadcast %1 : vector<1x64xf32> to vector<128x64xf32>
    %13 = arith.mulf %11, %12 : vector<128x64xf32>
    %14 = arith.truncf %13 : vector<128x64xf32> to vector<128x64xbf16>
    %c0_5 = arith.constant 0 : index
    %c0_6 = arith.constant 0 : index
    %15 = vector.load %arg11[%c0_5, %c0_6] : memref<64x256xbf16, #tpu.memory_space<vmem>>, vector<64x256xbf16>
    %cst_7 = arith.constant dense<0.000000e+00> : vector<128x256xf32>
    %16 = tpu.matmul %14, %15, %cst_7 {dimension_numbers = #tpu.dot_dimension_numbers<[1], [0], [0], [1], [0, 0, 1, 1], [], []>} : vector<128x64xbf16>, vector<64x256xbf16>, vector<128x256xf32> -> vector<128x256xf32>
    %17 = vector.extract_strided_slice %16 {offsets = [0, 0], sizes = [128, 128], strides = [1, 1]} : vector<128x256xf32> to vector<128x128xf32>
    %18 = vector.extract_strided_slice %16 {offsets = [0, 128], sizes = [128, 64], strides = [1, 1]} : vector<128x256xf32> to vector<128x64xf32>
    %19 = vector.extract_strided_slice %16 {offsets = [0, 192], sizes = [128, 64], strides = [1, 1]} : vector<128x256xf32> to vector<128x64xf32>
    %20 = arith.mulf %17, %17 : vector<128x128xf32>
    %c0_8 = arith.constant 0 : index
    %c0_9 = arith.constant 0 : index
    %21 = vector.load %arg6[%c0_8, %c0_9] : memref<128x128xf32, #tpu.memory_space<vmem>>, vector<128x128xf32>
    %cst_10 = arith.constant dense<0.000000e+00> : vector<128x128xf32>
    %22 = tpu.matmul %20, %21, %cst_10 {dimension_numbers = #tpu.dot_dimension_numbers<[1], [0], [0], [1], [0, 0, 1, 1], [], []>} : vector<128x128xf32>, vector<128x128xf32>, vector<128x128xf32> -> vector<128x128xf32>
    %cst_11 = arith.constant 3.125000e-02 : f32
    %23 = vector.broadcast %cst_11 : f32 to vector<128x128xf32>
    %24 = arith.mulf %22, %23 : vector<128x128xf32>
    %cst_12 = arith.constant 9.99999997E-7 : f32
    %25 = vector.broadcast %cst_12 : f32 to vector<128x128xf32>
    %26 = arith.addf %24, %25 : vector<128x128xf32>
    %27 = math.rsqrt %26 : vector<128x128xf32>
    %28 = arith.mulf %17, %27 : vector<128x128xf32>
    %c0_13 = arith.constant 0 : index
    %c0_14 = arith.constant 0 : index
    %29 = vector.load %arg12[%c0_13, %c0_14] : memref<1x128xf32, #tpu.memory_space<vmem>>, vector<1x128xf32>
    %30 = vector.broadcast %29 : vector<1x128xf32> to vector<128x128xf32>
    %31 = arith.mulf %28, %30 : vector<128x128xf32>
    %32 = arith.mulf %18, %18 : vector<128x64xf32>
    %c0_15 = arith.constant 0 : index
    %c0_16 = arith.constant 0 : index
    %33 = vector.load %arg7[%c0_15, %c0_16] : memref<64x64xf32, #tpu.memory_space<vmem>>, vector<64x64xf32>
    %cst_17 = arith.constant dense<0.000000e+00> : vector<128x64xf32>
    %34 = tpu.matmul %32, %33, %cst_17 {dimension_numbers = #tpu.dot_dimension_numbers<[1], [0], [0], [1], [0, 0, 1, 1], [], []>} : vector<128x64xf32>, vector<64x64xf32>, vector<128x64xf32> -> vector<128x64xf32>
    %cst_18 = arith.constant 3.125000e-02 : f32
    %35 = vector.broadcast %cst_18 : f32 to vector<128x64xf32>
    %36 = arith.mulf %34, %35 : vector<128x64xf32>
    %cst_19 = arith.constant 9.99999997E-7 : f32
    %37 = vector.broadcast %cst_19 : f32 to vector<128x64xf32>
    %38 = arith.addf %36, %37 : vector<128x64xf32>
    %39 = math.rsqrt %38 : vector<128x64xf32>
    %40 = arith.mulf %18, %39 : vector<128x64xf32>
    %c0_20 = arith.constant 0 : index
    %c0_21 = arith.constant 0 : index
    %41 = vector.load %arg13[%c0_20, %c0_21] : memref<1x64xf32, #tpu.memory_space<vmem>>, vector<1x64xf32>
    %42 = vector.broadcast %41 : vector<1x64xf32> to vector<128x64xf32>
    %43 = arith.mulf %40, %42 : vector<128x64xf32>
    %c0_22 = arith.constant 0 : index
    %c0_23 = arith.constant 0 : index
    %44 = vector.load %arg2[%c0_22, %c0_23] : memref<128x128xf32, #tpu.memory_space<vmem>>, vector<128x128xf32>
    %c0_24 = arith.constant 0 : index
    %c0_25 = arith.constant 0 : index
    %45 = vector.load %arg3[%c0_24, %c0_25] : memref<128x128xf32, #tpu.memory_space<vmem>>, vector<128x128xf32>
    %46 = arith.mulf %31, %44 : vector<128x128xf32>
    %c0_26 = arith.constant 0 : index
    %c0_27 = arith.constant 0 : index
    %47 = vector.load %arg8[%c0_26, %c0_27] : memref<128x128xf32, #tpu.memory_space<vmem>>, vector<128x128xf32>
    %cst_28 = arith.constant dense<0.000000e+00> : vector<128x128xf32>
    %48 = tpu.matmul %31, %47, %cst_28 {dimension_numbers = #tpu.dot_dimension_numbers<[1], [0], [0], [1], [0, 0, 1, 1], [], []>} : vector<128x128xf32>, vector<128x128xf32>, vector<128x128xf32> -> vector<128x128xf32>
    %49 = arith.mulf %48, %45 : vector<128x128xf32>
    %50 = arith.addf %46, %49 : vector<128x128xf32>
    %c0_29 = arith.constant 0 : index
    %c0_30 = arith.constant 0 : index
    %51 = vector.load %arg4[%c0_29, %c0_30] : memref<128x64xf32, #tpu.memory_space<vmem>>, vector<128x64xf32>
    %c0_31 = arith.constant 0 : index
    %c0_32 = arith.constant 0 : index
    %52 = vector.load %arg5[%c0_31, %c0_32] : memref<128x64xf32, #tpu.memory_space<vmem>>, vector<128x64xf32>
    %53 = arith.mulf %43, %51 : vector<128x64xf32>
    %c0_33 = arith.constant 0 : index
    %c0_34 = arith.constant 0 : index
    %54 = vector.load %arg9[%c0_33, %c0_34] : memref<64x64xf32, #tpu.memory_space<vmem>>, vector<64x64xf32>
    %cst_35 = arith.constant dense<0.000000e+00> : vector<128x64xf32>
    %55 = tpu.matmul %43, %54, %cst_35 {dimension_numbers = #tpu.dot_dimension_numbers<[1], [0], [0], [1], [0, 0, 1, 1], [], []>} : vector<128x64xf32>, vector<64x64xf32>, vector<128x64xf32> -> vector<128x64xf32>
    %56 = arith.mulf %55, %52 : vector<128x64xf32>
    %57 = arith.addf %53, %56 : vector<128x64xf32>
    %c0_36 = arith.constant 0 : index
    %c0_37 = arith.constant 0 : index
    %58 = vector.load %arg1[%c0_36, %c0_37] : memref<128x128xf32, #tpu.memory_space<vmem>>, vector<128x128xf32>
    %59 = vector.extract_strided_slice %57 {offsets = [0, 0], sizes = [128, 32], strides = [1, 1]} : vector<128x64xf32> to vector<128x32xf32>
    %60 = arith.truncf %59 : vector<128x32xf32> to vector<128x32xbf16>
    %61 = vector.extract_strided_slice %57 {offsets = [0, 32], sizes = [128, 32], strides = [1, 1]} : vector<128x64xf32> to vector<128x32xf32>
    %62 = arith.truncf %61 : vector<128x32xf32> to vector<128x32xbf16>
    %63 = vector.extract_strided_slice %19 {offsets = [0, 0], sizes = [128, 32], strides = [1, 1]} : vector<128x64xf32> to vector<128x32xf32>
    %64 = arith.truncf %63 : vector<128x32xf32> to vector<128x32xbf16>
    %65 = vector.extract_strided_slice %19 {offsets = [0, 32], sizes = [128, 32], strides = [1, 1]} : vector<128x64xf32> to vector<128x32xf32>
    %66 = arith.truncf %65 : vector<128x32xf32> to vector<128x32xbf16>
    %c0_38 = arith.constant 0 : index
    %c0_39 = arith.constant 0 : index
    %67 = vector.load %arg14[%c0_38, %c0_39] : memref<128x64xbf16, #tpu.memory_space<vmem>>, vector<128x64xbf16>
    %cst_40 = arith.constant 0.000000e+00 : f32
    %68 = vector.broadcast %cst_40 : f32 to vector<128x64xf32>
    %69 = vector.extract_strided_slice %50 {offsets = [0, 0], sizes = [128, 32], strides = [1, 1]} : vector<128x128xf32> to vector<128x32xf32>
    %70 = arith.truncf %69 : vector<128x32xf32> to vector<128x32xbf16>
    %cst_41 = arith.constant dense<0.000000e+00> : vector<128x128xf32>
    %71 = tpu.matmul %70, %60, %cst_41 {dimension_numbers = #tpu.dot_dimension_numbers<[1], [1], [0], [0], [0, 0, 1, 0], [], []>} : vector<128x32xbf16>, vector<128x32xbf16>, vector<128x128xf32> -> vector<128x128xf32>
    %cst_42 = arith.constant 0.176776692 : f32
    %72 = vector.broadcast %cst_42 : f32 to vector<128x128xf32>
    %73 = arith.mulf %71, %72 : vector<128x128xf32>
    %74 = arith.addf %73, %58 : vector<128x128xf32>
    %cst_43 = arith.constant dense<0xFF800000> : vector<128xf32>
    %75 = vector.multi_reduction <maximumf>, %74, %cst_43 [1] : vector<128x128xf32> to vector<128xf32>
    %76 = vector.shape_cast %75 : vector<128xf32> to vector<128x1xf32>
    %77 = vector.broadcast %76 : vector<128x1xf32> to vector<128x128xf32>
    %78 = arith.subf %74, %77 : vector<128x128xf32>
    %79 = math.exp %78 : vector<128x128xf32>
    %cst_44 = arith.constant dense<0.000000e+00> : vector<128xf32>
    %80 = vector.multi_reduction <add>, %79, %cst_44 [1] : vector<128x128xf32> to vector<128xf32>
    %81 = vector.shape_cast %80 : vector<128xf32> to vector<128x1xf32>
    %82 = tpu.reciprocal %81 {approx = true} : vector<128x1xf32> -> vector<128x1xf32>
    %83 = vector.broadcast %82 : vector<128x1xf32> to vector<128x128xf32>
    %84 = arith.mulf %79, %83 : vector<128x128xf32>
    %85 = arith.truncf %84 : vector<128x128xf32> to vector<128x128xbf16>
    %cst_45 = arith.constant dense<0.000000e+00> : vector<128x32xf32>
    %86 = tpu.matmul %85, %64, %cst_45 {dimension_numbers = #tpu.dot_dimension_numbers<[1], [0], [0], [1], [0, 0, 1, 1], [], []>} : vector<128x128xbf16>, vector<128x32xbf16>, vector<128x32xf32> -> vector<128x32xf32>
    %87 = arith.truncf %86 : vector<128x32xf32> to vector<128x32xbf16>
    %88 = vector.extract_strided_slice %67 {offsets = [0, 0], sizes = [32, 64], strides = [1, 1]} : vector<128x64xbf16> to vector<32x64xbf16>
    %cst_46 = arith.constant dense<0.000000e+00> : vector<128x64xf32>
    %89 = tpu.matmul %87, %88, %cst_46 {dimension_numbers = #tpu.dot_dimension_numbers<[1], [0], [0], [1], [0, 0, 1, 1], [], []>} : vector<128x32xbf16>, vector<32x64xbf16>, vector<128x64xf32> -> vector<128x64xf32>
    %90 = arith.addf %68, %89 : vector<128x64xf32>
    %91 = vector.extract_strided_slice %50 {offsets = [0, 32], sizes = [128, 32], strides = [1, 1]} : vector<128x128xf32> to vector<128x32xf32>
    %92 = arith.truncf %91 : vector<128x32xf32> to vector<128x32xbf16>
    %cst_47 = arith.constant dense<0.000000e+00> : vector<128x128xf32>
    %93 = tpu.matmul %92, %60, %cst_47 {dimension_numbers = #tpu.dot_dimension_numbers<[1], [1], [0], [0], [0, 0, 1, 0], [], []>} : vector<128x32xbf16>, vector<128x32xbf16>, vector<128x128xf32> -> vector<128x128xf32>
    %cst_48 = arith.constant 0.176776692 : f32
    %94 = vector.broadcast %cst_48 : f32 to vector<128x128xf32>
    %95 = arith.mulf %93, %94 : vector<128x128xf32>
    %96 = arith.addf %95, %58 : vector<128x128xf32>
    %cst_49 = arith.constant dense<0xFF800000> : vector<128xf32>
    %97 = vector.multi_reduction <maximumf>, %96, %cst_49 [1] : vector<128x128xf32> to vector<128xf32>
    %98 = vector.shape_cast %97 : vector<128xf32> to vector<128x1xf32>
    %99 = vector.broadcast %98 : vector<128x1xf32> to vector<128x128xf32>
    %100 = arith.subf %96, %99 : vector<128x128xf32>
    %101 = math.exp %100 : vector<128x128xf32>
    %cst_50 = arith.constant dense<0.000000e+00> : vector<128xf32>
    %102 = vector.multi_reduction <add>, %101, %cst_50 [1] : vector<128x128xf32> to vector<128xf32>
    %103 = vector.shape_cast %102 : vector<128xf32> to vector<128x1xf32>
    %104 = tpu.reciprocal %103 {approx = true} : vector<128x1xf32> -> vector<128x1xf32>
    %105 = vector.broadcast %104 : vector<128x1xf32> to vector<128x128xf32>
    %106 = arith.mulf %101, %105 : vector<128x128xf32>
    %107 = arith.truncf %106 : vector<128x128xf32> to vector<128x128xbf16>
    %cst_51 = arith.constant dense<0.000000e+00> : vector<128x32xf32>
    %108 = tpu.matmul %107, %64, %cst_51 {dimension_numbers = #tpu.dot_dimension_numbers<[1], [0], [0], [1], [0, 0, 1, 1], [], []>} : vector<128x128xbf16>, vector<128x32xbf16>, vector<128x32xf32> -> vector<128x32xf32>
    %109 = arith.truncf %108 : vector<128x32xf32> to vector<128x32xbf16>
    %110 = vector.extract_strided_slice %67 {offsets = [32, 0], sizes = [32, 64], strides = [1, 1]} : vector<128x64xbf16> to vector<32x64xbf16>
    %cst_52 = arith.constant dense<0.000000e+00> : vector<128x64xf32>
    %111 = tpu.matmul %109, %110, %cst_52 {dimension_numbers = #tpu.dot_dimension_numbers<[1], [0], [0], [1], [0, 0, 1, 1], [], []>} : vector<128x32xbf16>, vector<32x64xbf16>, vector<128x64xf32> -> vector<128x64xf32>
    %112 = arith.addf %90, %111 : vector<128x64xf32>
    %113 = vector.extract_strided_slice %50 {offsets = [0, 64], sizes = [128, 32], strides = [1, 1]} : vector<128x128xf32> to vector<128x32xf32>
    %114 = arith.truncf %113 : vector<128x32xf32> to vector<128x32xbf16>
    %cst_53 = arith.constant dense<0.000000e+00> : vector<128x128xf32>
    %115 = tpu.matmul %114, %62, %cst_53 {dimension_numbers = #tpu.dot_dimension_numbers<[1], [1], [0], [0], [0, 0, 1, 0], [], []>} : vector<128x32xbf16>, vector<128x32xbf16>, vector<128x128xf32> -> vector<128x128xf32>
    %cst_54 = arith.constant 0.176776692 : f32
    %116 = vector.broadcast %cst_54 : f32 to vector<128x128xf32>
    %117 = arith.mulf %115, %116 : vector<128x128xf32>
    %118 = arith.addf %117, %58 : vector<128x128xf32>
    %cst_55 = arith.constant dense<0xFF800000> : vector<128xf32>
    %119 = vector.multi_reduction <maximumf>, %118, %cst_55 [1] : vector<128x128xf32> to vector<128xf32>
    %120 = vector.shape_cast %119 : vector<128xf32> to vector<128x1xf32>
    %121 = vector.broadcast %120 : vector<128x1xf32> to vector<128x128xf32>
    %122 = arith.subf %118, %121 : vector<128x128xf32>
    %123 = math.exp %122 : vector<128x128xf32>
    %cst_56 = arith.constant dense<0.000000e+00> : vector<128xf32>
    %124 = vector.multi_reduction <add>, %123, %cst_56 [1] : vector<128x128xf32> to vector<128xf32>
    %125 = vector.shape_cast %124 : vector<128xf32> to vector<128x1xf32>
    %126 = tpu.reciprocal %125 {approx = true} : vector<128x1xf32> -> vector<128x1xf32>
    %127 = vector.broadcast %126 : vector<128x1xf32> to vector<128x128xf32>
    %128 = arith.mulf %123, %127 : vector<128x128xf32>
    %129 = arith.truncf %128 : vector<128x128xf32> to vector<128x128xbf16>
    %cst_57 = arith.constant dense<0.000000e+00> : vector<128x32xf32>
    %130 = tpu.matmul %129, %66, %cst_57 {dimension_numbers = #tpu.dot_dimension_numbers<[1], [0], [0], [1], [0, 0, 1, 1], [], []>} : vector<128x128xbf16>, vector<128x32xbf16>, vector<128x32xf32> -> vector<128x32xf32>
    %131 = arith.truncf %130 : vector<128x32xf32> to vector<128x32xbf16>
    %132 = vector.extract_strided_slice %67 {offsets = [64, 0], sizes = [32, 64], strides = [1, 1]} : vector<128x64xbf16> to vector<32x64xbf16>
    %cst_58 = arith.constant dense<0.000000e+00> : vector<128x64xf32>
    %133 = tpu.matmul %131, %132, %cst_58 {dimension_numbers = #tpu.dot_dimension_numbers<[1], [0], [0], [1], [0, 0, 1, 1], [], []>} : vector<128x32xbf16>, vector<32x64xbf16>, vector<128x64xf32> -> vector<128x64xf32>
    %134 = arith.addf %112, %133 : vector<128x64xf32>
    %135 = vector.extract_strided_slice %50 {offsets = [0, 96], sizes = [128, 32], strides = [1, 1]} : vector<128x128xf32> to vector<128x32xf32>
    %136 = arith.truncf %135 : vector<128x32xf32> to vector<128x32xbf16>
    %cst_59 = arith.constant dense<0.000000e+00> : vector<128x128xf32>
    %137 = tpu.matmul %136, %62, %cst_59 {dimension_numbers = #tpu.dot_dimension_numbers<[1], [1], [0], [0], [0, 0, 1, 0], [], []>} : vector<128x32xbf16>, vector<128x32xbf16>, vector<128x128xf32> -> vector<128x128xf32>
    %cst_60 = arith.constant 0.176776692 : f32
    %138 = vector.broadcast %cst_60 : f32 to vector<128x128xf32>
    %139 = arith.mulf %137, %138 : vector<128x128xf32>
    %140 = arith.addf %139, %58 : vector<128x128xf32>
    %cst_61 = arith.constant dense<0xFF800000> : vector<128xf32>
    %141 = vector.multi_reduction <maximumf>, %140, %cst_61 [1] : vector<128x128xf32> to vector<128xf32>
    %142 = vector.shape_cast %141 : vector<128xf32> to vector<128x1xf32>
    %143 = vector.broadcast %142 : vector<128x1xf32> to vector<128x128xf32>
    %144 = arith.subf %140, %143 : vector<128x128xf32>
    %145 = math.exp %144 : vector<128x128xf32>
    %cst_62 = arith.constant dense<0.000000e+00> : vector<128xf32>
    %146 = vector.multi_reduction <add>, %145, %cst_62 [1] : vector<128x128xf32> to vector<128xf32>
    %147 = vector.shape_cast %146 : vector<128xf32> to vector<128x1xf32>
    %148 = tpu.reciprocal %147 {approx = true} : vector<128x1xf32> -> vector<128x1xf32>
    %149 = vector.broadcast %148 : vector<128x1xf32> to vector<128x128xf32>
    %150 = arith.mulf %145, %149 : vector<128x128xf32>
    %151 = arith.truncf %150 : vector<128x128xf32> to vector<128x128xbf16>
    %cst_63 = arith.constant dense<0.000000e+00> : vector<128x32xf32>
    %152 = tpu.matmul %151, %66, %cst_63 {dimension_numbers = #tpu.dot_dimension_numbers<[1], [0], [0], [1], [0, 0, 1, 1], [], []>} : vector<128x128xbf16>, vector<128x32xbf16>, vector<128x32xf32> -> vector<128x32xf32>
    %153 = arith.truncf %152 : vector<128x32xf32> to vector<128x32xbf16>
    %154 = vector.extract_strided_slice %67 {offsets = [96, 0], sizes = [32, 64], strides = [1, 1]} : vector<128x64xbf16> to vector<32x64xbf16>
    %cst_64 = arith.constant dense<0.000000e+00> : vector<128x64xf32>
    %155 = tpu.matmul %153, %154, %cst_64 {dimension_numbers = #tpu.dot_dimension_numbers<[1], [0], [0], [1], [0, 0, 1, 1], [], []>} : vector<128x32xbf16>, vector<32x64xbf16>, vector<128x64xf32> -> vector<128x64xf32>
    %156 = arith.addf %134, %155 : vector<128x64xf32>
    %157 = arith.addf %156, %0 : vector<128x64xf32>
    %c0_65 = arith.constant 0 : index
    %c0_66 = arith.constant 0 : index
    %158 = vector.load %arg15[%c0_65, %c0_66] : memref<1x64xf32, #tpu.memory_space<vmem>>, vector<1x64xf32>
    %159 = arith.mulf %157, %157 : vector<128x64xf32>
    %cst_67 = arith.constant dense<0.000000e+00> : vector<128xf32>
    %160 = vector.multi_reduction <add>, %159, %cst_67 [1] : vector<128x64xf32> to vector<128xf32>
    %161 = vector.shape_cast %160 : vector<128xf32> to vector<128x1xf32>
    %cst_68 = arith.constant 6.400000e+01 : f32
    %162 = vector.broadcast %cst_68 : f32 to vector<128x1xf32>
    %163 = arith.divf %161, %162 : vector<128x1xf32>
    %cst_69 = arith.constant 9.99999997E-7 : f32
    %164 = vector.broadcast %cst_69 : f32 to vector<128x1xf32>
    %165 = arith.addf %163, %164 : vector<128x1xf32>
    %166 = math.rsqrt %165 : vector<128x1xf32>
    %167 = vector.broadcast %166 : vector<128x1xf32> to vector<128x64xf32>
    %168 = arith.mulf %157, %167 : vector<128x64xf32>
    %169 = vector.broadcast %158 : vector<1x64xf32> to vector<128x64xf32>
    %170 = arith.mulf %168, %169 : vector<128x64xf32>
    %171 = arith.truncf %170 : vector<128x64xf32> to vector<128x64xbf16>
    %c0_70 = arith.constant 0 : index
    %c0_71 = arith.constant 0 : index
    %172 = vector.load %arg16[%c0_70, %c0_71] : memref<64x256xbf16, #tpu.memory_space<vmem>>, vector<64x256xbf16>
    %cst_72 = arith.constant dense<0.000000e+00> : vector<128x256xf32>
    %173 = tpu.matmul %171, %172, %cst_72 {dimension_numbers = #tpu.dot_dimension_numbers<[1], [0], [0], [1], [0, 0, 1, 1], [], []>} : vector<128x64xbf16>, vector<64x256xbf16>, vector<128x256xf32> -> vector<128x256xf32>
    %174 = vector.extract_strided_slice %173 {offsets = [0, 0], sizes = [128, 128], strides = [1, 1]} : vector<128x256xf32> to vector<128x128xf32>
    %175 = vector.extract_strided_slice %173 {offsets = [0, 128], sizes = [128, 128], strides = [1, 1]} : vector<128x256xf32> to vector<128x128xf32>
    %176 = arith.negf %174 : vector<128x128xf32>
    %177 = math.exp %176 : vector<128x128xf32>
    %cst_73 = arith.constant 1.000000e+00 : f32
    %178 = vector.broadcast %cst_73 : f32 to vector<128x128xf32>
    %179 = arith.addf %178, %177 : vector<128x128xf32>
    %180 = arith.divf %178, %179 : vector<128x128xf32>
    %181 = arith.mulf %174, %180 : vector<128x128xf32>
    %182 = arith.mulf %181, %175 : vector<128x128xf32>
    %183 = arith.truncf %182 : vector<128x128xf32> to vector<128x128xbf16>
    %c0_74 = arith.constant 0 : index
    %c0_75 = arith.constant 0 : index
    %184 = vector.load %arg17[%c0_74, %c0_75] : memref<128x64xbf16, #tpu.memory_space<vmem>>, vector<128x64xbf16>
    %cst_76 = arith.constant dense<0.000000e+00> : vector<128x64xf32>
    %185 = tpu.matmul %183, %184, %cst_76 {dimension_numbers = #tpu.dot_dimension_numbers<[1], [0], [0], [1], [0, 0, 1, 1], [], []>} : vector<128x128xbf16>, vector<128x64xbf16>, vector<128x64xf32> -> vector<128x64xf32>
    %186 = tpu.concatenate %185, %157 in 1 : vector<128x64xf32>, vector<128x64xf32> -> vector<128x128xf32>
    %c0_77 = arith.constant 0 : index
    %c0_78 = arith.constant 0 : index
    %187 = vector.load %arg18[%c0_77, %c0_78] : memref<128x128xf32, #tpu.memory_space<vmem>>, vector<128x128xf32>
    tpu.vector_store %arg18[%c0_77, %c0_78], %186 {strides = array<i32>} : memref<128x128xf32, #tpu.memory_space<vmem>>, vector<128x128xf32>,
    return
  }
}

</mosaic_0001>

<llo_original>
// kernel: mul.53
$region0: #{mul.53}
  #allocation0 [shape = 's32[1]{0}', space=sflag, size = 0x4, scoped, tag = 'scoped memory for mul.53']
  %s0 = inlined_call_operand.vmem [shape: f32[128,128], index: 0, kind: input, shape index: {}]
  %s1 = inlined_call_operand.vmem [shape: f32[128,128], index: 1, kind: input, shape index: {}]
  %s2 = inlined_call_operand.vmem [shape: f32[128,128], index: 2, kind: output, shape index: {}]
  %v3 = vld [vmem:[%s0] sm:$0xff]
  %v4 = vld [vmem:[%s1] sm:$0xff]
  %5 = xla_tuple %v3, %v4
  %6 = xla_tuple %5
  %v7 = vmul.f32 %v3, %v4
  %8 = xla_tuple %v7
  %9 = vst [vmem:[%s2] sm:$0xff] %v7
  %s10 = scalar_lea.vmem %s0, 8
  %v11 = vld [vmem:[%s10] sm:$0xff]
  %s12 = scalar_lea.vmem %s1, 8
  %v13 = vld [vmem:[%s12] sm:$0xff]
  %14 = xla_tuple %v11, %v13
  %15 = xla_tuple %14
  %v16 = vmul.f32 %v11, %v13
  %17 = xla_tuple %v16
  %s18 = scalar_lea.vmem %s2, 8
  %19 = vst [vmem:[%s18] sm:$0xff] %v16
  %s20 = scalar_lea.vmem %s0, 16
  %v21 = vld [vmem:[%s20] sm:$0xff]
  %s22 = scalar_lea.vmem %s1, 16
  %v23 = vld [vmem:[%s22] sm:$0xff]
  %24 = xla_tuple %v21, %v23
  %25 = xla_tuple %24
  %v26 = vmul.f32 %v21, %v23
  %27 = xla_tuple %v26
  %s28 = scalar_lea.vmem %s2, 16
  %29 = vst [vmem:[%s28] sm:$0xff] %v26
  %s30 = scalar_lea.vmem %s0, 24
  %v31 = vld [vmem:[%s30] sm:$0xff]
  %s32 = scalar_lea.vmem %s1, 24
  %v33 = vld [vmem:[%s32] sm:$0xff]
  %34 = xla_tuple %v31, %v33
  %35 = xla_tuple %34
  %v36 = vmul.f32 %v31, %v33
  %37 = xla_tuple %v36
  %s38 = scalar_lea.vmem %s2, 24
  %39 = vst [vmem:[%s38] sm:$0xff] %v36
  %s40 = scalar_lea.vmem %s0, 32
  %v41 = vld [vmem:[%s40] sm:$0xff]
  %s42 = scalar_lea.vmem %s1, 32
  %v43 = vld [vmem:[%s42] sm:$0xff]
  %44 = xla_tuple %v41, %v43
  %45 = xla_tuple %44
  %v46 = vmul.f32 %v41, %v43
  %47 = xla_tuple %v46
  %s48 = scalar_lea.vmem %s2, 32
  %49 = vst [vmem:[%s48] sm:$0xff] %v46
  %s50 = scalar_lea.vmem %s0, 40
  %v51 = vld [vmem:[%s50] sm:$0xff]
  %s52 = scalar_lea.vmem %s1, 40
  %v53 = vld [vmem:[%s52] sm:$0xff]
  %54 = xla_tuple %v51, %v53
  %55 = xla_tuple %54
  %v56 = vmul.f32 %v51, %v53
  %57 = xla_tuple %v56
  %s58 = scalar_lea.vmem %s2, 40
  %59 = vst [vmem:[%s58] sm:$0xff] %v56
  %s60 = scalar_lea.vmem %s0, 48
  %v61 = vld [vmem:[%s60] sm:$0xff]
  %s62 = scalar_lea.vmem %s1, 48
  %v63 = vld [vmem:[%s62] sm:$0xff]
  %64 = xla_tuple %v61, %v63
  %65 = xla_tuple %64
  %v66 = vmul.f32 %v61, %v63
  %67 = xla_tuple %v66
  %s68 = scalar_lea.vmem %s2, 48
  %69 = vst [vmem:[%s68] sm:$0xff] %v66
  %s70 = scalar_lea.vmem %s0, 56
  %v71 = vld [vmem:[%s70] sm:$0xff]
  %s72 = scalar_lea.vmem %s1, 56
  %v73 = vld [vmem:[%s72] sm:$0xff]
  %74 = xla_tuple %v71, %v73
  %75 = xla_tuple %74
  %v76 = vmul.f32 %v71, %v73
  %77 = xla_tuple %v76
  %s78 = scalar_lea.vmem %s2, 56
  %79 = vst [vmem:[%s78] sm:$0xff] %v76
  %s80 = scalar_lea.vmem %s0, 64
  %v81 = vld [vmem:[%s80] sm:$0xff]
  %s82 = scalar_lea.vmem %s1, 64
  %v83 = vld [vmem:[%s82] sm:$0xff]
  %84 = xla_tuple %v81, %v83
  %85 = xla_tuple %84
  %v86 = vmul.f32 %v81, %v83
  %87 = xla_tuple %v86
  %s88 = scalar_lea.vmem %s2, 64
  %89 = vst [vmem:[%s88] sm:$0xff] %v86
  %s90 = scalar_lea.vmem %s0, 72
  %v91 = vld [vmem:[%s90] sm:$0xff]
  %s92 = scalar_lea.vmem %s1, 72
  %v93 = vld [vmem:[%s92] sm:$0xff]
  %94 = xla_tuple %v91, %v93
  %95 = xla_tuple %94
  %v96 = vmul.f32 %v91, %v93
  %97 = xla_tuple %v96
  %s98 = scalar_lea.vmem %s2, 72
  %99 = vst [vmem:[%s98] sm:$0xff] %v96
  %s100 = scalar_lea.vmem %s0, 80
  %v101 = vld [vmem:[%s100] sm:$0xff]
  %s102 = scalar_lea.vmem %s1, 80
  %v103 = vld [vmem:[%s102] sm:$0xff]
  %104 = xla_tuple %v101, %v103
  %105 = xla_tuple %104
  %v106 = vmul.f32 %v101, %v103
  %107 = xla_tuple %v106
  %s108 = scalar_lea.vmem %s2, 80
  %109 = vst [vmem:[%s108] sm:$0xff] %v106
  %s110 = scalar_lea.vmem %s0, 88
  %v111 = vld [vmem:[%s110] sm:$0xff]
  %s112 = scalar_lea.vmem %s1, 88
  %v113 = vld [vmem:[%s112] sm:$0xff]
  %114 = xla_tuple %v111, %v113
  %115 = xla_tuple %114
  %v116 = vmul.f32 %v111, %v113
  %117 = xla_tuple %v116
  %s118 = scalar_lea.vmem %s2, 88
  %119 = vst [vmem:[%s118] sm:$0xff] %v116
  %s120 = scalar_lea.vmem %s0, 96
  %v121 = vld [vmem:[%s120] sm:$0xff]
  %s122 = scalar_lea.vmem %s1, 96
  %v123 = vld [vmem:[%s122] sm:$0xff]
  %124 = xla_tuple %v121, %v123
  %125 = xla_tuple %124
  %v126 = vmul.f32 %v121, %v123
  %127 = xla_tuple %v126
  %s128 = scalar_lea.vmem %s2, 96
  %129 = vst [vmem:[%s128] sm:$0xff] %v126
  %s130 = scalar_lea.vmem %s0, 104
  %v131 = vld [vmem:[%s130] sm:$0xff]
  %s132 = scalar_lea.vmem %s1, 104
  %v133 = vld [vmem:[%s132] sm:$0xff]
  %134 = xla_tuple %v131, %v133
  %135 = xla_tuple %134
  %v136 = vmul.f32 %v131, %v133
  %137 = xla_tuple %v136
  %s138 = scalar_lea.vmem %s2, 104
  %139 = vst [vmem:[%s138] sm:$0xff] %v136
  %s140 = scalar_lea.vmem %s0, 112
  %v141 = vld [vmem:[%s140] sm:$0xff]
  %s142 = scalar_lea.vmem %s1, 112
  %v143 = vld [vmem:[%s142] sm:$0xff]
  %144 = xla_tuple %v141, %v143
  %145 = xla_tuple %144
  %v146 = vmul.f32 %v141, %v143
  %147 = xla_tuple %v146
  %s148 = scalar_lea.vmem %s2, 112
  %149 = vst [vmem:[%s148] sm:$0xff] %v146
  %s150 = scalar_lea.vmem %s0, 120
  %v151 = vld [vmem:[%s150] sm:$0xff]
  %s152 = scalar_lea.vmem %s1, 120
  %v153 = vld [vmem:[%s152] sm:$0xff]
  %154 = xla_tuple %v151, %v153
  %155 = xla_tuple %154
  %v156 = vmul.f32 %v151, %v153
  %157 = xla_tuple %v156
  %s158 = scalar_lea.vmem %s2, 120
  %159 = vst [vmem:[%s158] sm:$0xff] %v156

// kernel: mul.54
$region0: #{mul.54}
  #allocation0 [shape = 's32[1]{0}', space=sflag, size = 0x4, scoped, tag = 'scoped memory for mul.54']
  %s0 = inlined_call_operand.vmem [shape: f32[64,64], index: 0, kind: input, shape index: {}]
  %s1 = inlined_call_operand.vmem [shape: f32[64,64], index: 1, kind: input, shape index: {}]
  %s2 = inlined_call_operand.vmem [shape: f32[64,64], index: 2, kind: output, shape index: {}]
  %v3 = vld [vmem:[%s0] sm:$0xff]
  %v4 = vld [vmem:[%s1] sm:$0xff]
  %5 = xla_tuple %v3, %v4
  %6 = xla_tuple %5
  %v7 = vmul.f32 %v3, %v4
  %8 = xla_tuple %v7
  %9 = vst [vmem:[%s2] sm:$0xff] %v7
  %s10 = scalar_lea.vmem %s0, 8
  %v11 = vld [vmem:[%s10] sm:$0xff]
  %s12 = scalar_lea.vmem %s1, 8
  %v13 = vld [vmem:[%s12] sm:$0xff]
  %14 = xla_tuple %v11, %v13
  %15 = xla_tuple %14
  %v16 = vmul.f32 %v11, %v13
  %17 = xla_tuple %v16
  %s18 = scalar_lea.vmem %s2, 8
  %19 = vst [vmem:[%s18] sm:$0xff] %v16
  %s20 = scalar_lea.vmem %s0, 16
  %v21 = vld [vmem:[%s20] sm:$0xff]
  %s22 = scalar_lea.vmem %s1, 16
  %v23 = vld [vmem:[%s22] sm:$0xff]
  %24 = xla_tuple %v21, %v23
  %25 = xla_tuple %24
  %v26 = vmul.f32 %v21, %v23
  %27 = xla_tuple %v26
  %s28 = scalar_lea.vmem %s2, 16
  %29 = vst [vmem:[%s28] sm:$0xff] %v26
  %s30 = scalar_lea.vmem %s0, 24
  %v31 = vld [vmem:[%s30] sm:$0xff]
  %s32 = scalar_lea.vmem %s1, 24
  %v33 = vld [vmem:[%s32] sm:$0xff]
  %34 = xla_tuple %v31, %v33
  %35 = xla_tuple %34
  %v36 = vmul.f32 %v31, %v33
  %37 = xla_tuple %v36
  %s38 = scalar_lea.vmem %s2, 24
  %39 = vst [vmem:[%s38] sm:$0xff] %v36
  %s40 = scalar_lea.vmem %s0, 32
  %v41 = vld [vmem:[%s40] sm:$0xff]
  %s42 = scalar_lea.vmem %s1, 32
  %v43 = vld [vmem:[%s42] sm:$0xff]
  %44 = xla_tuple %v41, %v43
  %45 = xla_tuple %44
  %v46 = vmul.f32 %v41, %v43
  %47 = xla_tuple %v46
  %s48 = scalar_lea.vmem %s2, 32
  %49 = vst [vmem:[%s48] sm:$0xff] %v46
  %s50 = scalar_lea.vmem %s0, 40
  %v51 = vld [vmem:[%s50] sm:$0xff]
  %s52 = scalar_lea.vmem %s1, 40
  %v53 = vld [vmem:[%s52] sm:$0xff]
  %54 = xla_tuple %v51, %v53
  %55 = xla_tuple %54
  %v56 = vmul.f32 %v51, %v53
  %57 = xla_tuple %v56
  %s58 = scalar_lea.vmem %s2, 40
  %59 = vst [vmem:[%s58] sm:$0xff] %v56
  %s60 = scalar_lea.vmem %s0, 48
  %v61 = vld [vmem:[%s60] sm:$0xff]
  %s62 = scalar_lea.vmem %s1, 48
  %v63 = vld [vmem:[%s62] sm:$0xff]
  %64 = xla_tuple %v61, %v63
  %65 = xla_tuple %64
  %v66 = vmul.f32 %v61, %v63
  %67 = xla_tuple %v66
  %s68 = scalar_lea.vmem %s2, 48
  %69 = vst [vmem:[%s68] sm:$0xff] %v66
  %s70 = scalar_lea.vmem %s0, 56
  %v71 = vld [vmem:[%s70] sm:$0xff]
  %s72 = scalar_lea.vmem %s1, 56
  %v73 = vld [vmem:[%s72] sm:$0xff]
  %74 = xla_tuple %v71, %v73
  %75 = xla_tuple %74
  %v76 = vmul.f32 %v71, %v73
  %77 = xla_tuple %v76
  %s78 = scalar_lea.vmem %s2, 56
  %79 = vst [vmem:[%s78] sm:$0xff] %v76

// kernel: qwen3_decoder_layer.1
$region0: #{qwen3_decoder_layer.1}
  #allocation0 [shape = 'u32[]', space=smem, size = 0x4, offset = 0x4, fixed_abs, tag = 'smem constant byte address 0x4 - core index']
  #allocation1 [shape = 'u32[144,128]{1,0:T(1,128)}', space=vmem, size = 0x12000, scoped, tag = 'internal scratch']
  %s0 = inlined_call_operand.vmem [shape: f32[128,64], index: 0, kind: input, shape index: {}]
  %s1 = inlined_call_operand.vmem [shape: f32[128,128], index: 1, kind: input, shape index: {}]
  %s2 = inlined_call_operand.vmem [shape: f32[128,128], index: 2, kind: input, shape index: {}]
  %s3 = inlined_call_operand.vmem [shape: f32[128,128], index: 3, kind: input, shape index: {}]
  %s4 = inlined_call_operand.vmem [shape: f32[128,64], index: 4, kind: input, shape index: {}]
  %s5 = inlined_call_operand.vmem [shape: f32[128,64], index: 5, kind: input, shape index: {}]
  %s6 = inlined_call_operand.vmem [shape: f32[128,128], index: 6, kind: input, shape index: {}]
  %s7 = inlined_call_operand.vmem [shape: f32[64,64], index: 7, kind: input, shape index: {}]
  %s8 = inlined_call_operand.vmem [shape: f32[128,128], index: 8, kind: input, shape index: {}]
  %s9 = inlined_call_operand.vmem [shape: f32[64,64], index: 9, kind: input, shape index: {}]
  %s10 = inlined_call_operand.vmem [shape: f32[1,64], index: 10, kind: input, shape index: {}]
  %s11 = inlined_call_operand.vmem [shape: bf16[64,256], index: 11, kind: input, shape index: {}]
  %s12 = inlined_call_operand.vmem [shape: f32[1,128], index: 12, kind: input, shape index: {}]
  %s13 = inlined_call_operand.vmem [shape: f32[1,64], index: 13, kind: input, shape index: {}]
  %s14 = inlined_call_operand.vmem [shape: bf16[128,64], index: 14, kind: input, shape index: {}]
  %s15 = inlined_call_operand.vmem [shape: f32[1,64], index: 15, kind: input, shape index: {}]
  %s16 = inlined_call_operand.vmem [shape: bf16[64,256], index: 16, kind: input, shape index: {}]
  %s17 = inlined_call_operand.vmem [shape: bf16[128,64], index: 17, kind: input, shape index: {}]
  %s18 = inlined_call_operand.vmem [shape: f32[128,128], index: 18, kind: output, shape index: {}]
  %s19 = sld [smem:[#allocation0]]
  $region82: #{qwen3_decoder_layer.1} parent=0
    _
  %s21 = ssub.s32 1, %s19
  %s22 = scalar_select 0, %s21, %s19
  // Predicated region
  $region2: #{qwen3_decoder_layer.1} parent=0 // pred_check
    _
  $region3: #{qwen3_decoder_layer.1} parent=0 // pred_check_branch
    %24 = sbr.rel (0) target = $region5
  $region4: #{qwen3_decoder_layer.1} parent=0 // pred_region
    _
  $region5: #{qwen3_decoder_layer.1} parent=0 // pred_fallthru
    _
  // Predicated region
  $region6: #{qwen3_decoder_layer.1} parent=0 // pred_check
    _
  $region7: #{qwen3_decoder_layer.1} parent=0 // pred_check_branch
    %26 = sbr.rel (0) target = $region9
  $region8: #{qwen3_decoder_layer.1} parent=0 // pred_region
    _
  $region9: #{qwen3_decoder_layer.1} parent=0 // pred_fallthru
    _
  // Predicated region
  $region10: #{qwen3_decoder_layer.1} parent=0 // pred_check
    _
  $region11: #{qwen3_decoder_layer.1} parent=0 // pred_check_branch
    %28 = sbr.rel (0) target = $region13
  $region12: #{qwen3_decoder_layer.1} parent=0 // pred_region
    _
  $region13: #{qwen3_decoder_layer.1} parent=0 // pred_fallthru
    _
  // Predicated region
  $region14: #{qwen3_decoder_layer.1} parent=0 // pred_check
    _
  $region15: #{qwen3_decoder_layer.1} parent=0 // pred_check_branch
    %30 = sbr.rel (0) target = $region17
  $region16: #{qwen3_decoder_layer.1} parent=0 // pred_region
    _
  $region17: #{qwen3_decoder_layer.1} parent=0 // pred_fallthru
    _
  // Predicated region
  $region18: #{qwen3_decoder_layer.1} parent=0 // pred_check
    _
  $region19: #{qwen3_decoder_layer.1} parent=0 // pred_check_branch
    %32 = sbr.rel (0) target = $region21
  $region20: #{qwen3_decoder_layer.1} parent=0 // pred_region
    _
  $region21: #{qwen3_decoder_layer.1} parent=0 // pred_fallthru
    _
  // Predicated region
  $region22: #{qwen3_decoder_layer.1} parent=0 // pred_check
    _
  $region23: #{qwen3_decoder_layer.1} parent=0 // pred_check_branch
    %34 = sbr.rel (0) target = $region25
  $region24: #{qwen3_decoder_layer.1} parent=0 // pred_region
    _
  $region25: #{qwen3_decoder_layer.1} parent=0 // pred_fallthru
    _
  // Predicated region
  $region26: #{qwen3_decoder_layer.1} parent=0 // pred_check
    _
  $region27: #{qwen3_decoder_layer.1} parent=0 // pred_check_branch
    %36 = sbr.rel (0) target = $region29
  $region28: #{qwen3_decoder_layer.1} parent=0 // pred_region
    _
  $region29: #{qwen3_decoder_layer.1} parent=0 // pred_fallthru
    _
  // Predicated region
  $region30: #{qwen3_decoder_layer.1} parent=0 // pred_check
    _
  $region31: #{qwen3_decoder_layer.1} parent=0 // pred_check_branch
    %38 = sbr.rel (0) target = $region33
  $region32: #{qwen3_decoder_layer.1} parent=0 // pred_region
    _
  $region33: #{qwen3_decoder_layer.1} parent=0 // pred_fallthru
    _
  // Predicated region
  $region34: #{qwen3_decoder_layer.1} parent=0 // pred_check
    _
  $region35: #{qwen3_decoder_layer.1} parent=0 // pred_check_branch
    %40 = sbr.rel (0) target = $region37
  $region36: #{qwen3_decoder_layer.1} parent=0 // pred_region
    _
  $region37: #{qwen3_decoder_layer.1} parent=0 // pred_fallthru
    _
  // Predicated region
  $region38: #{qwen3_decoder_layer.1} parent=0 // pred_check
    _
  $region39: #{qwen3_decoder_layer.1} parent=0 // pred_check_branch
    %42 = sbr.rel (0) target = $region41
  $region40: #{qwen3_decoder_layer.1} parent=0 // pred_region
    _
  $region41: #{qwen3_decoder_layer.1} parent=0 // pred_fallthru
    _
  // Predicated region
  $region42: #{qwen3_decoder_layer.1} parent=0 // pred_check
    _
  $region43: #{qwen3_decoder_layer.1} parent=0 // pred_check_branch
    %44 = sbr.rel (0) target = $region45
  $region44: #{qwen3_decoder_layer.1} parent=0 // pred_region
    _
  $region45: #{qwen3_decoder_layer.1} parent=0 // pred_fallthru
    _
  // Predicated region
  $region46: #{qwen3_decoder_layer.1} parent=0 // pred_check
    _
  $region47: #{qwen3_decoder_layer.1} parent=0 // pred_check_branch
    %46 = sbr.rel (0) target = $region49
  $region48: #{qwen3_decoder_layer.1} parent=0 // pred_region
    _
  $region49: #{qwen3_decoder_layer.1} parent=0 // pred_fallthru
    _
  // Predicated region
  $region50: #{qwen3_decoder_layer.1} parent=0 // pred_check
    _
  $region51: #{qwen3_decoder_layer.1} parent=0 // pred_check_branch
    %48 = sbr.rel (0) target = $region53
  $region52: #{qwen3_decoder_layer.1} parent=0 // pred_region
    _
  $region53: #{qwen3_decoder_layer.1} parent=0 // pred_fallthru
    _
  // Predicated region
  $region54: #{qwen3_decoder_layer.1} parent=0 // pred_check
    _
  $region55: #{qwen3_decoder_layer.1} parent=0 // pred_check_branch
    %50 = sbr.rel (0) target = $region57
  $region56: #{qwen3_decoder_layer.1} parent=0 // pred_region
    _
  $region57: #{qwen3_decoder_layer.1} parent=0 // pred_fallthru
    _
  // Predicated region
  $region58: #{qwen3_decoder_layer.1} parent=0 // pred_check
    _
  $region59: #{qwen3_decoder_layer.1} parent=0 // pred_check_branch
    %52 = sbr.rel (0) target = $region61
  $region60: #{qwen3_decoder_layer.1} parent=0 // pred_region
    _
  $region61: #{qwen3_decoder_layer.1} parent=0 // pred_fallthru
    _
  // Predicated region
  $region62: #{qwen3_decoder_layer.1} parent=0 // pred_check
    _
  $region63: #{qwen3_decoder_layer.1} parent=0 // pred_check_branch
    %54 = sbr.rel (0) target = $region65
  $region64: #{qwen3_decoder_layer.1} parent=0 // pred_region
    _
  $region65: #{qwen3_decoder_layer.1} parent=0 // pred_fallthru
    _
  // Predicated region
  $region66: #{qwen3_decoder_layer.1} parent=0 // pred_check
    _
  $region67: #{qwen3_decoder_layer.1} parent=0 // pred_check_branch
    %56 = sbr.rel (0) target = $region69
  $region68: #{qwen3_decoder_layer.1} parent=0 // pred_region
    _
  $region69: #{qwen3_decoder_layer.1} parent=0 // pred_fallthru
    _
  // Predicated region
  $region70: #{qwen3_decoder_layer.1} parent=0 // pred_check
    _
  $region71: #{qwen3_decoder_layer.1} parent=0 // pred_check_branch
    %58 = sbr.rel (0) target = $region73
  $region72: #{qwen3_decoder_layer.1} parent=0 // pred_region
    _
  $region73: #{qwen3_decoder_layer.1} parent=0 // pred_fallthru
    _
  %v60 = vld [vmem:[%s0] sm:$0xff]
  %v61 = vld [vmem:[%s0 + $0x8] sm:$0xff]
  %v62 = vld [vmem:[%s0 + $0x10] sm:$0xff]
  %v63 = vld [vmem:[%s0 + $0x18] sm:$0xff]
  %v64 = vld [vmem:[%s0 + $0x20] sm:$0xff]
  %v65 = vld [vmem:[%s0 + $0x28] sm:$0xff]
  %v66 = vld [vmem:[%s0 + $0x30] sm:$0xff]
  %v67 = vld [vmem:[%s0 + $0x38] sm:$0xff]
  %v68 = vld [vmem:[%s0 + $0x40] sm:$0xff]
  %v69 = vld [vmem:[%s0 + $0x48] sm:$0xff]
  %v70 = vld [vmem:[%s0 + $0x50] sm:$0xff]
  %v71 = vld [vmem:[%s0 + $0x58] sm:$0xff]
  %v72 = vld [vmem:[%s0 + $0x60] sm:$0xff]
  %v73 = vld [vmem:[%s0 + $0x68] sm:$0xff]
  %v74 = vld [vmem:[%s0 + $0x70] sm:$0xff]
  %v75 = vld [vmem:[%s0 + $0x78] sm:$0xff]
  %v76 = vld [vmem:[%s10] sm:$0x1]
  %v77 = vmul.f32 %v60, %v60
  %v78 = vmul.f32 %v61, %v61
  %v79 = vmul.f32 %v62, %v62
  %v80 = vmul.f32 %v63, %v63
  %v81 = vmul.f32 %v64, %v64
  %v82 = vmul.f32 %v65, %v65
  %v83 = vmul.f32 %v66, %v66
  %v84 = vmul.f32 %v67, %v67
  %v85 = vmul.f32 %v68, %v68
  %v86 = vmul.f32 %v69, %v69
  %v87 = vmul.f32 %v70, %v70
  %v88 = vmul.f32 %v71, %v71
  %v89 = vmul.f32 %v72, %v72
  %v90 = vmul.f32 %v73, %v73
  %v91 = vmul.f32 %v74, %v74
  %v92 = vmul.f32 %v75, %v75
  %vm93 = vcmask 523264
  %v94 = vsel %vm93, %v77, 0.0
  %95 = vadd.xlane.f32.xlu0 %v94
  %v96 = vpop.xlane.xlu0 %95
  %v97 = vsel %vm93, %v78, 0.0
  %98 = vadd.xlane.f32.xlu0 %v97
  %v99 = vpop.xlane.xlu0 %98
  %v100 = vsel %vm93, %v79, 0.0
  %101 = vadd.xlane.f32.xlu0 %v100
  %v102 = vpop.xlane.xlu0 %101
  %v103 = vsel %vm93, %v80, 0.0
  %104 = vadd.xlane.f32.xlu0 %v103
  %v105 = vpop.xlane.xlu0 %104
  %v106 = vsel %vm93, %v81, 0.0
  %107 = vadd.xlane.f32.xlu0 %v106
  %v108 = vpop.xlane.xlu0 %107
  %v109 = vsel %vm93, %v82, 0.0
  %110 = vadd.xlane.f32.xlu0 %v109
  %v111 = vpop.xlane.xlu0 %110
  %v112 = vsel %vm93, %v83, 0.0
  %113 = vadd.xlane.f32.xlu0 %v112
  %v114 = vpop.xlane.xlu0 %113
  %v115 = vsel %vm93, %v84, 0.0
  %116 = vadd.xlane.f32.xlu0 %v115
  %v117 = vpop.xlane.xlu0 %116
  %v118 = vsel %vm93, %v85, 0.0
  %119 = vadd.xlane.f32.xlu0 %v118
  %v120 = vpop.xlane.xlu0 %119
  %v121 = vsel %vm93, %v86, 0.0
  %122 = vadd.xlane.f32.xlu0 %v121
  %v123 = vpop.xlane.xlu0 %122
  %v124 = vsel %vm93, %v87, 0.0
  %125 = vadd.xlane.f32.xlu0 %v124
  %v126 = vpop.xlane.xlu0 %125
  %v127 = vsel %vm93, %v88, 0.0
  %128 = vadd.xlane.f32.xlu0 %v127
  %v129 = vpop.xlane.xlu0 %128
  %v130 = vsel %vm93, %v89, 0.0
  %131 = vadd.xlane.f32.xlu0 %v130
  %v132 = vpop.xlane.xlu0 %131
  %v133 = vsel %vm93, %v90, 0.0
  %134 = vadd.xlane.f32.xlu0 %v133
  %v135 = vpop.xlane.xlu0 %134
  %v136 = vsel %vm93, %v91, 0.0
  %137 = vadd.xlane.f32.xlu0 %v136
  %v138 = vpop.xlane.xlu0 %137
  %v139 = vsel %vm93, %v92, 0.0
  %140 = vadd.xlane.f32.xlu0 %v139
  %v141 = vpop.xlane.xlu0 %140
  %v142 = vrcp.pop 64.0
  %v143 = vmul.f32 %v96, %v142
  %v144 = vmul.f32 %v99, %v142
  %v145 = vmul.f32 %v102, %v142
  %v146 = vmul.f32 %v105, %v142
  %v147 = vmul.f32 %v108, %v142
  %v148 = vmul.f32 %v111, %v142
  %v149 = vmul.f32 %v114, %v142
  %v150 = vmul.f32 %v117, %v142
  %v151 = vmul.f32 %v120, %v142
  %v152 = vmul.f32 %v123, %v142
  %v153 = vmul.f32 %v126, %v142
  %v154 = vmul.f32 %v129, %v142
  %v155 = vmul.f32 %v132, %v142
  %v156 = vmul.f32 %v135, %v142
  %v157 = vmul.f32 %v138, %v142
  %v158 = vmul.f32 %v141, %v142
  %v159 = vadd.f32 %v143, 1e-06
  %v160 = vadd.f32 %v144, 1e-06
  %v161 = vadd.f32 %v145, 1e-06
  %v162 = vadd.f32 %v146, 1e-06
  %v163 = vadd.f32 %v147, 1e-06
  %v164 = vadd.f32 %v148, 1e-06
  %v165 = vadd.f32 %v149, 1e-06
  %v166 = vadd.f32 %v150, 1e-06
  %v167 = vadd.f32 %v151, 1e-06
  %v168 = vadd.f32 %v152, 1e-06
  %v169 = vadd.f32 %v153, 1e-06
  %v170 = vadd.f32 %v154, 1e-06
  %v171 = vadd.f32 %v155, 1e-06
  %v172 = vadd.f32 %v156, 1e-06
  %v173 = vadd.f32 %v157, 1e-06
  %v174 = vadd.f32 %v158, 1e-06
  %v175 = vrsqrt.pop %v159
  %v176 = vrsqrt.pop %v160
  %v177 = vrsqrt.pop %v161
  %v178 = vrsqrt.pop %v162
  %v179 = vrsqrt.pop %v163
  %v180 = vrsqrt.pop %v164
  %v181 = vrsqrt.pop %v165
  %v182 = vrsqrt.pop %v166
  %v183 = vrsqrt.pop %v167
  %v184 = vrsqrt.pop %v168
  %v185 = vrsqrt.pop %v169
  %v186 = vrsqrt.pop %v170
  %v187 = vrsqrt.pop %v171
  %v188 = vrsqrt.pop %v172
  %v189 = vrsqrt.pop %v173
  %v190 = vrsqrt.pop %v174
  %v191 = vmul.f32 %v60, %v175
  %v192 = vmul.f32 %v61, %v176
  %v193 = vmul.f32 %v62, %v177
  %v194 = vmul.f32 %v63, %v178
  %v195 = vmul.f32 %v64, %v179
  %v196 = vmul.f32 %v65, %v180
  %v197 = vmul.f32 %v66, %v181
  %v198 = vmul.f32 %v67, %v182
  %v199 = vmul.f32 %v68, %v183
  %v200 = vmul.f32 %v69, %v184
  %v201 = vmul.f32 %v70, %v185
  %v202 = vmul.f32 %v71, %v186
  %v203 = vmul.f32 %v72, %v187
  %v204 = vmul.f32 %v73, %v188
  %v205 = vmul.f32 %v74, %v189
  %v206 = vmul.f32 %v75, %v190
  %v208 = vlaneseq
  %v209 = vshrl.u32 %v208, 7
  %v210 = vsub.s32 0, %v209
  %v211 = vrot.slane %v76, %v210
  %v213 = vmul.f32 %v191, %v211
  %v214 = vmul.f32 %v192, %v211
  %v215 = vmul.f32 %v193, %v211
  %v216 = vmul.f32 %v194, %v211
  %v217 = vmul.f32 %v195, %v211
  %v218 = vmul.f32 %v196, %v211
  %v219 = vmul.f32 %v197, %v211
  %v220 = vmul.f32 %v198, %v211
  %v221 = vmul.f32 %v199, %v211
  %v222 = vmul.f32 %v200, %v211
  %v223 = vmul.f32 %v201, %v211
  %v224 = vmul.f32 %v202, %v211
  %v225 = vmul.f32 %v203, %v211
  %v226 = vmul.f32 %v204, %v211
  %v227 = vmul.f32 %v205, %v211
  %v228 = vmul.f32 %v206, %v211
  %v229 = vpack.c.bf16 %v214, %v213
  %v230 = vpack.c.bf16 %v216, %v215
  %v231 = vpack.c.bf16 %v218, %v217
  %v232 = vpack.c.bf16 %v220, %v219
  %v233 = vpack.c.bf16 %v222, %v221
  %v234 = vpack.c.bf16 %v224, %v223
  %v235 = vpack.c.bf16 %v226, %v225
  %v236 = vpack.c.bf16 %v228, %v227
  %v237 = vld [vmem:[%s11] sm:$0xff]
  %v238 = vld [vmem:[%s11 + $0x8] sm:$0xff]
  %v239 = vld [vmem:[%s11 + $0x10] sm:$0xff]
  %v240 = vld [vmem:[%s11 + $0x18] sm:$0xff]
  %v241 = vld [vmem:[%s11 + $0x20] sm:$0xff]
  %v242 = vld [vmem:[%s11 + $0x28] sm:$0xff]
  %v243 = vld [vmem:[%s11 + $0x30] sm:$0xff]
  %v244 = vld [vmem:[%s11 + $0x38] sm:$0xff]
  %v253 = vunpack.c.l.b16 %v237
  %v254 = vunpack.c.h.b16 %v237
  %v255 = vunpack.c.l.b16 %v238
  %v256 = vunpack.c.h.b16 %v238
  %v257 = vunpack.c.l.b16 %v239
  %v258 = vunpack.c.h.b16 %v239
  %v259 = vunpack.c.l.b16 %v240
  %v260 = vunpack.c.h.b16 %v240
  %v261 = vunpack.c.l.b16 %v241
  %v262 = vunpack.c.h.b16 %v241
  %v263 = vunpack.c.l.b16 %v242
  %v264 = vunpack.c.h.b16 %v242
  %v265 = vunpack.c.l.b16 %v243
  %v266 = vunpack.c.h.b16 %v243
  %v267 = vunpack.c.l.b16 %v244
  %v268 = vunpack.c.h.b16 %v244
  %v269 = vpack.c.b16 %v255, %v253
  %v270 = vpack.c.b16 %v256, %v254
  %v271 = vpack.c.b16 %v259, %v257
  %v272 = vpack.c.b16 %v260, %v258
  %v273 = vpack.c.b16 %v263, %v261
  %v274 = vpack.c.b16 %v264, %v262
  %v275 = vpack.c.b16 %v267, %v265
  %v276 = vpack.c.b16 %v268, %v266
  %v286 = vsel %vm93, %v229, 0
  %v289 = vsel %vm93, %v230, 0
  %v292 = vsel %vm93, %v231, 0
  %v295 = vsel %vm93, %v232, 0
  %v298 = vsel %vm93, %v233, 0
  %v301 = vsel %vm93, %v234, 0
  %v304 = vsel %vm93, %v235, 0
  %v307 = vsel %vm93, %v236, 0
  %309 = vmatprep.subr.bf16.mxu0 0
  %310 = vmatpush1.bf16.msra.mxu0 0
  %311 = vmatprep.subr.bf16.mxu0 0
  %312 = vmatpush1.bf16.msra.mxu0 0
  %313 = vmatprep.subr.bf16.mxu0 0
  %314 = vmatpush1.bf16.msra.mxu0 0
  %315 = vmatprep.subr.bf16.mxu0 0
  %316 = vmatpush1.bf16.msra.mxu0 0
  %317 = vmatprep.subr.bf16.mxu0 %v276
  %318 = vmatpush1.bf16.msra.mxu0 %v275
  %319 = vmatprep.subr.bf16.mxu0 %v274
  %320 = vmatpush1.bf16.msra.mxu0 %v273
  %321 = vmatprep.subr.bf16.mxu0 %v272
  %322 = vmatpush1.bf16.msra.mxu0 %v271
  %323 = vmatprep.subr.bf16.mxu0 %v270
  %324 = vmatpush1.bf16.msra.mxu0 %v269
  %325 = vmatprep.subr.bf16.mxu0 0
  %326 = vmatpush2.bf16.msra.mxu0 0
  %327 = vmatprep.subr.bf16.mxu0 0
  %328 = vmatpush2.bf16.msra.mxu0 0
  %329 = vmatprep.subr.bf16.mxu0 0
  %330 = vmatpush2.bf16.msra.mxu0 0
  %331 = vmatprep.subr.bf16.mxu0 0
  %332 = vmatpush2.bf16.msra.mxu0 0
  %333 = vmatprep.subr.bf16.mxu0 0
  %334 = vmatpush2.bf16.msra.mxu0 0
  %335 = vmatprep.subr.bf16.mxu0 0
  %336 = vmatpush2.bf16.msra.mxu0 0
  %337 = vmatprep.subr.bf16.mxu0 0
  %338 = vmatpush2.bf16.msra.mxu0 0
  %339 = vmatprep.subr.bf16.mxu0 0
  %340 = vmatpush2.bf16.msra.mxu0 0
  %341 = vmatprep.mubr.bf16.mxu0 0
  %342 = vmatmul.mubr.bf16.gmra.mxu0 %v286
  %v343 = vpop.f32.mrf.mxu0
  %v344 = vadd.f32 0.0, %v343
  %v345 = vpop.f32.mrf.mxu0
  %v346 = vadd.f32 0.0, %v345
  %v347 = vpop.f32.mrf.mxu0
  %v348 = vadd.f32 0.0, %v347
  %v349 = vpop.f32.mrf.mxu0
  %v350 = vadd.f32 0.0, %v349
  %351 = vmatprep.mubr.bf16.mxu0 0
  %352 = vmatmul.mubr.bf16.gmra.mxu0 %v289
  %v353 = vpop.f32.mrf.mxu0
  %v354 = vadd.f32 0.0, %v353
  %v355 = vpop.f32.mrf.mxu0
  %v356 = vadd.f32 0.0, %v355
  %v357 = vpop.f32.mrf.mxu0
  %v358 = vadd.f32 0.0, %v357
  %v359 = vpop.f32.mrf.mxu0
  %v360 = vadd.f32 0.0, %v359
  %361 = vmatprep.mubr.bf16.mxu0 0
  %362 = vmatmul.mubr.bf16.gmra.mxu0 %v292
  %v363 = vpop.f32.mrf.mxu0
  %v364 = vadd.f32 0.0, %v363
  %v365 = vpop.f32.mrf.mxu0
  %v366 = vadd.f32 0.0, %v365
  %v367 = vpop.f32.mrf.mxu0
  %v368 = vadd.f32 0.0, %v367
  %v369 = vpop.f32.mrf.mxu0
  %v370 = vadd.f32 0.0, %v369
  %371 = vmatprep.mubr.bf16.mxu0 0
  %372 = vmatmul.mubr.bf16.gmra.mxu0 %v295
  %v373 = vpop.f32.mrf.mxu0
  %v374 = vadd.f32 0.0, %v373
  %v375 = vpop.f32.mrf.mxu0
  %v376 = vadd.f32 0.0, %v375
  %v377 = vpop.f32.mrf.mxu0
  %v378 = vadd.f32 0.0, %v377
  %v379 = vpop.f32.mrf.mxu0
  %v380 = vadd.f32 0.0, %v379
  %381 = vmatprep.mubr.bf16.mxu0 0
  %382 = vmatmul.mubr.bf16.gmra.mxu0 %v298
  %v383 = vpop.f32.mrf.mxu0
  %v384 = vadd.f32 0.0, %v383
  %v385 = vpop.f32.mrf.mxu0
  %v386 = vadd.f32 0.0, %v385
  %v387 = vpop.f32.mrf.mxu0
  %v388 = vadd.f32 0.0, %v387
  %v389 = vpop.f32.mrf.mxu0
  %v390 = vadd.f32 0.0, %v389
  %391 = vmatprep.mubr.bf16.mxu0 0
  %392 = vmatmul.mubr.bf16.gmra.mxu0 %v301
  %v393 = vpop.f32.mrf.mxu0
  %v394 = vadd.f32 0.0, %v393
  %v395 = vpop.f32.mrf.mxu0
  %v396 = vadd.f32 0.0, %v395
  %v397 = vpop.f32.mrf.mxu0
  %v398 = vadd.f32 0.0, %v397
  %v399 = vpop.f32.mrf.mxu0
  %v400 = vadd.f32 0.0, %v399
  %401 = vmatprep.mubr.bf16.mxu0 0
  %402 = vmatmul.mubr.bf16.gmra.mxu0 %v304
  %v403 = vpop.f32.mrf.mxu0
  %v404 = vadd.f32 0.0, %v403
  %v405 = vpop.f32.mrf.mxu0
  %v406 = vadd.f32 0.0, %v405
  %v407 = vpop.f32.mrf.mxu0
  %v408 = vadd.f32 0.0, %v407
  %v409 = vpop.f32.mrf.mxu0
  %v410 = vadd.f32 0.0, %v409
  %411 = vmatprep.mubr.bf16.mxu0 0
  %412 = vmatmul.mubr.bf16.gmra.mxu0 %v307
  %v413 = vpop.f32.mrf.mxu0
  %v414 = vadd.f32 0.0, %v413
  %v415 = vpop.f32.mrf.mxu0
  %v416 = vadd.f32 0.0, %v415
  %v417 = vpop.f32.mrf.mxu0
  %v418 = vadd.f32 0.0, %v417
  %v419 = vpop.f32.mrf.mxu0
  %v420 = vadd.f32 0.0, %v419
  %421 = vdwg.mxu0
  %v422 = vmul.f32 %v344, %v344
  %v423 = vmul.f32 %v348, %v348
  %v424 = vmul.f32 %v354, %v354
  %v425 = vmul.f32 %v358, %v358
  %v426 = vmul.f32 %v364, %v364
  %v427 = vmul.f32 %v368, %v368
  %v428 = vmul.f32 %v374, %v374
  %v429 = vmul.f32 %v378, %v378
  %v430 = vmul.f32 %v384, %v384
  %v431 = vmul.f32 %v388, %v388
  %v432 = vmul.f32 %v394, %v394
  %v433 = vmul.f32 %v398, %v398
  %v434 = vmul.f32 %v404, %v404
  %v435 = vmul.f32 %v408, %v408
  %v436 = vmul.f32 %v414, %v414
  %v437 = vmul.f32 %v418, %v418
  %v438 = vld [vmem:[%s6] sm:$0xff]
  %v439 = vld [vmem:[%s6 + $0x8] sm:$0xff]
  %v440 = vld [vmem:[%s6 + $0x10] sm:$0xff]
  %v441 = vld [vmem:[%s6 + $0x18] sm:$0xff]
  %v442 = vld [vmem:[%s6 + $0x20] sm:$0xff]
  %v443 = vld [vmem:[%s6 + $0x28] sm:$0xff]
  %v444 = vld [vmem:[%s6 + $0x30] sm:$0xff]
  %v445 = vld [vmem:[%s6 + $0x38] sm:$0xff]
  %v446 = vld [vmem:[%s6 + $0x40] sm:$0xff]
  %v447 = vld [vmem:[%s6 + $0x48] sm:$0xff]
  %v448 = vld [vmem:[%s6 + $0x50] sm:$0xff]
  %v449 = vld [vmem:[%s6 + $0x58] sm:$0xff]
  %v450 = vld [vmem:[%s6 + $0x60] sm:$0xff]
  %v451 = vld [vmem:[%s6 + $0x68] sm:$0xff]
  %v452 = vld [vmem:[%s6 + $0x70] sm:$0xff]
  %v453 = vld [vmem:[%s6 + $0x78] sm:$0xff]
  %454 = vmatprep.subr.mxu0 0.0
  %455 = vmatpush1.msra.mxu0 %v453
  %456 = vmatprep.subr.mxu0 0.0
  %457 = vmatpush1.msra.mxu0 %v452
  %458 = vmatprep.subr.mxu0 0.0
  %459 = vmatpush1.msra.mxu0 %v451
  %460 = vmatprep.subr.mxu0 0.0
  %461 = vmatpush1.msra.mxu0 %v450
  %462 = vmatprep.subr.mxu0 0.0
  %463 = vmatpush1.msra.mxu0 %v449
  %464 = vmatprep.subr.mxu0 0.0
  %465 = vmatpush1.msra.mxu0 %v448
  %466 = vmatprep.subr.mxu0 0.0
  %467 = vmatpush1.msra.mxu0 %v447
  %468 = vmatprep.subr.mxu0 0.0
  %469 = vmatpush1.msra.mxu0 %v446
  %470 = vmatprep.subr.mxu0 0.0
  %471 = vmatpush1.msra.mxu0 %v445
  %472 = vmatprep.subr.mxu0 0.0
  %473 = vmatpush1.msra.mxu0 %v444
  %474 = vmatprep.subr.mxu0 0.0
  %475 = vmatpush1.msra.mxu0 %v443
  %476 = vmatprep.subr.mxu0 0.0
  %477 = vmatpush1.msra.mxu0 %v442
  %478 = vmatprep.subr.mxu0 0.0
  %479 = vmatpush1.msra.mxu0 %v441
  %480 = vmatprep.subr.mxu0 0.0
  %481 = vmatpush1.msra.mxu0 %v440
  %482 = vmatprep.subr.mxu0 0.0
  %483 = vmatpush1.msra.mxu0 %v439
  %484 = vmatprep.subr.mxu0 0.0
  %485 = vmatpush1.msra.mxu0 %v438
  %486 = vmatprep.subr.mxu0 0.0
  %487 = vmatpush2.msra.mxu0 0.0
  %488 = vmatprep.subr.mxu0 0.0
  %489 = vmatpush2.msra.mxu0 0.0
  %490 = vmatprep.subr.mxu0 0.0
  %491 = vmatpush2.msra.mxu0 0.0
  %492 = vmatprep.subr.mxu0 0.0
  %493 = vmatpush2.msra.mxu0 0.0
  %494 = vmatprep.subr.mxu0 0.0
  %495 = vmatpush2.msra.mxu0 0.0
  %496 = vmatprep.subr.mxu0 0.0
  %497 = vmatpush2.msra.mxu0 0.0
  %498 = vmatprep.subr.mxu0 0.0
  %499 = vmatpush2.msra.mxu0 0.0
  %500 = vmatprep.subr.mxu0 0.0
  %501 = vmatpush2.msra.mxu0 0.0
  %502 = vmatprep.subr.mxu0 0.0
  %503 = vmatpush2.msra.mxu0 0.0
  %504 = vmatprep.subr.mxu0 0.0
  %505 = vmatpush2.msra.mxu0 0.0
  %506 = vmatprep.subr.mxu0 0.0
  %507 = vmatpush2.msra.mxu0 0.0
  %508 = vmatprep.subr.mxu0 0.0
  %509 = vmatpush2.msra.mxu0 0.0
  %510 = vmatprep.subr.mxu0 0.0
  %511 = vmatpush2.msra.mxu0 0.0
  %512 = vmatprep.subr.mxu0 0.0
  %513 = vmatpush2.msra.mxu0 0.0
  %514 = vmatprep.subr.mxu0 0.0
  %515 = vmatpush2.msra.mxu0 0.0
  %516 = vmatprep.subr.mxu0 0.0
  %517 = vmatpush2.msra.mxu0 0.0
  %518 = vmatprep.mubr.f32.mxu0 0.0
  %519 = vmatmul.mubr.f32.gmra.mxu0 %v422
  %v520 = vpop.f32.mrf.mxu0
  %v521 = vadd.f32 0.0, %v520
  %v522 = vpop.f32.mrf.mxu0
  %523 = vmatprep.mubr.f32.mxu0 0.0
  %524 = vmatmul.mubr.f32.gmra.mxu0 %v423
  %v525 = vpop.f32.mrf.mxu0
  %v526 = vadd.f32 0.0, %v525
  %v527 = vpop.f32.mrf.mxu0
  %528 = vmatprep.mubr.f32.mxu0 0.0
  %529 = vmatmul.mubr.f32.gmra.mxu0 %v424
  %v530 = vpop.f32.mrf.mxu0
  %v531 = vadd.f32 0.0, %v530
  %v532 = vpop.f32.mrf.mxu0
  %533 = vmatprep.mubr.f32.mxu0 0.0
  %534 = vmatmul.mubr.f32.gmra.mxu0 %v425
  %v535 = vpop.f32.mrf.mxu0
  %v536 = vadd.f32 0.0, %v535
  %v537 = vpop.f32.mrf.mxu0
  %538 = vmatprep.mubr.f32.mxu0 0.0
  %539 = vmatmul.mubr.f32.gmra.mxu0 %v426
  %v540 = vpop.f32.mrf.mxu0
  %v541 = vadd.f32 0.0, %v540
  %v542 = vpop.f32.mrf.mxu0
  %543 = vmatprep.mubr.f32.mxu0 0.0
  %544 = vmatmul.mubr.f32.gmra.mxu0 %v427
  %v545 = vpop.f32.mrf.mxu0
  %v546 = vadd.f32 0.0, %v545
  %v547 = vpop.f32.mrf.mxu0
  %548 = vmatprep.mubr.f32.mxu0 0.0
  %549 = vmatmul.mubr.f32.gmra.mxu0 %v428
  %v550 = vpop.f32.mrf.mxu0
  %v551 = vadd.f32 0.0, %v550
  %v552 = vpop.f32.mrf.mxu0
  %553 = vmatprep.mubr.f32.mxu0 0.0
  %554 = vmatmul.mubr.f32.gmra.mxu0 %v429
  %v555 = vpop.f32.mrf.mxu0
  %v556 = vadd.f32 0.0, %v555
  %v557 = vpop.f32.mrf.mxu0
  %558 = vmatprep.mubr.f32.mxu0 0.0
  %559 = vmatmul.mubr.f32.gmra.mxu0 %v430
  %v560 = vpop.f32.mrf.mxu0
  %v561 = vadd.f32 0.0, %v560
  %v562 = vpop.f32.mrf.mxu0
  %563 = vmatprep.mubr.f32.mxu0 0.0
  %564 = vmatmul.mubr.f32.gmra.mxu0 %v431
  %v565 = vpop.f32.mrf.mxu0
  %v566 = vadd.f32 0.0, %v565
  %v567 = vpop.f32.mrf.mxu0
  %568 = vmatprep.mubr.f32.mxu0 0.0
  %569 = vmatmul.mubr.f32.gmra.mxu0 %v432
  %v570 = vpop.f32.mrf.mxu0
  %v571 = vadd.f32 0.0, %v570
  %v572 = vpop.f32.mrf.mxu0
  %573 = vmatprep.mubr.f32.mxu0 0.0
  %574 = vmatmul.mubr.f32.gmra.mxu0 %v433
  %v575 = vpop.f32.mrf.mxu0
  %v576 = vadd.f32 0.0, %v575
  %v577 = vpop.f32.mrf.mxu0
  %578 = vmatprep.mubr.f32.mxu0 0.0
  %579 = vmatmul.mubr.f32.gmra.mxu0 %v434
  %v580 = vpop.f32.mrf.mxu0
  %v581 = vadd.f32 0.0, %v580
  %v582 = vpop.f32.mrf.mxu0
  %583 = vmatprep.mubr.f32.mxu0 0.0
  %584 = vmatmul.mubr.f32.gmra.mxu0 %v435
  %v585 = vpop.f32.mrf.mxu0
  %v586 = vadd.f32 0.0, %v585
  %v587 = vpop.f32.mrf.mxu0
  %588 = vmatprep.mubr.f32.mxu0 0.0
  %589 = vmatmul.mubr.f32.gmra.mxu0 %v436
  %v590 = vpop.f32.mrf.mxu0
  %v591 = vadd.f32 0.0, %v590
  %v592 = vpop.f32.mrf.mxu0
  %593 = vmatprep.mubr.f32.mxu0 0.0
  %594 = vmatmul.mubr.f32.gmra.mxu0 %v437
  %v595 = vpop.f32.mrf.mxu0
  %v596 = vadd.f32 0.0, %v595
  %v597 = vpop.f32.mrf.mxu0
  %598 = vdwg.mxu0
  %v599 = vmul.f32 %v521, 0.03125
  %v600 = vmul.f32 %v526, 0.03125
  %v601 = vmul.f32 %v531, 0.03125
  %v602 = vmul.f32 %v536, 0.03125
  %v603 = vmul.f32 %v541, 0.03125
  %v604 = vmul.f32 %v546, 0.03125
  %v605 = vmul.f32 %v551, 0.03125
  %v606 = vmul.f32 %v556, 0.03125
  %v607 = vmul.f32 %v561, 0.03125
  %v608 = vmul.f32 %v566, 0.03125
  %v609 = vmul.f32 %v571, 0.03125
  %v610 = vmul.f32 %v576, 0.03125
  %v611 = vmul.f32 %v581, 0.03125
  %v612 = vmul.f32 %v586, 0.03125
  %v613 = vmul.f32 %v591, 0.03125
  %v614 = vmul.f32 %v596, 0.03125
  %v615 = vadd.f32 %v599, 1e-06
  %v616 = vadd.f32 %v600, 1e-06
  %v617 = vadd.f32 %v601, 1e-06
  %v618 = vadd.f32 %v602, 1e-06
  %v619 = vadd.f32 %v603, 1e-06
  %v620 = vadd.f32 %v604, 1e-06
  %v621 = vadd.f32 %v605, 1e-06
  %v622 = vadd.f32 %v606, 1e-06
  %v623 = vadd.f32 %v607, 1e-06
  %v624 = vadd.f32 %v608, 1e-06
  %v625 = vadd.f32 %v609, 1e-06
  %v626 = vadd.f32 %v610, 1e-06
  %v627 = vadd.f32 %v611, 1e-06
  %v628 = vadd.f32 %v612, 1e-06
  %v629 = vadd.f32 %v613, 1e-06
  %v630 = vadd.f32 %v614, 1e-06
  %v631 = vrsqrt.pop %v615
  %v632 = vrsqrt.pop %v616
  %v633 = vrsqrt.pop %v617
  %v634 = vrsqrt.pop %v618
  %v635 = vrsqrt.pop %v619
  %v636 = vrsqrt.pop %v620
  %v637 = vrsqrt.pop %v621
  %v638 = vrsqrt.pop %v622
  %v639 = vrsqrt.pop %v623
  %v640 = vrsqrt.pop %v624
  %v641 = vrsqrt.pop %v625
  %v642 = vrsqrt.pop %v626
  %v643 = vrsqrt.pop %v627
  %v644 = vrsqrt.pop %v628
  %v645 = vrsqrt.pop %v629
  %v646 = vrsqrt.pop %v630
  %v647 = vmul.f32 %v344, %v631
  %v648 = vmul.f32 %v348, %v632
  %v649 = vmul.f32 %v354, %v633
  %v650 = vmul.f32 %v358, %v634
  %v651 = vmul.f32 %v364, %v635
  %v652 = vmul.f32 %v368, %v636
  %v653 = vmul.f32 %v374, %v637
  %v654 = vmul.f32 %v378, %v638
  %v655 = vmul.f32 %v384, %v639
  %v656 = vmul.f32 %v388, %v640
  %v657 = vmul.f32 %v394, %v641
  %v658 = vmul.f32 %v398, %v642
  %v659 = vmul.f32 %v404, %v643
  %v660 = vmul.f32 %v408, %v644
  %v661 = vmul.f32 %v414, %v645
  %v662 = vmul.f32 %v418, %v646
  %v663 = vld [vmem:[%s12] sm:$0x1]
  %v665 = vlaneseq
  %v666 = vshrl.u32 %v665, 7
  %v667 = vsub.s32 0, %v666
  %v668 = vrot.slane %v663, %v667
  %v670 = vmul.f32 %v647, %v668
  %v671 = vmul.f32 %v648, %v668
  %v672 = vmul.f32 %v649, %v668
  %v673 = vmul.f32 %v650, %v668
  %v674 = vmul.f32 %v651, %v668
  %v675 = vmul.f32 %v652, %v668
  %v676 = vmul.f32 %v653, %v668
  %v677 = vmul.f32 %v654, %v668
  %v678 = vmul.f32 %v655, %v668
  %v679 = vmul.f32 %v656, %v668
  %v680 = vmul.f32 %v657, %v668
  %v681 = vmul.f32 %v658, %v668
  %v682 = vmul.f32 %v659, %v668
  %v683 = vmul.f32 %v660, %v668
  %v684 = vmul.f32 %v661, %v668
  %v685 = vmul.f32 %v662, %v668
  %v686 = vmul.f32 %v346, %v346
  %v687 = vmul.f32 %v350, %v350
  %v688 = vmul.f32 %v356, %v356
  %v689 = vmul.f32 %v360, %v360
  %v690 = vmul.f32 %v366, %v366
  %v691 = vmul.f32 %v370, %v370
  %v692 = vmul.f32 %v376, %v376
  %v693 = vmul.f32 %v380, %v380
  %v694 = vmul.f32 %v386, %v386
  %v695 = vmul.f32 %v390, %v390
  %v696 = vmul.f32 %v396, %v396
  %v697 = vmul.f32 %v400, %v400
  %v698 = vmul.f32 %v406, %v406
  %v699 = vmul.f32 %v410, %v410
  %v700 = vmul.f32 %v416, %v416
  %v701 = vmul.f32 %v420, %v420
  %v702 = vld [vmem:[%s7] sm:$0xff]
  %v703 = vld [vmem:[%s7 + $0x8] sm:$0xff]
  %v704 = vld [vmem:[%s7 + $0x10] sm:$0xff]
  %v705 = vld [vmem:[%s7 + $0x18] sm:$0xff]
  %v706 = vld [vmem:[%s7 + $0x20] sm:$0xff]
  %v707 = vld [vmem:[%s7 + $0x28] sm:$0xff]
  %v708 = vld [vmem:[%s7 + $0x30] sm:$0xff]
  %v709 = vld [vmem:[%s7 + $0x38] sm:$0xff]
  %v711 = vsel %vm93, %v686, 0
  %v714 = vsel %vm93, %v687, 0
  %v717 = vsel %vm93, %v688, 0
  %v720 = vsel %vm93, %v689, 0
  %v723 = vsel %vm93, %v690, 0
  %v726 = vsel %vm93, %v691, 0
  %v729 = vsel %vm93, %v692, 0
  %v732 = vsel %vm93, %v693, 0
  %v735 = vsel %vm93, %v694, 0
  %v738 = vsel %vm93, %v695, 0
  %v741 = vsel %vm93, %v696, 0
  %v744 = vsel %vm93, %v697, 0
  %v747 = vsel %vm93, %v698, 0
  %v750 = vsel %vm93, %v699, 0
  %v753 = vsel %vm93, %v700, 0
  %v756 = vsel %vm93, %v701, 0
  %758 = vmatprep.subr.mxu0 0.0
  %759 = vmatpush1.msra.mxu0 0.0
  %760 = vmatprep.subr.mxu0 0.0
  %761 = vmatpush1.msra.mxu0 0.0
  %762 = vmatprep.subr.mxu0 0.0
  %763 = vmatpush1.msra.mxu0 0.0
  %764 = vmatprep.subr.mxu0 0.0
  %765 = vmatpush1.msra.mxu0 0.0
  %766 = vmatprep.subr.mxu0 0.0
  %767 = vmatpush1.msra.mxu0 0.0
  %768 = vmatprep.subr.mxu0 0.0
  %769 = vmatpush1.msra.mxu0 0.0
  %770 = vmatprep.subr.mxu0 0.0
  %771 = vmatpush1.msra.mxu0 0.0
  %772 = vmatprep.subr.mxu0 0.0
  %773 = vmatpush1.msra.mxu0 0.0
  %774 = vmatprep.subr.mxu0 0.0
  %775 = vmatpush1.msra.mxu0 %v709
  %776 = vmatprep.subr.mxu0 0.0
  %777 = vmatpush1.msra.mxu0 %v708
  %778 = vmatprep.subr.mxu0 0.0
  %779 = vmatpush1.msra.mxu0 %v707
  %780 = vmatprep.subr.mxu0 0.0
  %781 = vmatpush1.msra.mxu0 %v706
  %782 = vmatprep.subr.mxu0 0.0
  %783 = vmatpush1.msra.mxu0 %v705
  %784 = vmatprep.subr.mxu0 0.0
  %785 = vmatpush1.msra.mxu0 %v704
  %786 = vmatprep.subr.mxu0 0.0
  %787 = vmatpush1.msra.mxu0 %v703
  %788 = vmatprep.subr.mxu0 0.0
  %789 = vmatpush1.msra.mxu0 %v702
  %790 = vmatprep.subr.mxu0 0.0
  %791 = vmatpush2.msra.mxu0 0.0
  %792 = vmatprep.subr.mxu0 0.0
  %793 = vmatpush2.msra.mxu0 0.0
  %794 = vmatprep.subr.mxu0 0.0
  %795 = vmatpush2.msra.mxu0 0.0
  %796 = vmatprep.subr.mxu0 0.0
  %797 = vmatpush2.msra.mxu0 0.0
  %798 = vmatprep.subr.mxu0 0.0
  %799 = vmatpush2.msra.mxu0 0.0
  %800 = vmatprep.subr.mxu0 0.0
  %801 = vmatpush2.msra.mxu0 0.0
  %802 = vmatprep.subr.mxu0 0.0
  %803 = vmatpush2.msra.mxu0 0.0
  %804 = vmatprep.subr.mxu0 0.0
  %805 = vmatpush2.msra.mxu0 0.0
  %806 = vmatprep.subr.mxu0 0.0
  %807 = vmatpush2.msra.mxu0 0.0
  %808 = vmatprep.subr.mxu0 0.0
  %809 = vmatpush2.msra.mxu0 0.0
  %810 = vmatprep.subr.mxu0 0.0
  %811 = vmatpush2.msra.mxu0 0.0
  %812 = vmatprep.subr.mxu0 0.0
  %813 = vmatpush2.msra.mxu0 0.0
  %814 = vmatprep.subr.mxu0 0.0
  %815 = vmatpush2.msra.mxu0 0.0
  %816 = vmatprep.subr.mxu0 0.0
  %817 = vmatpush2.msra.mxu0 0.0
  %818 = vmatprep.subr.mxu0 0.0
  %819 = vmatpush2.msra.mxu0 0.0
  %820 = vmatprep.subr.mxu0 0.0
  %821 = vmatpush2.msra.mxu0 0.0
  %822 = vmatprep.mubr.f32.mxu0 0.0
  %823 = vmatmul.mubr.f32.gmra.mxu0 %v711
  %v824 = vpop.f32.mrf.mxu0
  %v825 = vadd.f32 0.0, %v824
  %v826 = vpop.f32.mrf.mxu0
  %827 = vmatprep.mubr.f32.mxu0 0.0
  %828 = vmatmul.mubr.f32.gmra.mxu0 %v714
  %v829 = vpop.f32.mrf.mxu0
  %v830 = vadd.f32 0.0, %v829
  %v831 = vpop.f32.mrf.mxu0
  %832 = vmatprep.mubr.f32.mxu0 0.0
  %833 = vmatmul.mubr.f32.gmra.mxu0 %v717
  %v834 = vpop.f32.mrf.mxu0
  %v835 = vadd.f32 0.0, %v834
  %v836 = vpop.f32.mrf.mxu0
  %837 = vmatprep.mubr.f32.mxu0 0.0
  %838 = vmatmul.mubr.f32.gmra.mxu0 %v720
  %v839 = vpop.f32.mrf.mxu0
  %v840 = vadd.f32 0.0, %v839
  %v841 = vpop.f32.mrf.mxu0
  %842 = vmatprep.mubr.f32.mxu0 0.0
  %843 = vmatmul.mubr.f32.gmra.mxu0 %v723
  %v844 = vpop.f32.mrf.mxu0
  %v845 = vadd.f32 0.0, %v844
  %v846 = vpop.f32.mrf.mxu0
  %847 = vmatprep.mubr.f32.mxu0 0.0
  %848 = vmatmul.mubr.f32.gmra.mxu0 %v726
  %v849 = vpop.f32.mrf.mxu0
  %v850 = vadd.f32 0.0, %v849
  %v851 = vpop.f32.mrf.mxu0
  %852 = vmatprep.mubr.f32.mxu0 0.0
  %853 = vmatmul.mubr.f32.gmra.mxu0 %v729
  %v854 = vpop.f32.mrf.mxu0
  %v855 = vadd.f32 0.0, %v854
  %v856 = vpop.f32.mrf.mxu0
  %857 = vmatprep.mubr.f32.mxu0 0.0
  %858 = vmatmul.mubr.f32.gmra.mxu0 %v732
  %v859 = vpop.f32.mrf.mxu0
  %v860 = vadd.f32 0.0, %v859
  %v861 = vpop.f32.mrf.mxu0
  %862 = vmatprep.mubr.f32.mxu0 0.0
  %863 = vmatmul.mubr.f32.gmra.mxu0 %v735
  %v864 = vpop.f32.mrf.mxu0
  %v865 = vadd.f32 0.0, %v864
  %v866 = vpop.f32.mrf.mxu0
  %867 = vmatprep.mubr.f32.mxu0 0.0
  %868 = vmatmul.mubr.f32.gmra.mxu0 %v738
  %v869 = vpop.f32.mrf.mxu0
  %v870 = vadd.f32 0.0, %v869
  %v871 = vpop.f32.mrf.mxu0
  %872 = vmatprep.mubr.f32.mxu0 0.0
  %873 = vmatmul.mubr.f32.gmra.mxu0 %v741
  %v874 = vpop.f32.mrf.mxu0
  %v875 = vadd.f32 0.0, %v874
  %v876 = vpop.f32.mrf.mxu0
  %877 = vmatprep.mubr.f32.mxu0 0.0
  %878 = vmatmul.mubr.f32.gmra.mxu0 %v744
  %v879 = vpop.f32.mrf.mxu0
  %v880 = vadd.f32 0.0, %v879
  %v881 = vpop.f32.mrf.mxu0
  %882 = vmatprep.mubr.f32.mxu0 0.0
  %883 = vmatmul.mubr.f32.gmra.mxu0 %v747
  %v884 = vpop.f32.mrf.mxu0
  %v885 = vadd.f32 0.0, %v884
  %v886 = vpop.f32.mrf.mxu0
  %887 = vmatprep.mubr.f32.mxu0 0.0
  %888 = vmatmul.mubr.f32.gmra.mxu0 %v750
  %v889 = vpop.f32.mrf.mxu0
  %v890 = vadd.f32 0.0, %v889
  %v891 = vpop.f32.mrf.mxu0
  %892 = vmatprep.mubr.f32.mxu0 0.0
  %893 = vmatmul.mubr.f32.gmra.mxu0 %v753
  %v894 = vpop.f32.mrf.mxu0
  %v895 = vadd.f32 0.0, %v894
  %v896 = vpop.f32.mrf.mxu0
  %897 = vmatprep.mubr.f32.mxu0 0.0
  %898 = vmatmul.mubr.f32.gmra.mxu0 %v756
  %v899 = vpop.f32.mrf.mxu0
  %v900 = vadd.f32 0.0, %v899
  %v901 = vpop.f32.mrf.mxu0
  %902 = vdwg.mxu0
  %v903 = vmul.f32 %v825, 0.03125
  %v904 = vmul.f32 %v830, 0.03125
  %v905 = vmul.f32 %v835, 0.03125
  %v906 = vmul.f32 %v840, 0.03125
  %v907 = vmul.f32 %v845, 0.03125
  %v908 = vmul.f32 %v850, 0.03125
  %v909 = vmul.f32 %v855, 0.03125
  %v910 = vmul.f32 %v860, 0.03125
  %v911 = vmul.f32 %v865, 0.03125
  %v912 = vmul.f32 %v870, 0.03125
  %v913 = vmul.f32 %v875, 0.03125
  %v914 = vmul.f32 %v880, 0.03125
  %v915 = vmul.f32 %v885, 0.03125
  %v916 = vmul.f32 %v890, 0.03125
  %v917 = vmul.f32 %v895, 0.03125
  %v918 = vmul.f32 %v900, 0.03125
  %v919 = vadd.f32 %v903, 1e-06
  %v920 = vadd.f32 %v904, 1e-06
  %v921 = vadd.f32 %v905, 1e-06
  %v922 = vadd.f32 %v906, 1e-06
  %v923 = vadd.f32 %v907, 1e-06
  %v924 = vadd.f32 %v908, 1e-06
  %v925 = vadd.f32 %v909, 1e-06
  %v926 = vadd.f32 %v910, 1e-06
  %v927 = vadd.f32 %v911, 1e-06
  %v928 = vadd.f32 %v912, 1e-06
  %v929 = vadd.f32 %v913, 1e-06
  %v930 = vadd.f32 %v914, 1e-06
  %v931 = vadd.f32 %v915, 1e-06
  %v932 = vadd.f32 %v916, 1e-06
  %v933 = vadd.f32 %v917, 1e-06
  %v934 = vadd.f32 %v918, 1e-06
  %v935 = vrsqrt.pop %v919
  %v936 = vrsqrt.pop %v920
  %v937 = vrsqrt.pop %v921
  %v938 = vrsqrt.pop %v922
  %v939 = vrsqrt.pop %v923
  %v940 = vrsqrt.pop %v924
  %v941 = vrsqrt.pop %v925
  %v942 = vrsqrt.pop %v926
  %v943 = vrsqrt.pop %v927
  %v944 = vrsqrt.pop %v928
  %v945 = vrsqrt.pop %v929
  %v946 = vrsqrt.pop %v930
  %v947 = vrsqrt.pop %v931
  %v948 = vrsqrt.pop %v932
  %v949 = vrsqrt.pop %v933
  %v950 = vrsqrt.pop %v934
  %v951 = vmul.f32 %v346, %v935
  %v952 = vmul.f32 %v350, %v936
  %v953 = vmul.f32 %v356, %v937
  %v954 = vmul.f32 %v360, %v938
  %v955 = vmul.f32 %v366, %v939
  %v956 = vmul.f32 %v370, %v940
  %v957 = vmul.f32 %v376, %v941
  %v958 = vmul.f32 %v380, %v942
  %v959 = vmul.f32 %v386, %v943
  %v960 = vmul.f32 %v390, %v944
  %v961 = vmul.f32 %v396, %v945
  %v962 = vmul.f32 %v400, %v946
  %v963 = vmul.f32 %v406, %v947
  %v964 = vmul.f32 %v410, %v948
  %v965 = vmul.f32 %v416, %v949
  %v966 = vmul.f32 %v420, %v950
  %v967 = vld [vmem:[%s13] sm:$0x1]
  %v969 = vlaneseq
  %v970 = vshrl.u32 %v969, 7
  %v971 = vsub.s32 0, %v970
  %v972 = vrot.slane %v967, %v971
  %v974 = vmul.f32 %v951, %v972
  %v975 = vmul.f32 %v952, %v972
  %v976 = vmul.f32 %v953, %v972
  %v977 = vmul.f32 %v954, %v972
  %v978 = vmul.f32 %v955, %v972
  %v979 = vmul.f32 %v956, %v972
  %v980 = vmul.f32 %v957, %v972
  %v981 = vmul.f32 %v958, %v972
  %v982 = vmul.f32 %v959, %v972
  %v983 = vmul.f32 %v960, %v972
  %v984 = vmul.f32 %v961, %v972
  %v985 = vmul.f32 %v962, %v972
  %v986 = vmul.f32 %v963, %v972
  %v987 = vmul.f32 %v964, %v972
  %v988 = vmul.f32 %v965, %v972
  %v989 = vmul.f32 %v966, %v972
  %v990 = vld [vmem:[%s2] sm:$0xff]
  %v991 = vld [vmem:[%s2 + $0x8] sm:$0xff]
  %v992 = vld [vmem:[%s2 + $0x10] sm:$0xff]
  %v993 = vld [vmem:[%s2 + $0x18] sm:$0xff]
  %v994 = vld [vmem:[%s2 + $0x20] sm:$0xff]
  %v995 = vld [vmem:[%s2 + $0x28] sm:$0xff]
  %v996 = vld [vmem:[%s2 + $0x30] sm:$0xff]
  %v997 = vld [vmem:[%s2 + $0x38] sm:$0xff]
  %v998 = vld [vmem:[%s2 + $0x40] sm:$0xff]
  %v999 = vld [vmem:[%s2 + $0x48] sm:$0xff]
  %v1000 = vld [vmem:[%s2 + $0x50] sm:$0xff]
  %v1001 = vld [vmem:[%s2 + $0x58] sm:$0xff]
  %v1002 = vld [vmem:[%s2 + $0x60] sm:$0xff]
  %v1003 = vld [vmem:[%s2 + $0x68] sm:$0xff]
  %v1004 = vld [vmem:[%s2 + $0x70] sm:$0xff]
  %v1005 = vld [vmem:[%s2 + $0x78] sm:$0xff]
  %v1006 = vld [vmem:[%s3] sm:$0xff]
  %v1007 = vld [vmem:[%s3 + $0x8] sm:$0xff]
  %v1008 = vld [vmem:[%s3 + $0x10] sm:$0xff]
  %v1009 = vld [vmem:[%s3 + $0x18] sm:$0xff]
  %v1010 = vld [vmem:[%s3 + $0x20] sm:$0xff]
  %v1011 = vld [vmem:[%s3 + $0x28] sm:$0xff]
  %v1012 = vld [vmem:[%s3 + $0x30] sm:$0xff]
  %v1013 = vld [vmem:[%s3 + $0x38] sm:$0xff]
  %v1014 = vld [vmem:[%s3 + $0x40] sm:$0xff]
  %v1015 = vld [vmem:[%s3 + $0x48] sm:$0xff]
  %v1016 = vld [vmem:[%s3 + $0x50] sm:$0xff]
  %v1017 = vld [vmem:[%s3 + $0x58] sm:$0xff]
  %v1018 = vld [vmem:[%s3 + $0x60] sm:$0xff]
  %v1019 = vld [vmem:[%s3 + $0x68] sm:$0xff]
  %v1020 = vld [vmem:[%s3 + $0x70] sm:$0xff]
  %v1021 = vld [vmem:[%s3 + $0x78] sm:$0xff]
  %v1022 = vmul.f32 %v670, %v990
  %v1023 = vmul.f32 %v671, %v991
  %v1024 = vmul.f32 %v672, %v992
  %v1025 = vmul.f32 %v673, %v993
  %v1026 = vmul.f32 %v674, %v994
  %v1027 = vmul.f32 %v675, %v995
  %v1028 = vmul.f32 %v676, %v996
  %v1029 = vmul.f32 %v677, %v997
  %v1030 = vmul.f32 %v678, %v998
  %v1031 = vmul.f32 %v679, %v999
  %v1032 = vmul.f32 %v680, %v1000
  %v1033 = vmul.f32 %v681, %v1001
  %v1034 = vmul.f32 %v682, %v1002
  %v1035 = vmul.f32 %v683, %v1003
  %v1036 = vmul.f32 %v684, %v1004
  %v1037 = vmul.f32 %v685, %v1005
  %v1038 = vld [vmem:[%s8] sm:$0xff]
  %v1039 = vld [vmem:[%s8 + $0x8] sm:$0xff]
  %v1040 = vld [vmem:[%s8 + $0x10] sm:$0xff]
  %v1041 = vld [vmem:[%s8 + $0x18] sm:$0xff]
  %v1042 = vld [vmem:[%s8 + $0x20] sm:$0xff]
  %v1043 = vld [vmem:[%s8 + $0x28] sm:$0xff]
  %v1044 = vld [vmem:[%s8 + $0x30] sm:$0xff]
  %v1045 = vld [vmem:[%s8 + $0x38] sm:$0xff]
  %v1046 = vld [vmem:[%s8 + $0x40] sm:$0xff]
  %v1047 = vld [vmem:[%s8 + $0x48] sm:$0xff]
  %v1048 = vld [vmem:[%s8 + $0x50] sm:$0xff]
  %v1049 = vld [vmem:[%s8 + $0x58] sm:$0xff]
  %v1050 = vld [vmem:[%s8 + $0x60] sm:$0xff]
  %v1051 = vld [vmem:[%s8 + $0x68] sm:$0xff]
  %v1052 = vld [vmem:[%s8 + $0x70] sm:$0xff]
  %v1053 = vld [vmem:[%s8 + $0x78] sm:$0xff]
  %1054 = vmatprep.subr.mxu0 0.0
  %1055 = vmatpush1.msra.mxu0 %v1053
  %1056 = vmatprep.subr.mxu0 0.0
  %1057 = vmatpush1.msra.mxu0 %v1052
  %1058 = vmatprep.subr.mxu0 0.0
  %1059 = vmatpush1.msra.mxu0 %v1051
  %1060 = vmatprep.subr.mxu0 0.0
  %1061 = vmatpush1.msra.mxu0 %v1050
  %1062 = vmatprep.subr.mxu0 0.0
  %1063 = vmatpush1.msra.mxu0 %v1049
  %1064 = vmatprep.subr.mxu0 0.0
  %1065 = vmatpush1.msra.mxu0 %v1048
  %1066 = vmatprep.subr.mxu0 0.0
  %1067 = vmatpush1.msra.mxu0 %v1047
  %1068 = vmatprep.subr.mxu0 0.0
  %1069 = vmatpush1.msra.mxu0 %v1046
  %1070 = vmatprep.subr.mxu0 0.0
  %1071 = vmatpush1.msra.mxu0 %v1045
  %1072 = vmatprep.subr.mxu0 0.0
  %1073 = vmatpush1.msra.mxu0 %v1044
  %1074 = vmatprep.subr.mxu0 0.0
  %1075 = vmatpush1.msra.mxu0 %v1043
  %1076 = vmatprep.subr.mxu0 0.0
  %1077 = vmatpush1.msra.mxu0 %v1042
  %1078 = vmatprep.subr.mxu0 0.0
  %1079 = vmatpush1.msra.mxu0 %v1041
  %1080 = vmatprep.subr.mxu0 0.0
  %1081 = vmatpush1.msra.mxu0 %v1040
  %1082 = vmatprep.subr.mxu0 0.0
  %1083 = vmatpush1.msra.mxu0 %v1039
  %1084 = vmatprep.subr.mxu0 0.0
  %1085 = vmatpush1.msra.mxu0 %v1038
  %1086 = vmatprep.subr.mxu0 0.0
  %1087 = vmatpush2.msra.mxu0 0.0
  %1088 = vmatprep.subr.mxu0 0.0
  %1089 = vmatpush2.msra.mxu0 0.0
  %1090 = vmatprep.subr.mxu0 0.0
  %1091 = vmatpush2.msra.mxu0 0.0
  %1092 = vmatprep.subr.mxu0 0.0
  %1093 = vmatpush2.msra.mxu0 0.0
  %1094 = vmatprep.subr.mxu0 0.0
  %1095 = vmatpush2.msra.mxu0 0.0
  %1096 = vmatprep.subr.mxu0 0.0
  %1097 = vmatpush2.msra.mxu0 0.0
  %1098 = vmatprep.subr.mxu0 0.0
  %1099 = vmatpush2.msra.mxu0 0.0
  %1100 = vmatprep.subr.mxu0 0.0
  %1101 = vmatpush2.msra.mxu0 0.0
  %1102 = vmatprep.subr.mxu0 0.0
  %1103 = vmatpush2.msra.mxu0 0.0
  %1104 = vmatprep.subr.mxu0 0.0
  %1105 = vmatpush2.msra.mxu0 0.0
  %1106 = vmatprep.subr.mxu0 0.0
  %1107 = vmatpush2.msra.mxu0 0.0
  %1108 = vmatprep.subr.mxu0 0.0
  %1109 = vmatpush2.msra.mxu0 0.0
  %1110 = vmatprep.subr.mxu0 0.0
  %1111 = vmatpush2.msra.mxu0 0.0
  %1112 = vmatprep.subr.mxu0 0.0
  %1113 = vmatpush2.msra.mxu0 0.0
  %1114 = vmatprep.subr.mxu0 0.0
  %1115 = vmatpush2.msra.mxu0 0.0
  %1116 = vmatprep.subr.mxu0 0.0
  %1117 = vmatpush2.msra.mxu0 0.0
  %1118 = vmatprep.mubr.f32.mxu0 0.0
  %1119 = vmatmul.mubr.f32.gmra.mxu0 %v670
  %v1120 = vpop.f32.mrf.mxu0
  %v1121 = vadd.f32 0.0, %v1120
  %v1122 = vpop.f32.mrf.mxu0
  %1123 = vmatprep.mubr.f32.mxu0 0.0
  %1124 = vmatmul.mubr.f32.gmra.mxu0 %v671
  %v1125 = vpop.f32.mrf.mxu0
  %v1126 = vadd.f32 0.0, %v1125
  %v1127 = vpop.f32.mrf.mxu0
  %1128 = vmatprep.mubr.f32.mxu0 0.0
  %1129 = vmatmul.mubr.f32.gmra.mxu0 %v672
  %v1130 = vpop.f32.mrf.mxu0
  %v1131 = vadd.f32 0.0, %v1130
  %v1132 = vpop.f32.mrf.mxu0
  %1133 = vmatprep.mubr.f32.mxu0 0.0
  %1134 = vmatmul.mubr.f32.gmra.mxu0 %v673
  %v1135 = vpop.f32.mrf.mxu0
  %v1136 = vadd.f32 0.0, %v1135
  %v1137 = vpop.f32.mrf.mxu0
  %1138 = vmatprep.mubr.f32.mxu0 0.0
  %1139 = vmatmul.mubr.f32.gmra.mxu0 %v674
  %v1140 = vpop.f32.mrf.mxu0
  %v1141 = vadd.f32 0.0, %v1140
  %v1142 = vpop.f32.mrf.mxu0
  %1143 = vmatprep.mubr.f32.mxu0 0.0
  %1144 = vmatmul.mubr.f32.gmra.mxu0 %v675
  %v1145 = vpop.f32.mrf.mxu0
  %v1146 = vadd.f32 0.0, %v1145
  %v1147 = vpop.f32.mrf.mxu0
  %1148 = vmatprep.mubr.f32.mxu0 0.0
  %1149 = vmatmul.mubr.f32.gmra.mxu0 %v676
  %v1150 = vpop.f32.mrf.mxu0
  %v1151 = vadd.f32 0.0, %v1150
  %v1152 = vpop.f32.mrf.mxu0
  %1153 = vmatprep.mubr.f32.mxu0 0.0
  %1154 = vmatmul.mubr.f32.gmra.mxu0 %v677
  %v1155 = vpop.f32.mrf.mxu0
  %v1156 = vadd.f32 0.0, %v1155
  %v1157 = vpop.f32.mrf.mxu0
  %1158 = vmatprep.mubr.f32.mxu0 0.0
  %1159 = vmatmul.mubr.f32.gmra.mxu0 %v678
  %v1160 = vpop.f32.mrf.mxu0
  %v1161 = vadd.f32 0.0, %v1160
  %v1162 = vpop.f32.mrf.mxu0
  %1163 = vmatprep.mubr.f32.mxu0 0.0
  %1164 = vmatmul.mubr.f32.gmra.mxu0 %v679
  %v1165 = vpop.f32.mrf.mxu0
  %v1166 = vadd.f32 0.0, %v1165
  %v1167 = vpop.f32.mrf.mxu0
  %1168 = vmatprep.mubr.f32.mxu0 0.0
  %1169 = vmatmul.mubr.f32.gmra.mxu0 %v680
  %v1170 = vpop.f32.mrf.mxu0
  %v1171 = vadd.f32 0.0, %v1170
  %v1172 = vpop.f32.mrf.mxu0
  %1173 = vmatprep.mubr.f32.mxu0 0.0
  %1174 = vmatmul.mubr.f32.gmra.mxu0 %v681
  %v1175 = vpop.f32.mrf.mxu0
  %v1176 = vadd.f32 0.0, %v1175
  %v1177 = vpop.f32.mrf.mxu0
  %1178 = vmatprep.mubr.f32.mxu0 0.0
  %1179 = vmatmul.mubr.f32.gmra.mxu0 %v682
  %v1180 = vpop.f32.mrf.mxu0
  %v1181 = vadd.f32 0.0, %v1180
  %v1182 = vpop.f32.mrf.mxu0
  %1183 = vmatprep.mubr.f32.mxu0 0.0
  %1184 = vmatmul.mubr.f32.gmra.mxu0 %v683
  %v1185 = vpop.f32.mrf.mxu0
  %v1186 = vadd.f32 0.0, %v1185
  %v1187 = vpop.f32.mrf.mxu0
  %1188 = vmatprep.mubr.f32.mxu0 0.0
  %1189 = vmatmul.mubr.f32.gmra.mxu0 %v684
  %v1190 = vpop.f32.mrf.mxu0
  %v1191 = vadd.f32 0.0, %v1190
  %v1192 = vpop.f32.mrf.mxu0
  %1193 = vmatprep.mubr.f32.mxu0 0.0
  %1194 = vmatmul.mubr.f32.gmra.mxu0 %v685
  %v1195 = vpop.f32.mrf.mxu0
  %v1196 = vadd.f32 0.0, %v1195
  %v1197 = vpop.f32.mrf.mxu0
  %1198 = vdwg.mxu0
  %v1199 = vmul.f32 %v1121, %v1006
  %v1200 = vmul.f32 %v1126, %v1007
  %v1201 = vmul.f32 %v1131, %v1008
  %v1202 = vmul.f32 %v1136, %v1009
  %v1203 = vmul.f32 %v1141, %v1010
  %v1204 = vmul.f32 %v1146, %v1011
  %v1205 = vmul.f32 %v1151, %v1012
  %v1206 = vmul.f32 %v1156, %v1013
  %v1207 = vmul.f32 %v1161, %v1014
  %v1208 = vmul.f32 %v1166, %v1015
  %v1209 = vmul.f32 %v1171, %v1016
  %v1210 = vmul.f32 %v1176, %v1017
  %v1211 = vmul.f32 %v1181, %v1018
  %v1212 = vmul.f32 %v1186, %v1019
  %v1213 = vmul.f32 %v1191, %v1020
  %v1214 = vmul.f32 %v1196, %v1021
  %v1215 = vadd.f32 %v1022, %v1199
  %v1216 = vadd.f32 %v1023, %v1200
  %v1217 = vadd.f32 %v1024, %v1201
  %v1218 = vadd.f32 %v1025, %v1202
  %v1219 = vadd.f32 %v1026, %v1203
  %v1220 = vadd.f32 %v1027, %v1204
  %v1221 = vadd.f32 %v1028, %v1205
  %v1222 = vadd.f32 %v1029, %v1206
  %v1223 = vadd.f32 %v1030, %v1207
  %v1224 = vadd.f32 %v1031, %v1208
  %v1225 = vadd.f32 %v1032, %v1209
  %v1226 = vadd.f32 %v1033, %v1210
  %v1227 = vadd.f32 %v1034, %v1211
  %v1228 = vadd.f32 %v1035, %v1212
  %v1229 = vadd.f32 %v1036, %v1213
  %v1230 = vadd.f32 %v1037, %v1214
  %v1231 = vld [vmem:[%s4] sm:$0xff]
  %v1232 = vld [vmem:[%s4 + $0x8] sm:$0xff]
  %v1233 = vld [vmem:[%s4 + $0x10] sm:$0xff]
  %v1234 = vld [vmem:[%s4 + $0x18] sm:$0xff]
  %v1235 = vld [vmem:[%s4 + $0x20] sm:$0xff]
  %v1236 = vld [vmem:[%s4 + $0x28] sm:$0xff]
  %v1237 = vld [vmem:[%s4 + $0x30] sm:$0xff]
  %v1238 = vld [vmem:[%s4 + $0x38] sm:$0xff]
  %v1239 = vld [vmem:[%s4 + $0x40] sm:$0xff]
  %v1240 = vld [vmem:[%s4 + $0x48] sm:$0xff]
  %v1241 = vld [vmem:[%s4 + $0x50] sm:$0xff]
  %v1242 = vld [vmem:[%s4 + $0x58] sm:$0xff]
  %v1243 = vld [vmem:[%s4 + $0x60] sm:$0xff]
  %v1244 = vld [vmem:[%s4 + $0x68] sm:$0xff]
  %v1245 = vld [vmem:[%s4 + $0x70] sm:$0xff]
  %v1246 = vld [vmem:[%s4 + $0x78] sm:$0xff]
  %v1247 = vld [vmem:[%s5] sm:$0xff]
  %v1248 = vld [vmem:[%s5 + $0x8] sm:$0xff]
  %v1249 = vld [vmem:[%s5 + $0x10] sm:$0xff]
  %v1250 = vld [vmem:[%s5 + $0x18] sm:$0xff]
  %v1251 = vld [vmem:[%s5 + $0x20] sm:$0xff]
  %v1252 = vld [vmem:[%s5 + $0x28] sm:$0xff]
  %v1253 = vld [vmem:[%s5 + $0x30] sm:$0xff]
  %v1254 = vld [vmem:[%s5 + $0x38] sm:$0xff]
  %v1255 = vld [vmem:[%s5 + $0x40] sm:$0xff]
  %v1256 = vld [vmem:[%s5 + $0x48] sm:$0xff]
  %v1257 = vld [vmem:[%s5 + $0x50] sm:$0xff]
  %v1258 = vld [vmem:[%s5 + $0x58] sm:$0xff]
  %v1259 = vld [vmem:[%s5 + $0x60] sm:$0xff]
  %v1260 = vld [vmem:[%s5 + $0x68] sm:$0xff]
  %v1261 = vld [vmem:[%s5 + $0x70] sm:$0xff]
  %v1262 = vld [vmem:[%s5 + $0x78] sm:$0xff]
  %v1263 = vmul.f32 %v974, %v1231
  %v1264 = vmul.f32 %v975, %v1232
  %v1265 = vmul.f32 %v976, %v1233
  %v1266 = vmul.f32 %v977, %v1234
  %v1267 = vmul.f32 %v978, %v1235
  %v1268 = vmul.f32 %v979, %v1236
  %v1269 = vmul.f32 %v980, %v1237
  %v1270 = vmul.f32 %v981, %v1238
  %v1271 = vmul.f32 %v982, %v1239
  %v1272 = vmul.f32 %v983, %v1240
  %v1273 = vmul.f32 %v984, %v1241
  %v1274 = vmul.f32 %v985, %v1242
  %v1275 = vmul.f32 %v986, %v1243
  %v1276 = vmul.f32 %v987, %v1244
  %v1277 = vmul.f32 %v988, %v1245
  %v1278 = vmul.f32 %v989, %v1246
  %v1279 = vld [vmem:[%s9] sm:$0xff]
  %v1280 = vld [vmem:[%s9 + $0x8] sm:$0xff]
  %v1281 = vld [vmem:[%s9 + $0x10] sm:$0xff]
  %v1282 = vld [vmem:[%s9 + $0x18] sm:$0xff]
  %v1283 = vld [vmem:[%s9 + $0x20] sm:$0xff]
  %v1284 = vld [vmem:[%s9 + $0x28] sm:$0xff]
  %v1285 = vld [vmem:[%s9 + $0x30] sm:$0xff]
  %v1286 = vld [vmem:[%s9 + $0x38] sm:$0xff]
  %v1288 = vsel %vm93, %v974, 0
  %v1291 = vsel %vm93, %v975, 0
  %v1294 = vsel %vm93, %v976, 0
  %v1297 = vsel %vm93, %v977, 0
  %v1300 = vsel %vm93, %v978, 0
  %v1303 = vsel %vm93, %v979, 0
  %v1306 = vsel %vm93, %v980, 0
  %v1309 = vsel %vm93, %v981, 0
  %v1312 = vsel %vm93, %v982, 0
  %v1315 = vsel %vm93, %v983, 0
  %v1318 = vsel %vm93, %v984, 0
  %v1321 = vsel %vm93, %v985, 0
  %v1324 = vsel %vm93, %v986, 0
  %v1327 = vsel %vm93, %v987, 0
  %v1330 = vsel %vm93, %v988, 0
  %v1333 = vsel %vm93, %v989, 0
  %1335 = vmatprep.subr.mxu0 0.0
  %1336 = vmatpush1.msra.mxu0 0.0
  %1337 = vmatprep.subr.mxu0 0.0
  %1338 = vmatpush1.msra.mxu0 0.0
  %1339 = vmatprep.subr.mxu0 0.0
  %1340 = vmatpush1.msra.mxu0 0.0
  %1341 = vmatprep.subr.mxu0 0.0
  %1342 = vmatpush1.msra.mxu0 0.0
  %1343 = vmatprep.subr.mxu0 0.0
  %1344 = vmatpush1.msra.mxu0 0.0
  %1345 = vmatprep.subr.mxu0 0.0
  %1346 = vmatpush1.msra.mxu0 0.0
  %1347 = vmatprep.subr.mxu0 0.0
  %1348 = vmatpush1.msra.mxu0 0.0
  %1349 = vmatprep.subr.mxu0 0.0
  %1350 = vmatpush1.msra.mxu0 0.0
  %1351 = vmatprep.subr.mxu0 0.0
  %1352 = vmatpush1.msra.mxu0 %v1286
  %1353 = vmatprep.subr.mxu0 0.0
  %1354 = vmatpush1.msra.mxu0 %v1285
  %1355 = vmatprep.subr.mxu0 0.0
  %1356 = vmatpush1.msra.mxu0 %v1284
  %1357 = vmatprep.subr.mxu0 0.0
  %1358 = vmatpush1.msra.mxu0 %v1283
  %1359 = vmatprep.subr.mxu0 0.0
  %1360 = vmatpush1.msra.mxu0 %v1282
  %1361 = vmatprep.subr.mxu0 0.0
  %1362 = vmatpush1.msra.mxu0 %v1281
  %1363 = vmatprep.subr.mxu0 0.0
  %1364 = vmatpush1.msra.mxu0 %v1280
  %1365 = vmatprep.subr.mxu0 0.0
  %1366 = vmatpush1.msra.mxu0 %v1279
  %1367 = vmatprep.subr.mxu0 0.0
  %1368 = vmatpush2.msra.mxu0 0.0
  %1369 = vmatprep.subr.mxu0 0.0
  %1370 = vmatpush2.msra.mxu0 0.0
  %1371 = vmatprep.subr.mxu0 0.0
  %1372 = vmatpush2.msra.mxu0 0.0
  %1373 = vmatprep.subr.mxu0 0.0
  %1374 = vmatpush2.msra.mxu0 0.0
  %1375 = vmatprep.subr.mxu0 0.0
  %1376 = vmatpush2.msra.mxu0 0.0
  %1377 = vmatprep.subr.mxu0 0.0
  %1378 = vmatpush2.msra.mxu0 0.0
  %1379 = vmatprep.subr.mxu0 0.0
  %1380 = vmatpush2.msra.mxu0 0.0
  %1381 = vmatprep.subr.mxu0 0.0
  %1382 = vmatpush2.msra.mxu0 0.0
  %1383 = vmatprep.subr.mxu0 0.0
  %1384 = vmatpush2.msra.mxu0 0.0
  %1385 = vmatprep.subr.mxu0 0.0
  %1386 = vmatpush2.msra.mxu0 0.0
  %1387 = vmatprep.subr.mxu0 0.0
  %1388 = vmatpush2.msra.mxu0 0.0
  %1389 = vmatprep.subr.mxu0 0.0
  %1390 = vmatpush2.msra.mxu0 0.0
  %1391 = vmatprep.subr.mxu0 0.0
  %1392 = vmatpush2.msra.mxu0 0.0
  %1393 = vmatprep.subr.mxu0 0.0
  %1394 = vmatpush2.msra.mxu0 0.0
  %1395 = vmatprep.subr.mxu0 0.0
  %1396 = vmatpush2.msra.mxu0 0.0
  %1397 = vmatprep.subr.mxu0 0.0
  %1398 = vmatpush2.msra.mxu0 0.0
  %1399 = vmatprep.mubr.f32.mxu0 0.0
  %1400 = vmatmul.mubr.f32.gmra.mxu0 %v1288
  %v1401 = vpop.f32.mrf.mxu0
  %v1402 = vadd.f32 0.0, %v1401
  %v1403 = vpop.f32.mrf.mxu0
  %1404 = vmatprep.mubr.f32.mxu0 0.0
  %1405 = vmatmul.mubr.f32.gmra.mxu0 %v1291
  %v1406 = vpop.f32.mrf.mxu0
  %v1407 = vadd.f32 0.0, %v1406
  %v1408 = vpop.f32.mrf.mxu0
  %1409 = vmatprep.mubr.f32.mxu0 0.0
  %1410 = vmatmul.mubr.f32.gmra.mxu0 %v1294
  %v1411 = vpop.f32.mrf.mxu0
  %v1412 = vadd.f32 0.0, %v1411
  %v1413 = vpop.f32.mrf.mxu0
  %1414 = vmatprep.mubr.f32.mxu0 0.0
  %1415 = vmatmul.mubr.f32.gmra.mxu0 %v1297
  %v1416 = vpop.f32.mrf.mxu0
  %v1417 = vadd.f32 0.0, %v1416
  %v1418 = vpop.f32.mrf.mxu0
  %1419 = vmatprep.mubr.f32.mxu0 0.0
  %1420 = vmatmul.mubr.f32.gmra.mxu0 %v1300
  %v1421 = vpop.f32.mrf.mxu0
  %v1422 = vadd.f32 0.0, %v1421
  %v1423 = vpop.f32.mrf.mxu0
  %1424 = vmatprep.mubr.f32.mxu0 0.0
  %1425 = vmatmul.mubr.f32.gmra.mxu0 %v1303
  %v1426 = vpop.f32.mrf.mxu0
  %v1427 = vadd.f32 0.0, %v1426
  %v1428 = vpop.f32.mrf.mxu0
  %1429 = vmatprep.mubr.f32.mxu0 0.0
  %1430 = vmatmul.mubr.f32.gmra.mxu0 %v1306
  %v1431 = vpop.f32.mrf.mxu0
  %v1432 = vadd.f32 0.0, %v1431
  %v1433 = vpop.f32.mrf.mxu0
  %1434 = vmatprep.mubr.f32.mxu0 0.0
  %1435 = vmatmul.mubr.f32.gmra.mxu0 %v1309
  %v1436 = vpop.f32.mrf.mxu0
  %v1437 = vadd.f32 0.0, %v1436
  %v1438 = vpop.f32.mrf.mxu0
  %1439 = vmatprep.mubr.f32.mxu0 0.0
  %1440 = vmatmul.mubr.f32.gmra.mxu0 %v1312
  %v1441 = vpop.f32.mrf.mxu0
  %v1442 = vadd.f32 0.0, %v1441
  %v1443 = vpop.f32.mrf.mxu0
  %1444 = vmatprep.mubr.f32.mxu0 0.0
  %1445 = vmatmul.mubr.f32.gmra.mxu0 %v1315
  %v1446 = vpop.f32.mrf.mxu0
  %v1447 = vadd.f32 0.0, %v1446
  %v1448 = vpop.f32.mrf.mxu0
  %1449 = vmatprep.mubr.f32.mxu0 0.0
  %1450 = vmatmul.mubr.f32.gmra.mxu0 %v1318
  %v1451 = vpop.f32.mrf.mxu0
  %v1452 = vadd.f32 0.0, %v1451
  %v1453 = vpop.f32.mrf.mxu0
  %1454 = vmatprep.mubr.f32.mxu0 0.0
  %1455 = vmatmul.mubr.f32.gmra.mxu0 %v1321
  %v1456 = vpop.f32.mrf.mxu0
  %v1457 = vadd.f32 0.0, %v1456
  %v1458 = vpop.f32.mrf.mxu0
  %1459 = vmatprep.mubr.f32.mxu0 0.0
  %1460 = vmatmul.mubr.f32.gmra.mxu0 %v1324
  %v1461 = vpop.f32.mrf.mxu0
  %v1462 = vadd.f32 0.0, %v1461
  %v1463 = vpop.f32.mrf.mxu0
  %1464 = vmatprep.mubr.f32.mxu0 0.0
  %1465 = vmatmul.mubr.f32.gmra.mxu0 %v1327
  %v1466 = vpop.f32.mrf.mxu0
  %v1467 = vadd.f32 0.0, %v1466
  %v1468 = vpop.f32.mrf.mxu0
  %1469 = vmatprep.mubr.f32.mxu0 0.0
  %1470 = vmatmul.mubr.f32.gmra.mxu0 %v1330
  %v1471 = vpop.f32.mrf.mxu0
  %v1472 = vadd.f32 0.0, %v1471
  %v1473 = vpop.f32.mrf.mxu0
  %1474 = vmatprep.mubr.f32.mxu0 0.0
  %1475 = vmatmul.mubr.f32.gmra.mxu0 %v1333
  %v1476 = vpop.f32.mrf.mxu0
  %v1477 = vadd.f32 0.0, %v1476
  %v1478 = vpop.f32.mrf.mxu0
  %1479 = vdwg.mxu0
  %v1480 = vmul.f32 %v1402, %v1247
  %v1481 = vmul.f32 %v1407, %v1248
  %v1482 = vmul.f32 %v1412, %v1249
  %v1483 = vmul.f32 %v1417, %v1250
  %v1484 = vmul.f32 %v1422, %v1251
  %v1485 = vmul.f32 %v1427, %v1252
  %v1486 = vmul.f32 %v1432, %v1253
  %v1487 = vmul.f32 %v1437, %v1254
  %v1488 = vmul.f32 %v1442, %v1255
  %v1489 = vmul.f32 %v1447, %v1256
  %v1490 = vmul.f32 %v1452, %v1257
  %v1491 = vmul.f32 %v1457, %v1258
  %v1492 = vmul.f32 %v1462, %v1259
  %v1493 = vmul.f32 %v1467, %v1260
  %v1494 = vmul.f32 %v1472, %v1261
  %v1495 = vmul.f32 %v1477, %v1262
  %v1496 = vadd.f32 %v1263, %v1480
  %v1497 = vadd.f32 %v1264, %v1481
  %v1498 = vadd.f32 %v1265, %v1482
  %v1499 = vadd.f32 %v1266, %v1483
  %v1500 = vadd.f32 %v1267, %v1484
  %v1501 = vadd.f32 %v1268, %v1485
  %v1502 = vadd.f32 %v1269, %v1486
  %v1503 = vadd.f32 %v1270, %v1487
  %v1504 = vadd.f32 %v1271, %v1488
  %v1505 = vadd.f32 %v1272, %v1489
  %v1506 = vadd.f32 %v1273, %v1490
  %v1507 = vadd.f32 %v1274, %v1491
  %v1508 = vadd.f32 %v1275, %v1492
  %v1509 = vadd.f32 %v1276, %v1493
  %v1510 = vadd.f32 %v1277, %v1494
  %v1511 = vadd.f32 %v1278, %v1495
  %v1512 = vld [vmem:[%s1] sm:$0xff]
  %v1513 = vld [vmem:[%s1 + $0x8] sm:$0xff]
  %v1514 = vld [vmem:[%s1 + $0x10] sm:$0xff]
  %v1515 = vld [vmem:[%s1 + $0x18] sm:$0xff]
  %v1516 = vld [vmem:[%s1 + $0x20] sm:$0xff]
  %v1517 = vld [vmem:[%s1 + $0x28] sm:$0xff]
  %v1518 = vld [vmem:[%s1 + $0x30] sm:$0xff]
  %v1519 = vld [vmem:[%s1 + $0x38] sm:$0xff]
  %v1520 = vld [vmem:[%s1 + $0x40] sm:$0xff]
  %v1521 = vld [vmem:[%s1 + $0x48] sm:$0xff]
  %v1522 = vld [vmem:[%s1 + $0x50] sm:$0xff]
  %v1523 = vld [vmem:[%s1 + $0x58] sm:$0xff]
  %v1524 = vld [vmem:[%s1 + $0x60] sm:$0xff]
  %v1525 = vld [vmem:[%s1 + $0x68] sm:$0xff]
  %v1526 = vld [vmem:[%s1 + $0x70] sm:$0xff]
  %v1527 = vld [vmem:[%s1 + $0x78] sm:$0xff]
  %v1528 = vpack.c.bf16 %v1497, %v1496
  %v1529 = vpack.c.bf16 %v1499, %v1498
  %v1530 = vpack.c.bf16 %v1501, %v1500
  %v1531 = vpack.c.bf16 %v1503, %v1502
  %v1532 = vpack.c.bf16 %v1505, %v1504
  %v1533 = vpack.c.bf16 %v1507, %v1506
  %v1534 = vpack.c.bf16 %v1509, %v1508
  %v1535 = vpack.c.bf16 %v1511, %v1510
  %v1536 = vpack.c.bf16 %v350, %v346
  %v1537 = vpack.c.bf16 %v360, %v356
  %v1538 = vpack.c.bf16 %v370, %v366
  %v1539 = vpack.c.bf16 %v380, %v376
  %v1540 = vpack.c.bf16 %v390, %v386
  %v1541 = vpack.c.bf16 %v400, %v396
  %v1542 = vpack.c.bf16 %v410, %v406
  %v1543 = vpack.c.bf16 %v420, %v416
  %v1544 = vld [vmem:[%s14] sm:$0xf]
  %v1545 = vld [vmem:[%s14 + $0x4] sm:$0xf]
  %v1546 = vld [vmem:[%s14 + $0x8] sm:$0xf]
  %v1547 = vld [vmem:[%s14 + $0xc] sm:$0xf]
  %v1548 = vld [vmem:[%s14 + $0x10] sm:$0xf]
  %v1549 = vld [vmem:[%s14 + $0x14] sm:$0xf]
  %v1550 = vld [vmem:[%s14 + $0x18] sm:$0xf]
  %v1551 = vld [vmem:[%s14 + $0x1c] sm:$0xf]
  %v1552 = vld [vmem:[%s14 + $0x20] sm:$0xf]
  %v1553 = vld [vmem:[%s14 + $0x24] sm:$0xf]
  %v1554 = vld [vmem:[%s14 + $0x28] sm:$0xf]
  %v1555 = vld [vmem:[%s14 + $0x2c] sm:$0xf]
  %v1556 = vld [vmem:[%s14 + $0x30] sm:$0xf]
  %v1557 = vld [vmem:[%s14 + $0x34] sm:$0xf]
  %v1558 = vld [vmem:[%s14 + $0x38] sm:$0xf]
  %v1559 = vld [vmem:[%s14 + $0x3c] sm:$0xf]
  %v1560 = vpack.c.bf16 %v1216, %v1215
  %v1561 = vpack.c.bf16 %v1218, %v1217
  %v1562 = vpack.c.bf16 %v1220, %v1219
  %v1563 = vpack.c.bf16 %v1222, %v1221
  %v1564 = vpack.c.bf16 %v1224, %v1223
  %v1565 = vpack.c.bf16 %v1226, %v1225
  %v1566 = vpack.c.bf16 %v1228, %v1227
  %v1567 = vpack.c.bf16 %v1230, %v1229
  %vm1568 = vcmask 261120
  %v1570 = vsel %vm1568, %v1560, 0
  %v1573 = vsel %vm1568, %v1561, 0
  %v1576 = vsel %vm1568, %v1562, 0
  %v1579 = vsel %vm1568, %v1563, 0
  %v1582 = vsel %vm1568, %v1564, 0
  %v1585 = vsel %vm1568, %v1565, 0
  %v1588 = vsel %vm1568, %v1566, 0
  %v1591 = vsel %vm1568, %v1567, 0
  %v1594 = vsel %vm1568, %v1528, 0
  %v1597 = vsel %vm1568, %v1529, 0
  %v1600 = vsel %vm1568, %v1530, 0
  %v1603 = vsel %vm1568, %v1531, 0
  %v1606 = vsel %vm1568, %v1532, 0
  %v1609 = vsel %vm1568, %v1533, 0
  %v1612 = vsel %vm1568, %v1534, 0
  %v1615 = vsel %vm1568, %v1535, 0
  %1617 = vmatprep.subr.bf16.mxu0 0
  %1618 = vmatpush1.bf16.xpose.msra.mxu0 %v1615
  %1619 = vmatprep.subr.bf16.mxu0 0
  %1620 = vmatpush1.bf16.xpose.msra.mxu0 %v1612
  %1621 = vmatprep.subr.bf16.mxu0 0
  %1622 = vmatpush1.bf16.xpose.msra.mxu0 %v1609
  %1623 = vmatprep.subr.bf16.mxu0 0
  %1624 = vmatpush1.bf16.xpose.msra.mxu0 %v1606
  %1625 = vmatprep.subr.bf16.mxu0 0
  %1626 = vmatpush1.bf16.xpose.msra.mxu0 %v1603
  %1627 = vmatprep.subr.bf16.mxu0 0
  %1628 = vmatpush1.bf16.xpose.msra.mxu0 %v1600
  %1629 = vmatprep.subr.bf16.mxu0 0
  %1630 = vmatpush1.bf16.xpose.msra.mxu0 %v1597
  %1631 = vmatprep.subr.bf16.mxu0 0
  %1632 = vmatpush1.bf16.xpose.msra.mxu0 %v1594
  %1633 = vmatprep.subr.bf16.mxu0 0
  %1634 = vmatpush2.bf16.xpose.msra.mxu0 0
  %1635 = vmatprep.subr.bf16.mxu0 0
  %1636 = vmatpush2.bf16.xpose.msra.mxu0 0
  %1637 = vmatprep.subr.bf16.mxu0 0
  %1638 = vmatpush2.bf16.xpose.msra.mxu0 0
  %1639 = vmatprep.subr.bf16.mxu0 0
  %1640 = vmatpush2.bf16.xpose.msra.mxu0 0
  %1641 = vmatprep.subr.bf16.mxu0 0
  %1642 = vmatpush2.bf16.xpose.msra.mxu0 0
  %1643 = vmatprep.subr.bf16.mxu0 0
  %1644 = vmatpush2.bf16.xpose.msra.mxu0 0
  %1645 = vmatprep.subr.bf16.mxu0 0
  %1646 = vmatpush2.bf16.xpose.msra.mxu0 0
  %1647 = vmatprep.subr.bf16.mxu0 0
  %1648 = vmatpush2.bf16.xpose.msra.mxu0 0
  %1649 = vmatprep.mubr.bf16.mxu0 0
  %1650 = vmatmul.mubr.bf16.gmra.mxu0 %v1570
  %v1651 = vpop.f32.mrf.mxu0
  %v1652 = vadd.f32 0.0, %v1651
  %v1653 = vpop.f32.mrf.mxu0
  %v1654 = vpop.f32.mrf.mxu0
  %v1655 = vadd.f32 0.0, %v1654
  %v1656 = vpop.f32.mrf.mxu0
  %1657 = vmatprep.mubr.bf16.mxu0 0
  %1658 = vmatmul.mubr.bf16.gmra.mxu0 %v1573
  %v1659 = vpop.f32.mrf.mxu0
  %v1660 = vadd.f32 0.0, %v1659
  %v1661 = vpop.f32.mrf.mxu0
  %v1662 = vpop.f32.mrf.mxu0
  %v1663 = vadd.f32 0.0, %v1662
  %v1664 = vpop.f32.mrf.mxu0
  %1665 = vmatprep.mubr.bf16.mxu0 0
  %1666 = vmatmul.mubr.bf16.gmra.mxu0 %v1576
  %v1667 = vpop.f32.mrf.mxu0
  %v1668 = vadd.f32 0.0, %v1667
  %v1669 = vpop.f32.mrf.mxu0
  %v1670 = vpop.f32.mrf.mxu0
  %v1671 = vadd.f32 0.0, %v1670
  %v1672 = vpop.f32.mrf.mxu0
  %1673 = vmatprep.mubr.bf16.mxu0 0
  %1674 = vmatmul.mubr.bf16.gmra.mxu0 %v1579
  %v1675 = vpop.f32.mrf.mxu0
  %v1676 = vadd.f32 0.0, %v1675
  %v1677 = vpop.f32.mrf.mxu0
  %v1678 = vpop.f32.mrf.mxu0
  %v1679 = vadd.f32 0.0, %v1678
  %v1680 = vpop.f32.mrf.mxu0
  %1681 = vmatprep.mubr.bf16.mxu0 0
  %1682 = vmatmul.mubr.bf16.gmra.mxu0 %v1582
  %v1683 = vpop.f32.mrf.mxu0
  %v1684 = vadd.f32 0.0, %v1683
  %v1685 = vpop.f32.mrf.mxu0
  %v1686 = vpop.f32.mrf.mxu0
  %v1687 = vadd.f32 0.0, %v1686
  %v1688 = vpop.f32.mrf.mxu0
  %1689 = vmatprep.mubr.bf16.mxu0 0
  %1690 = vmatmul.mubr.bf16.gmra.mxu0 %v1585
  %v1691 = vpop.f32.mrf.mxu0
  %v1692 = vadd.f32 0.0, %v1691
  %v1693 = vpop.f32.mrf.mxu0
  %v1694 = vpop.f32.mrf.mxu0
  %v1695 = vadd.f32 0.0, %v1694
  %v1696 = vpop.f32.mrf.mxu0
  %1697 = vmatprep.mubr.bf16.mxu0 0
  %1698 = vmatmul.mubr.bf16.gmra.mxu0 %v1588
  %v1699 = vpop.f32.mrf.mxu0
  %v1700 = vadd.f32 0.0, %v1699
  %v1701 = vpop.f32.mrf.mxu0
  %v1702 = vpop.f32.mrf.mxu0
  %v1703 = vadd.f32 0.0, %v1702
  %v1704 = vpop.f32.mrf.mxu0
  %1705 = vmatprep.mubr.bf16.mxu0 0
  %1706 = vmatmul.mubr.bf16.gmra.mxu0 %v1591
  %v1707 = vpop.f32.mrf.mxu0
  %v1708 = vadd.f32 0.0, %v1707
  %v1709 = vpop.f32.mrf.mxu0
  %v1710 = vpop.f32.mrf.mxu0
  %v1711 = vadd.f32 0.0, %v1710
  %v1712 = vpop.f32.mrf.mxu0
  %1713 = vdwg.mxu0
  %v1714 = vmul.f32 %v1652, 0.17677669
  %v1715 = vmul.f32 %v1655, 0.17677669
  %v1716 = vmul.f32 %v1660, 0.17677669
  %v1717 = vmul.f32 %v1663, 0.17677669
  %v1718 = vmul.f32 %v1668, 0.17677669
  %v1719 = vmul.f32 %v1671, 0.17677669
  %v1720 = vmul.f32 %v1676, 0.17677669
  %v1721 = vmul.f32 %v1679, 0.17677669
  %v1722 = vmul.f32 %v1684, 0.17677669
  %v1723 = vmul.f32 %v1687, 0.17677669
  %v1724 = vmul.f32 %v1692, 0.17677669
  %v1725 = vmul.f32 %v1695, 0.17677669
  %v1726 = vmul.f32 %v1700, 0.17677669
  %v1727 = vmul.f32 %v1703, 0.17677669
  %v1728 = vmul.f32 %v1708, 0.17677669
  %v1729 = vmul.f32 %v1711, 0.17677669
  %v1730 = vadd.f32 %v1714, %v1512
  %v1731 = vadd.f32 %v1715, %v1513
  %v1732 = vadd.f32 %v1716, %v1514
  %v1733 = vadd.f32 %v1717, %v1515
  %v1734 = vadd.f32 %v1718, %v1516
  %v1735 = vadd.f32 %v1719, %v1517
  %v1736 = vadd.f32 %v1720, %v1518
  %v1737 = vadd.f32 %v1721, %v1519
  %v1738 = vadd.f32 %v1722, %v1520
  %v1739 = vadd.f32 %v1723, %v1521
  %v1740 = vadd.f32 %v1724, %v1522
  %v1741 = vadd.f32 %v1725, %v1523
  %v1742 = vadd.f32 %v1726, %v1524
  %v1743 = vadd.f32 %v1727, %v1525
  %v1744 = vadd.f32 %v1728, %v1526
  %v1745 = vadd.f32 %v1729, %v1527
  %1746 = vmax.xlane.f32.xlu0 %v1730
  %v1747 = vpop.xlane.xlu0 %1746
  %1748 = vmax.xlane.f32.xlu0 %v1731
  %v1749 = vpop.xlane.xlu0 %1748
  %1750 = vmax.xlane.f32.xlu0 %v1732
  %v1751 = vpop.xlane.xlu0 %1750
  %1752 = vmax.xlane.f32.xlu0 %v1733
  %v1753 = vpop.xlane.xlu0 %1752
  %1754 = vmax.xlane.f32.xlu0 %v1734
  %v1755 = vpop.xlane.xlu0 %1754
  %1756 = vmax.xlane.f32.xlu0 %v1735
  %v1757 = vpop.xlane.xlu0 %1756
  %1758 = vmax.xlane.f32.xlu0 %v1736
  %v1759 = vpop.xlane.xlu0 %1758
  %1760 = vmax.xlane.f32.xlu0 %v1737
  %v1761 = vpop.xlane.xlu0 %1760
  %1762 = vmax.xlane.f32.xlu0 %v1738
  %v1763 = vpop.xlane.xlu0 %1762
  %1764 = vmax.xlane.f32.xlu0 %v1739
  %v1765 = vpop.xlane.xlu0 %1764
  %1766 = vmax.xlane.f32.xlu0 %v1740
  %v1767 = vpop.xlane.xlu0 %1766
  %1768 = vmax.xlane.f32.xlu0 %v1741
  %v1769 = vpop.xlane.xlu0 %1768
  %1770 = vmax.xlane.f32.xlu0 %v1742
  %v1771 = vpop.xlane.xlu0 %1770
  %1772 = vmax.xlane.f32.xlu0 %v1743
  %v1773 = vpop.xlane.xlu0 %1772
  %1774 = vmax.xlane.f32.xlu0 %v1744
  %v1775 = vpop.xlane.xlu0 %1774
  %1776 = vmax.xlane.f32.xlu0 %v1745
  %v1777 = vpop.xlane.xlu0 %1776
  %v1778 = vsub.f32 %v1730, %v1747
  %v1779 = vsub.f32 %v1731, %v1749
  %v1780 = vsub.f32 %v1732, %v1751
  %v1781 = vsub.f32 %v1733, %v1753
  %v1782 = vsub.f32 %v1734, %v1755
  %v1783 = vsub.f32 %v1735, %v1757
  %v1784 = vsub.f32 %v1736, %v1759
  %v1785 = vsub.f32 %v1737, %v1761
  %v1786 = vsub.f32 %v1738, %v1763
  %v1787 = vsub.f32 %v1739, %v1765
  %v1788 = vsub.f32 %v1740, %v1767
  %v1789 = vsub.f32 %v1741, %v1769
  %v1790 = vsub.f32 %v1742, %v1771
  %v1791 = vsub.f32 %v1743, %v1773
  %v1792 = vsub.f32 %v1744, %v1775
  %v1793 = vsub.f32 %v1745, %v1777
  %v1794 = vmul.f32 %v1778, 1.442695
  %v1795 = vpow.pop %v1794
  %v1796 = vmul.f32 %v1779, 1.442695
  %v1797 = vpow.pop %v1796
  %v1798 = vmul.f32 %v1780, 1.442695
  %v1799 = vpow.pop %v1798
  %v1800 = vmul.f32 %v1781, 1.442695
  %v1801 = vpow.pop %v1800
  %v1802 = vmul.f32 %v1782, 1.442695
  %v1803 = vpow.pop %v1802
  %v1804 = vmul.f32 %v1783, 1.442695
  %v1805 = vpow.pop %v1804
  %v1806 = vmul.f32 %v1784, 1.442695
  %v1807 = vpow.pop %v1806
  %v1808 = vmul.f32 %v1785, 1.442695
  %v1809 = vpow.pop %v1808
  %v1810 = vmul.f32 %v1786, 1.442695
  %v1811 = vpow.pop %v1810
  %v1812 = vmul.f32 %v1787, 1.442695
  %v1813 = vpow.pop %v1812
  %v1814 = vmul.f32 %v1788, 1.442695
  %v1815 = vpow.pop %v1814
  %v1816 = vmul.f32 %v1789, 1.442695
  %v1817 = vpow.pop %v1816
  %v1818 = vmul.f32 %v1790, 1.442695
  %v1819 = vpow.pop %v1818
  %v1820 = vmul.f32 %v1791, 1.442695
  %v1821 = vpow.pop %v1820
  %v1822 = vmul.f32 %v1792, 1.442695
  %v1823 = vpow.pop %v1822
  %v1824 = vmul.f32 %v1793, 1.442695
  %v1825 = vpow.pop %v1824
  %1826 = vadd.xlane.f32.xlu0 %v1795
  %v1827 = vpop.xlane.xlu0 %1826
  %1828 = vadd.xlane.f32.xlu0 %v1797
  %v1829 = vpop.xlane.xlu0 %1828
  %1830 = vadd.xlane.f32.xlu0 %v1799
  %v1831 = vpop.xlane.xlu0 %1830
  %1832 = vadd.xlane.f32.xlu0 %v1801
  %v1833 = vpop.xlane.xlu0 %1832
  %1834 = vadd.xlane.f32.xlu0 %v1803
  %v1835 = vpop.xlane.xlu0 %1834
  %1836 = vadd.xlane.f32.xlu0 %v1805
  %v1837 = vpop.xlane.xlu0 %1836
  %1838 = vadd.xlane.f32.xlu0 %v1807
  %v1839 = vpop.xlane.xlu0 %1838
  %1840 = vadd.xlane.f32.xlu0 %v1809
  %v1841 = vpop.xlane.xlu0 %1840
  %1842 = vadd.xlane.f32.xlu0 %v1811
  %v1843 = vpop.xlane.xlu0 %1842
  %1844 = vadd.xlane.f32.xlu0 %v1813
  %v1845 = vpop.xlane.xlu0 %1844
  %1846 = vadd.xlane.f32.xlu0 %v1815
  %v1847 = vpop.xlane.xlu0 %1846
  %1848 = vadd.xlane.f32.xlu0 %v1817
  %v1849 = vpop.xlane.xlu0 %1848
  %1850 = vadd.xlane.f32.xlu0 %v1819
  %v1851 = vpop.xlane.xlu0 %1850
  %1852 = vadd.xlane.f32.xlu0 %v1821
  %v1853 = vpop.xlane.xlu0 %1852
  %1854 = vadd.xlane.f32.xlu0 %v1823
  %v1855 = vpop.xlane.xlu0 %1854
  %1856 = vadd.xlane.f32.xlu0 %v1825
  %v1857 = vpop.xlane.xlu0 %1856
  %v1858 = vrcp.pop %v1827
  %v1859 = vrcp.pop %v1829
  %v1860 = vrcp.pop %v1831
  %v1861 = vrcp.pop %v1833
  %v1862 = vrcp.pop %v1835
  %v1863 = vrcp.pop %v1837
  %v1864 = vrcp.pop %v1839
  %v1865 = vrcp.pop %v1841
  %v1866 = vrcp.pop %v1843
  %v1867 = vrcp.pop %v1845
  %v1868 = vrcp.pop %v1847
  %v1869 = vrcp.pop %v1849
  %v1870 = vrcp.pop %v1851
  %v1871 = vrcp.pop %v1853
  %v1872 = vrcp.pop %v1855
  %v1873 = vrcp.pop %v1857
  %v1874 = vmul.f32 %v1795, %v1858
  %v1875 = vmul.f32 %v1797, %v1859
  %v1876 = vmul.f32 %v1799, %v1860
  %v1877 = vmul.f32 %v1801, %v1861
  %v1878 = vmul.f32 %v1803, %v1862
  %v1879 = vmul.f32 %v1805, %v1863
  %v1880 = vmul.f32 %v1807, %v1864
  %v1881 = vmul.f32 %v1809, %v1865
  %v1882 = vmul.f32 %v1811, %v1866
  %v1883 = vmul.f32 %v1813, %v1867
  %v1884 = vmul.f32 %v1815, %v1868
  %v1885 = vmul.f32 %v1817, %v1869
  %v1886 = vmul.f32 %v1819, %v1870
  %v1887 = vmul.f32 %v1821, %v1871
  %v1888 = vmul.f32 %v1823, %v1872
  %v1889 = vmul.f32 %v1825, %v1873
  %v1890 = vpack.c.bf16 %v1875, %v1874
  %v1891 = vpack.c.bf16 %v1877, %v1876
  %v1892 = vpack.c.bf16 %v1879, %v1878
  %v1893 = vpack.c.bf16 %v1881, %v1880
  %v1894 = vpack.c.bf16 %v1883, %v1882
  %v1895 = vpack.c.bf16 %v1885, %v1884
  %v1896 = vpack.c.bf16 %v1887, %v1886
  %v1897 = vpack.c.bf16 %v1889, %v1888
  %1906 = vrot.lane.b32.xlu0 %v1536, 64
  %v1907 = vpop.permute.xlu0 %1906
  %1908 = vrot.lane.b32.xlu0 %v1537, 64
  %v1909 = vpop.permute.xlu0 %1908
  %1910 = vrot.lane.b32.xlu0 %v1538, 64
  %v1911 = vpop.permute.xlu0 %1910
  %1912 = vrot.lane.b32.xlu0 %v1539, 64
  %v1913 = vpop.permute.xlu0 %1912
  %1914 = vrot.lane.b32.xlu0 %v1540, 64
  %v1915 = vpop.permute.xlu0 %1914
  %1916 = vrot.lane.b32.xlu0 %v1541, 64
  %v1917 = vpop.permute.xlu0 %1916
  %1918 = vrot.lane.b32.xlu0 %v1542, 64
  %v1919 = vpop.permute.xlu0 %1918
  %1920 = vrot.lane.b32.xlu0 %v1543, 64
  %v1921 = vpop.permute.xlu0 %1920
  %1930 = vmatprep.subr.bf16.mxu0 0
  %1931 = vmatpush1.bf16.msra.mxu0 %v1921
  %1932 = vmatprep.subr.bf16.mxu0 0
  %1933 = vmatpush1.bf16.msra.mxu0 %v1919
  %1934 = vmatprep.subr.bf16.mxu0 0
  %1935 = vmatpush1.bf16.msra.mxu0 %v1917
  %1936 = vmatprep.subr.bf16.mxu0 0
  %1937 = vmatpush1.bf16.msra.mxu0 %v1915
  %1938 = vmatprep.subr.bf16.mxu0 0
  %1939 = vmatpush1.bf16.msra.mxu0 %v1913
  %1940 = vmatprep.subr.bf16.mxu0 0
  %1941 = vmatpush1.bf16.msra.mxu0 %v1911
  %1942 = vmatprep.subr.bf16.mxu0 0
  %1943 = vmatpush1.bf16.msra.mxu0 %v1909
  %1944 = vmatprep.subr.bf16.mxu0 0
  %1945 = vmatpush1.bf16.msra.mxu0 %v1907
  %1946 = vmatprep.subr.bf16.mxu0 0
  %1947 = vmatpush2.bf16.msra.mxu0 0
  %1948 = vmatprep.subr.bf16.mxu0 0
  %1949 = vmatpush2.bf16.msra.mxu0 0
  %1950 = vmatprep.subr.bf16.mxu0 0
  %1951 = vmatpush2.bf16.msra.mxu0 0
  %1952 = vmatprep.subr.bf16.mxu0 0
  %1953 = vmatpush2.bf16.msra.mxu0 0
  %1954 = vmatprep.subr.bf16.mxu0 0
  %1955 = vmatpush2.bf16.msra.mxu0 0
  %1956 = vmatprep.subr.bf16.mxu0 0
  %1957 = vmatpush2.bf16.msra.mxu0 0
  %1958 = vmatprep.subr.bf16.mxu0 0
  %1959 = vmatpush2.bf16.msra.mxu0 0
  %1960 = vmatprep.subr.bf16.mxu0 0
  %1961 = vmatpush2.bf16.msra.mxu0 0
  %1962 = vmatprep.mubr.bf16.mxu0 0
  %1963 = vmatmul.mubr.bf16.gmra.mxu0 %v1890
  %v1964 = vpop.f32.mrf.mxu0
  %v1965 = vadd.f32 0.0, %v1964
  %v1966 = vpop.f32.mrf.mxu0
  %v1967 = vpop.f32.mrf.mxu0
  %v1968 = vadd.f32 0.0, %v1967
  %v1969 = vpop.f32.mrf.mxu0
  %1970 = vmatprep.mubr.bf16.mxu0 0
  %1971 = vmatmul.mubr.bf16.gmra.mxu0 %v1891
  %v1972 = vpop.f32.mrf.mxu0
  %v1973 = vadd.f32 0.0, %v1972
  %v1974 = vpop.f32.mrf.mxu0
  %v1975 = vpop.f32.mrf.mxu0
  %v1976 = vadd.f32 0.0, %v1975
  %v1977 = vpop.f32.mrf.mxu0
  %1978 = vmatprep.mubr.bf16.mxu0 0
  %1979 = vmatmul.mubr.bf16.gmra.mxu0 %v1892
  %v1980 = vpop.f32.mrf.mxu0
  %v1981 = vadd.f32 0.0, %v1980
  %v1982 = vpop.f32.mrf.mxu0
  %v1983 = vpop.f32.mrf.mxu0
  %v1984 = vadd.f32 0.0, %v1983
  %v1985 = vpop.f32.mrf.mxu0
  %1986 = vmatprep.mubr.bf16.mxu0 0
  %1987 = vmatmul.mubr.bf16.gmra.mxu0 %v1893
  %v1988 = vpop.f32.mrf.mxu0
  %v1989 = vadd.f32 0.0, %v1988
  %v1990 = vpop.f32.mrf.mxu0
  %v1991 = vpop.f32.mrf.mxu0
  %v1992 = vadd.f32 0.0, %v1991
  %v1993 = vpop.f32.mrf.mxu0
  %1994 = vmatprep.mubr.bf16.mxu0 0
  %1995 = vmatmul.mubr.bf16.gmra.mxu0 %v1894
  %v1996 = vpop.f32.mrf.mxu0
  %v1997 = vadd.f32 0.0, %v1996
  %v1998 = vpop.f32.mrf.mxu0
  %v1999 = vpop.f32.mrf.mxu0
  %v2000 = vadd.f32 0.0, %v1999
  %v2001 = vpop.f32.mrf.mxu0
  %2002 = vmatprep.mubr.bf16.mxu0 0
  %2003 = vmatmul.mubr.bf16.gmra.mxu0 %v1895
  %v2004 = vpop.f32.mrf.mxu0
  %v2005 = vadd.f32 0.0, %v2004
  %v2006 = vpop.f32.mrf.mxu0
  %v2007 = vpop.f32.mrf.mxu0
  %v2008 = vadd.f32 0.0, %v2007
  %v2009 = vpop.f32.mrf.mxu0
  %2010 = vmatprep.mubr.bf16.mxu0 0
  %2011 = vmatmul.mubr.bf16.gmra.mxu0 %v1896
  %v2012 = vpop.f32.mrf.mxu0
  %v2013 = vadd.f32 0.0, %v2012
  %v2014 = vpop.f32.mrf.mxu0
  %v2015 = vpop.f32.mrf.mxu0
  %v2016 = vadd.f32 0.0, %v2015
  %v2017 = vpop.f32.mrf.mxu0
  %2018 = vmatprep.mubr.bf16.mxu0 0
  %2019 = vmatmul.mubr.bf16.gmra.mxu0 %v1897
  %v2020 = vpop.f32.mrf.mxu0
  %v2021 = vadd.f32 0.0, %v2020
  %v2022 = vpop.f32.mrf.mxu0
  %v2023 = vpop.f32.mrf.mxu0
  %v2024 = vadd.f32 0.0, %v2023
  %v2025 = vpop.f32.mrf.mxu0
  %2026 = vdwg.mxu0
  %v2027 = vpack.c.bf16 %v1968, %v1965
  %v2028 = vpack.c.bf16 %v1976, %v1973
  %v2029 = vpack.c.bf16 %v1984, %v1981
  %v2030 = vpack.c.bf16 %v1992, %v1989
  %v2031 = vpack.c.bf16 %v2000, %v1997
  %v2032 = vpack.c.bf16 %v2008, %v2005
  %v2033 = vpack.c.bf16 %v2016, %v2013
  %v2034 = vpack.c.bf16 %v2024, %v2021
  %2043 = vrot.lane.b32.xlu0 %v1560, 96
  %v2044 = vpop.permute.xlu0 %2043
  %2045 = vrot.lane.b32.xlu0 %v1561, 96
  %v2046 = vpop.permute.xlu0 %2045
  %2047 = vrot.lane.b32.xlu0 %v1562, 96
  %v2048 = vpop.permute.xlu0 %2047
  %2049 = vrot.lane.b32.xlu0 %v1563, 96
  %v2050 = vpop.permute.xlu0 %2049
  %2051 = vrot.lane.b32.xlu0 %v1564, 96
  %v2052 = vpop.permute.xlu0 %2051
  %2053 = vrot.lane.b32.xlu0 %v1565, 96
  %v2054 = vpop.permute.xlu0 %2053
  %2055 = vrot.lane.b32.xlu0 %v1566, 96
  %v2056 = vpop.permute.xlu0 %2055
  %2057 = vrot.lane.b32.xlu0 %v1567, 96
  %v2058 = vpop.permute.xlu0 %2057
  %v2060 = vsel %vm1568, %v2044, 0
  %v2063 = vsel %vm1568, %v2046, 0
  %v2066 = vsel %vm1568, %v2048, 0
  %v2069 = vsel %vm1568, %v2050, 0
  %v2072 = vsel %vm1568, %v2052, 0
  %v2075 = vsel %vm1568, %v2054, 0
  %v2078 = vsel %vm1568, %v2056, 0
  %v2081 = vsel %vm1568, %v2058, 0
  %2083 = vmatprep.subr.bf16.mxu0 0
  %2084 = vmatpush1.bf16.xpose.msra.mxu0 %v1615
  %2085 = vmatprep.subr.bf16.mxu0 0
  %2086 = vmatpush1.bf16.xpose.msra.mxu0 %v1612
  %2087 = vmatprep.subr.bf16.mxu0 0
  %2088 = vmatpush1.bf16.xpose.msra.mxu0 %v1609
  %2089 = vmatprep.subr.bf16.mxu0 0
  %2090 = vmatpush1.bf16.xpose.msra.mxu0 %v1606
  %2091 = vmatprep.subr.bf16.mxu0 0
  %2092 = vmatpush1.bf16.xpose.msra.mxu0 %v1603
  %2093 = vmatprep.subr.bf16.mxu0 0
  %2094 = vmatpush1.bf16.xpose.msra.mxu0 %v1600
  %2095 = vmatprep.subr.bf16.mxu0 0
  %2096 = vmatpush1.bf16.xpose.msra.mxu0 %v1597
  %2097 = vmatprep.subr.bf16.mxu0 0
  %2098 = vmatpush1.bf16.xpose.msra.mxu0 %v1594
  %2099 = vmatprep.subr.bf16.mxu0 0
  %2100 = vmatpush2.bf16.xpose.msra.mxu0 0
  %2101 = vmatprep.subr.bf16.mxu0 0
  %2102 = vmatpush2.bf16.xpose.msra.mxu0 0
  %2103 = vmatprep.subr.bf16.mxu0 0
  %2104 = vmatpush2.bf16.xpose.msra.mxu0 0
  %2105 = vmatprep.subr.bf16.mxu0 0
  %2106 = vmatpush2.bf16.xpose.msra.mxu0 0
  %2107 = vmatprep.subr.bf16.mxu0 0
  %2108 = vmatpush2.bf16.xpose.msra.mxu0 0
  %2109 = vmatprep.subr.bf16.mxu0 0
  %2110 = vmatpush2.bf16.xpose.msra.mxu0 0
  %2111 = vmatprep.subr.bf16.mxu0 0
  %2112 = vmatpush2.bf16.xpose.msra.mxu0 0
  %2113 = vmatprep.subr.bf16.mxu0 0
  %2114 = vmatpush2.bf16.xpose.msra.mxu0 0
  %2115 = vmatprep.mubr.bf16.mxu0 0
  %2116 = vmatmul.mubr.bf16.gmra.mxu0 %v2060
  %v2117 = vpop.f32.mrf.mxu0
  %v2118 = vadd.f32 0.0, %v2117
  %v2119 = vpop.f32.mrf.mxu0
  %v2120 = vpop.f32.mrf.mxu0
  %v2121 = vadd.f32 0.0, %v2120
  %v2122 = vpop.f32.mrf.mxu0
  %2123 = vmatprep.mubr.bf16.mxu0 0
  %2124 = vmatmul.mubr.bf16.gmra.mxu0 %v2063
  %v2125 = vpop.f32.mrf.mxu0
  %v2126 = vadd.f32 0.0, %v2125
  %v2127 = vpop.f32.mrf.mxu0
  %v2128 = vpop.f32.mrf.mxu0
  %v2129 = vadd.f32 0.0, %v2128
  %v2130 = vpop.f32.mrf.mxu0
  %2131 = vmatprep.mubr.bf16.mxu0 0
  %2132 = vmatmul.mubr.bf16.gmra.mxu0 %v2066
  %v2133 = vpop.f32.mrf.mxu0
  %v2134 = vadd.f32 0.0, %v2133
  %v2135 = vpop.f32.mrf.mxu0
  %v2136 = vpop.f32.mrf.mxu0
  %v2137 = vadd.f32 0.0, %v2136
  %v2138 = vpop.f32.mrf.mxu0
  %2139 = vmatprep.mubr.bf16.mxu0 0
  %2140 = vmatmul.mubr.bf16.gmra.mxu0 %v2069
  %v2141 = vpop.f32.mrf.mxu0
  %v2142 = vadd.f32 0.0, %v2141
  %v2143 = vpop.f32.mrf.mxu0
  %v2144 = vpop.f32.mrf.mxu0
  %v2145 = vadd.f32 0.0, %v2144
  %v2146 = vpop.f32.mrf.mxu0
  %2147 = vmatprep.mubr.bf16.mxu0 0
  %2148 = vmatmul.mubr.bf16.gmra.mxu0 %v2072
  %v2149 = vpop.f32.mrf.mxu0
  %v2150 = vadd.f32 0.0, %v2149
  %v2151 = vpop.f32.mrf.mxu0
  %v2152 = vpop.f32.mrf.mxu0
  %v2153 = vadd.f32 0.0, %v2152
  %v2154 = vpop.f32.mrf.mxu0
  %2155 = vmatprep.mubr.bf16.mxu0 0
  %2156 = vmatmul.mubr.bf16.gmra.mxu0 %v2075
  %v2157 = vpop.f32.mrf.mxu0
  %v2158 = vadd.f32 0.0, %v2157
  %v2159 = vpop.f32.mrf.mxu0
  %v2160 = vpop.f32.mrf.mxu0
  %v2161 = vadd.f32 0.0, %v2160
  %v2162 = vpop.f32.mrf.mxu0
  %2163 = vmatprep.mubr.bf16.mxu0 0
  %2164 = vmatmul.mubr.bf16.gmra.mxu0 %v2078
  %v2165 = vpop.f32.mrf.mxu0
  %v2166 = vadd.f32 0.0, %v2165
  %v2167 = vpop.f32.mrf.mxu0
  %v2168 = vpop.f32.mrf.mxu0
  %v2169 = vadd.f32 0.0, %v2168
  %v2170 = vpop.f32.mrf.mxu0
  %2171 = vmatprep.mubr.bf16.mxu0 0
  %2172 = vmatmul.mubr.bf16.gmra.mxu0 %v2081
  %v2173 = vpop.f32.mrf.mxu0
  %v2174 = vadd.f32 0.0, %v2173
  %v2175 = vpop.f32.mrf.mxu0
  %v2176 = vpop.f32.mrf.mxu0
  %v2177 = vadd.f32 0.0, %v2176
  %v2178 = vpop.f32.mrf.mxu0
  %2179 = vdwg.mxu0
  %v2180 = vmul.f32 %v2118, 0.17677669
  %v2181 = vmul.f32 %v2121, 0.17677669
  %v2182 = vmul.f32 %v2126, 0.17677669
  %v2183 = vmul.f32 %v2129, 0.17677669
  %v2184 = vmul.f32 %v2134, 0.17677669
  %v2185 = vmul.f32 %v2137, 0.17677669
  %v2186 = vmul.f32 %v2142, 0.17677669
  %v2187 = vmul.f32 %v2145, 0.17677669
  %v2188 = vmul.f32 %v2150, 0.17677669
  %v2189 = vmul.f32 %v2153, 0.17677669
  %v2190 = vmul.f32 %v2158, 0.17677669
  %v2191 = vmul.f32 %v2161, 0.17677669
  %v2192 = vmul.f32 %v2166, 0.17677669
  %v2193 = vmul.f32 %v2169, 0.17677669
  %v2194 = vmul.f32 %v2174, 0.17677669
  %v2195 = vmul.f32 %v2177, 0.17677669
  %v2196 = vadd.f32 %v2180, %v1512
  %v2197 = vadd.f32 %v2181, %v1513
  %v2198 = vadd.f32 %v2182, %v1514
  %v2199 = vadd.f32 %v2183, %v1515
  %v2200 = vadd.f32 %v2184, %v1516
  %v2201 = vadd.f32 %v2185, %v1517
  %v2202 = vadd.f32 %v2186, %v1518
  %v2203 = vadd.f32 %v2187, %v1519
  %v2204 = vadd.f32 %v2188, %v1520
  %v2205 = vadd.f32 %v2189, %v1521
  %v2206 = vadd.f32 %v2190, %v1522
  %v2207 = vadd.f32 %v2191, %v1523
  %v2208 = vadd.f32 %v2192, %v1524
  %v2209 = vadd.f32 %v2193, %v1525
  %v2210 = vadd.f32 %v2194, %v1526
  %v2211 = vadd.f32 %v2195, %v1527
  %2212 = vmax.xlane.f32.xlu0 %v2196
  %v2213 = vpop.xlane.xlu0 %2212
  %2214 = vmax.xlane.f32.xlu0 %v2197
  %v2215 = vpop.xlane.xlu0 %2214
  %2216 = vmax.xlane.f32.xlu0 %v2198
  %v2217 = vpop.xlane.xlu0 %2216
  %2218 = vmax.xlane.f32.xlu0 %v2199
  %v2219 = vpop.xlane.xlu0 %2218
  %2220 = vmax.xlane.f32.xlu0 %v2200
  %v2221 = vpop.xlane.xlu0 %2220
  %2222 = vmax.xlane.f32.xlu0 %v2201
  %v2223 = vpop.xlane.xlu0 %2222
  %2224 = vmax.xlane.f32.xlu0 %v2202
  %v2225 = vpop.xlane.xlu0 %2224
  %2226 = vmax.xlane.f32.xlu0 %v2203
  %v2227 = vpop.xlane.xlu0 %2226
  %2228 = vmax.xlane.f32.xlu0 %v2204
  %v2229 = vpop.xlane.xlu0 %2228
  %2230 = vmax.xlane.f32.xlu0 %v2205
  %v2231 = vpop.xlane.xlu0 %2230
  %2232 = vmax.xlane.f32.xlu0 %v2206
  %v2233 = vpop.xlane.xlu0 %2232
  %2234 = vmax.xlane.f32.xlu0 %v2207
  %v2235 = vpop.xlane.xlu0 %2234
  %2236 = vmax.xlane.f32.xlu0 %v2208
  %v2237 = vpop.xlane.xlu0 %2236
  %2238 = vmax.xlane.f32.xlu0 %v2209
  %v2239 = vpop.xlane.xlu0 %2238
  %2240 = vmax.xlane.f32.xlu0 %v2210
  %v2241 = vpop.xlane.xlu0 %2240
  %2242 = vmax.xlane.f32.xlu0 %v2211
  %v2243 = vpop.xlane.xlu0 %2242
  %v2244 = vsub.f32 %v2196, %v2213
  %v2245 = vsub.f32 %v2197, %v2215
  %v2246 = vsub.f32 %v2198, %v2217
  %v2247 = vsub.f32 %v2199, %v2219
  %v2248 = vsub.f32 %v2200, %v2221
  %v2249 = vsub.f32 %v2201, %v2223
  %v2250 = vsub.f32 %v2202, %v2225
  %v2251 = vsub.f32 %v2203, %v2227
  %v2252 = vsub.f32 %v2204, %v2229
  %v2253 = vsub.f32 %v2205, %v2231
  %v2254 = vsub.f32 %v2206, %v2233
  %v2255 = vsub.f32 %v2207, %v2235
  %v2256 = vsub.f32 %v2208, %v2237
  %v2257 = vsub.f32 %v2209, %v2239
  %v2258 = vsub.f32 %v2210, %v2241
  %v2259 = vsub.f32 %v2211, %v2243
  %v2260 = vmul.f32 %v2244, 1.442695
  %v2261 = vpow.pop %v2260
  %v2262 = vmul.f32 %v2245, 1.442695
  %v2263 = vpow.pop %v2262
  %v2264 = vmul.f32 %v2246, 1.442695
  %v2265 = vpow.pop %v2264
  %v2266 = vmul.f32 %v2247, 1.442695
  %v2267 = vpow.pop %v2266
  %v2268 = vmul.f32 %v2248, 1.442695
  %v2269 = vpow.pop %v2268
  %v2270 = vmul.f32 %v2249, 1.442695
  %v2271 = vpow.pop %v2270
  %v2272 = vmul.f32 %v2250, 1.442695
  %v2273 = vpow.pop %v2272
  %v2274 = vmul.f32 %v2251, 1.442695
  %v2275 = vpow.pop %v2274
  %v2276 = vmul.f32 %v2252, 1.442695
  %v2277 = vpow.pop %v2276
  %v2278 = vmul.f32 %v2253, 1.442695
  %v2279 = vpow.pop %v2278
  %v2280 = vmul.f32 %v2254, 1.442695
  %v2281 = vpow.pop %v2280
  %v2282 = vmul.f32 %v2255, 1.442695
  %v2283 = vpow.pop %v2282
  %v2284 = vmul.f32 %v2256, 1.442695
  %v2285 = vpow.pop %v2284
  %v2286 = vmul.f32 %v2257, 1.442695
  %v2287 = vpow.pop %v2286
  %v2288 = vmul.f32 %v2258, 1.442695
  %v2289 = vpow.pop %v2288
  %v2290 = vmul.f32 %v2259, 1.442695
  %v2291 = vpow.pop %v2290
  %2292 = vadd.xlane.f32.xlu0 %v2261
  %v2293 = vpop.xlane.xlu0 %2292
  %2294 = vadd.xlane.f32.xlu0 %v2263
  %v2295 = vpop.xlane.xlu0 %2294
  %2296 = vadd.xlane.f32.xlu0 %v2265
  %v2297 = vpop.xlane.xlu0 %2296
  %2298 = vadd.xlane.f32.xlu0 %v2267
  %v2299 = vpop.xlane.xlu0 %2298
  %2300 = vadd.xlane.f32.xlu0 %v2269
  %v2301 = vpop.xlane.xlu0 %2300
  %2302 = vadd.xlane.f32.xlu0 %v2271
  %v2303 = vpop.xlane.xlu0 %2302
  %2304 = vadd.xlane.f32.xlu0 %v2273
  %v2305 = vpop.xlane.xlu0 %2304
  %2306 = vadd.xlane.f32.xlu0 %v2275
  %v2307 = vpop.xlane.xlu0 %2306
  %2308 = vadd.xlane.f32.xlu0 %v2277
  %v2309 = vpop.xlane.xlu0 %2308
  %2310 = vadd.xlane.f32.xlu0 %v2279
  %v2311 = vpop.xlane.xlu0 %2310
  %2312 = vadd.xlane.f32.xlu0 %v2281
  %v2313 = vpop.xlane.xlu0 %2312
  %2314 = vadd.xlane.f32.xlu0 %v2283
  %v2315 = vpop.xlane.xlu0 %2314
  %2316 = vadd.xlane.f32.xlu0 %v2285
  %v2317 = vpop.xlane.xlu0 %2316
  %2318 = vadd.xlane.f32.xlu0 %v2287
  %v2319 = vpop.xlane.xlu0 %2318
  %2320 = vadd.xlane.f32.xlu0 %v2289
  %v2321 = vpop.xlane.xlu0 %2320
  %2322 = vadd.xlane.f32.xlu0 %v2291
  %v2323 = vpop.xlane.xlu0 %2322
  %v2324 = vrcp.pop %v2293
  %v2325 = vrcp.pop %v2295
  %v2326 = vrcp.pop %v2297
  %v2327 = vrcp.pop %v2299
  %v2328 = vrcp.pop %v2301
  %v2329 = vrcp.pop %v2303
  %v2330 = vrcp.pop %v2305
  %v2331 = vrcp.pop %v2307
  %v2332 = vrcp.pop %v2309
  %v2333 = vrcp.pop %v2311
  %v2334 = vrcp.pop %v2313
  %v2335 = vrcp.pop %v2315
  %v2336 = vrcp.pop %v2317
  %v2337 = vrcp.pop %v2319
  %v2338 = vrcp.pop %v2321
  %v2339 = vrcp.pop %v2323
  %v2340 = vmul.f32 %v2261, %v2324
  %v2341 = vmul.f32 %v2263, %v2325
  %v2342 = vmul.f32 %v2265, %v2326
  %v2343 = vmul.f32 %v2267, %v2327
  %v2344 = vmul.f32 %v2269, %v2328
  %v2345 = vmul.f32 %v2271, %v2329
  %v2346 = vmul.f32 %v2273, %v2330
  %v2347 = vmul.f32 %v2275, %v2331
  %v2348 = vmul.f32 %v2277, %v2332
  %v2349 = vmul.f32 %v2279, %v2333
  %v2350 = vmul.f32 %v2281, %v2334
  %v2351 = vmul.f32 %v2283, %v2335
  %v2352 = vmul.f32 %v2285, %v2336
  %v2353 = vmul.f32 %v2287, %v2337
  %v2354 = vmul.f32 %v2289, %v2338
  %v2355 = vmul.f32 %v2291, %v2339
  %v2356 = vpack.c.bf16 %v2341, %v2340
  %v2357 = vpack.c.bf16 %v2343, %v2342
  %v2358 = vpack.c.bf16 %v2345, %v2344
  %v2359 = vpack.c.bf16 %v2347, %v2346
  %v2360 = vpack.c.bf16 %v2349, %v2348
  %v2361 = vpack.c.bf16 %v2351, %v2350
  %v2362 = vpack.c.bf16 %v2353, %v2352
  %v2363 = vpack.c.bf16 %v2355, %v2354
  %2364 = vmatprep.subr.bf16.mxu0 0
  %2365 = vmatpush1.bf16.msra.mxu0 %v1921
  %2366 = vmatprep.subr.bf16.mxu0 0
  %2367 = vmatpush1.bf16.msra.mxu0 %v1919
  %2368 = vmatprep.subr.bf16.mxu0 0
  %2369 = vmatpush1.bf16.msra.mxu0 %v1917
  %2370 = vmatprep.subr.bf16.mxu0 0
  %2371 = vmatpush1.bf16.msra.mxu0 %v1915
  %2372 = vmatprep.subr.bf16.mxu0 0
  %2373 = vmatpush1.bf16.msra.mxu0 %v1913
  %2374 = vmatprep.subr.bf16.mxu0 0
  %2375 = vmatpush1.bf16.msra.mxu0 %v1911
  %2376 = vmatprep.subr.bf16.mxu0 0
  %2377 = vmatpush1.bf16.msra.mxu0 %v1909
  %2378 = vmatprep.subr.bf16.mxu0 0
  %2379 = vmatpush1.bf16.msra.mxu0 %v1907
  %2380 = vmatprep.subr.bf16.mxu0 0
  %2381 = vmatpush2.bf16.msra.mxu0 0
  %2382 = vmatprep.subr.bf16.mxu0 0
  %2383 = vmatpush2.bf16.msra.mxu0 0
  %2384 = vmatprep.subr.bf16.mxu0 0
  %2385 = vmatpush2.bf16.msra.mxu0 0
  %2386 = vmatprep.subr.bf16.mxu0 0
  %2387 = vmatpush2.bf16.msra.mxu0 0
  %2388 = vmatprep.subr.bf16.mxu0 0
  %2389 = vmatpush2.bf16.msra.mxu0 0
  %2390 = vmatprep.subr.bf16.mxu0 0
  %2391 = vmatpush2.bf16.msra.mxu0 0
  %2392 = vmatprep.subr.bf16.mxu0 0
  %2393 = vmatpush2.bf16.msra.mxu0 0
  %2394 = vmatprep.subr.bf16.mxu0 0
  %2395 = vmatpush2.bf16.msra.mxu0 0
  %2396 = vmatprep.mubr.bf16.mxu0 0
  %2397 = vmatmul.mubr.bf16.gmra.mxu0 %v2356
  %v2398 = vpop.f32.mrf.mxu0
  %v2399 = vadd.f32 0.0, %v2398
  %v2400 = vpop.f32.mrf.mxu0
  %v2401 = vpop.f32.mrf.mxu0
  %v2402 = vadd.f32 0.0, %v2401
  %v2403 = vpop.f32.mrf.mxu0
  %2404 = vmatprep.mubr.bf16.mxu0 0
  %2405 = vmatmul.mubr.bf16.gmra.mxu0 %v2357
  %v2406 = vpop.f32.mrf.mxu0
  %v2407 = vadd.f32 0.0, %v2406
  %v2408 = vpop.f32.mrf.mxu0
  %v2409 = vpop.f32.mrf.mxu0
  %v2410 = vadd.f32 0.0, %v2409
  %v2411 = vpop.f32.mrf.mxu0
  %2412 = vmatprep.mubr.bf16.mxu0 0
  %2413 = vmatmul.mubr.bf16.gmra.mxu0 %v2358
  %v2414 = vpop.f32.mrf.mxu0
  %v2415 = vadd.f32 0.0, %v2414
  %v2416 = vpop.f32.mrf.mxu0
  %v2417 = vpop.f32.mrf.mxu0
  %v2418 = vadd.f32 0.0, %v2417
  %v2419 = vpop.f32.mrf.mxu0
  %2420 = vmatprep.mubr.bf16.mxu0 0
  %2421 = vmatmul.mubr.bf16.gmra.mxu0 %v2359
  %v2422 = vpop.f32.mrf.mxu0
  %v2423 = vadd.f32 0.0, %v2422
  %v2424 = vpop.f32.mrf.mxu0
  %v2425 = vpop.f32.mrf.mxu0
  %v2426 = vadd.f32 0.0, %v2425
  %v2427 = vpop.f32.mrf.mxu0
  %2428 = vmatprep.mubr.bf16.mxu0 0
  %2429 = vmatmul.mubr.bf16.gmra.mxu0 %v2360
  %v2430 = vpop.f32.mrf.mxu0
  %v2431 = vadd.f32 0.0, %v2430
  %v2432 = vpop.f32.mrf.mxu0
  %v2433 = vpop.f32.mrf.mxu0
  %v2434 = vadd.f32 0.0, %v2433
  %v2435 = vpop.f32.mrf.mxu0
  %2436 = vmatprep.mubr.bf16.mxu0 0
  %2437 = vmatmul.mubr.bf16.gmra.mxu0 %v2361
  %v2438 = vpop.f32.mrf.mxu0
  %v2439 = vadd.f32 0.0, %v2438
  %v2440 = vpop.f32.mrf.mxu0
  %v2441 = vpop.f32.mrf.mxu0
  %v2442 = vadd.f32 0.0, %v2441
  %v2443 = vpop.f32.mrf.mxu0
  %2444 = vmatprep.mubr.bf16.mxu0 0
  %2445 = vmatmul.mubr.bf16.gmra.mxu0 %v2362
  %v2446 = vpop.f32.mrf.mxu0
  %v2447 = vadd.f32 0.0, %v2446
  %v2448 = vpop.f32.mrf.mxu0
  %v2449 = vpop.f32.mrf.mxu0
  %v2450 = vadd.f32 0.0, %v2449
  %v2451 = vpop.f32.mrf.mxu0
  %2452 = vmatprep.mubr.bf16.mxu0 0
  %2453 = vmatmul.mubr.bf16.gmra.mxu0 %v2363
  %v2454 = vpop.f32.mrf.mxu0
  %v2455 = vadd.f32 0.0, %v2454
  %v2456 = vpop.f32.mrf.mxu0
  %v2457 = vpop.f32.mrf.mxu0
  %v2458 = vadd.f32 0.0, %v2457
  %v2459 = vpop.f32.mrf.mxu0
  %2460 = vdwg.mxu0
  %v2461 = vpack.c.bf16 %v2402, %v2399
  %v2462 = vpack.c.bf16 %v2410, %v2407
  %v2463 = vpack.c.bf16 %v2418, %v2415
  %v2464 = vpack.c.bf16 %v2426, %v2423
  %v2465 = vpack.c.bf16 %v2434, %v2431
  %v2466 = vpack.c.bf16 %v2442, %v2439
  %v2467 = vpack.c.bf16 %v2450, %v2447
  %v2468 = vpack.c.bf16 %v2458, %v2455
  %v2473 = vunpack.c.l.b16 %v1548
  %v2474 = vunpack.c.l.b16 %v1549
  %v2475 = vunpack.c.l.b16 %v1550
  %v2476 = vunpack.c.l.b16 %v1551
  %v2477 = vpack.c.b16 %v2474, %v2473
  %v2478 = vpack.c.b16 %v2476, %v2475
  %v2482 = vsel %vm1568, %v2461, 0
  %v2485 = vsel %vm1568, %v2462, 0
  %v2488 = vsel %vm1568, %v2463, 0
  %v2491 = vsel %vm1568, %v2464, 0
  %v2494 = vsel %vm1568, %v2465, 0
  %v2497 = vsel %vm1568, %v2466, 0
  %v2500 = vsel %vm1568, %v2467, 0
  %v2503 = vsel %vm1568, %v2468, 0
  %2505 = vmatprep.subr.bf16.mxu0 0
  %2506 = vmatpush1.bf16.msra.mxu0 0
  %2507 = vmatprep.subr.bf16.mxu0 0
  %2508 = vmatpush1.bf16.msra.mxu0 0
  %2509 = vmatprep.subr.bf16.mxu0 0
  %2510 = vmatpush1.bf16.msra.mxu0 0
  %2511 = vmatprep.subr.bf16.mxu0 0
  %2512 = vmatpush1.bf16.msra.mxu0 0
  %2513 = vmatprep.subr.bf16.mxu0 0
  %2514 = vmatpush1.bf16.msra.mxu0 0
  %2515 = vmatprep.subr.bf16.mxu0 0
  %2516 = vmatpush1.bf16.msra.mxu0 0
  %2517 = vmatprep.subr.bf16.mxu0 0
  %2518 = vmatpush1.bf16.msra.mxu0 %v2478
  %2519 = vmatprep.subr.bf16.mxu0 0
  %2520 = vmatpush1.bf16.msra.mxu0 %v2477
  %2521 = vmatprep.subr.bf16.mxu0 0
  %2522 = vmatpush2.bf16.msra.mxu0 0
  %2523 = vmatprep.subr.bf16.mxu0 0
  %2524 = vmatpush2.bf16.msra.mxu0 0
  %2525 = vmatprep.subr.bf16.mxu0 0
  %2526 = vmatpush2.bf16.msra.mxu0 0
  %2527 = vmatprep.subr.bf16.mxu0 0
  %2528 = vmatpush2.bf16.msra.mxu0 0
  %2529 = vmatprep.subr.bf16.mxu0 0
  %2530 = vmatpush2.bf16.msra.mxu0 0
  %2531 = vmatprep.subr.bf16.mxu0 0
  %2532 = vmatpush2.bf16.msra.mxu0 0
  %2533 = vmatprep.subr.bf16.mxu0 0
  %2534 = vmatpush2.bf16.msra.mxu0 0
  %2535 = vmatprep.subr.bf16.mxu0 0
  %2536 = vmatpush2.bf16.msra.mxu0 0
  %2537 = vmatprep.mubr.bf16.mxu0 0
  %2538 = vmatmul.mubr.bf16.gmra.mxu0 %v2482
  %v2539 = vpop.f32.mrf.mxu0
  %v2540 = vadd.f32 0.0, %v2539
  %v2541 = vpop.f32.mrf.mxu0
  %v2542 = vpop.f32.mrf.mxu0
  %v2543 = vadd.f32 0.0, %v2542
  %v2544 = vpop.f32.mrf.mxu0
  %2545 = vmatprep.mubr.bf16.mxu0 0
  %2546 = vmatmul.mubr.bf16.gmra.mxu0 %v2485
  %v2547 = vpop.f32.mrf.mxu0
  %v2548 = vadd.f32 0.0, %v2547
  %v2549 = vpop.f32.mrf.mxu0
  %v2550 = vpop.f32.mrf.mxu0
  %v2551 = vadd.f32 0.0, %v2550
  %v2552 = vpop.f32.mrf.mxu0
  %2553 = vmatprep.mubr.bf16.mxu0 0
  %2554 = vmatmul.mubr.bf16.gmra.mxu0 %v2488
  %v2555 = vpop.f32.mrf.mxu0
  %v2556 = vadd.f32 0.0, %v2555
  %v2557 = vpop.f32.mrf.mxu0
  %v2558 = vpop.f32.mrf.mxu0
  %v2559 = vadd.f32 0.0, %v2558
  %v2560 = vpop.f32.mrf.mxu0
  %2561 = vmatprep.mubr.bf16.mxu0 0
  %2562 = vmatmul.mubr.bf16.gmra.mxu0 %v2491
  %v2563 = vpop.f32.mrf.mxu0
  %v2564 = vadd.f32 0.0, %v2563
  %v2565 = vpop.f32.mrf.mxu0
  %v2566 = vpop.f32.mrf.mxu0
  %v2567 = vadd.f32 0.0, %v2566
  %v2568 = vpop.f32.mrf.mxu0
  %2569 = vmatprep.mubr.bf16.mxu0 0
  %2570 = vmatmul.mubr.bf16.gmra.mxu0 %v2494
  %v2571 = vpop.f32.mrf.mxu0
  %v2572 = vadd.f32 0.0, %v2571
  %v2573 = vpop.f32.mrf.mxu0
  %v2574 = vpop.f32.mrf.mxu0
  %v2575 = vadd.f32 0.0, %v2574
  %v2576 = vpop.f32.mrf.mxu0
  %2577 = vmatprep.mubr.bf16.mxu0 0
  %2578 = vmatmul.mubr.bf16.gmra.mxu0 %v2497
  %v2579 = vpop.f32.mrf.mxu0
  %v2580 = vadd.f32 0.0, %v2579
  %v2581 = vpop.f32.mrf.mxu0
  %v2582 = vpop.f32.mrf.mxu0
  %v2583 = vadd.f32 0.0, %v2582
  %v2584 = vpop.f32.mrf.mxu0
  %2585 = vmatprep.mubr.bf16.mxu0 0
  %2586 = vmatmul.mubr.bf16.gmra.mxu0 %v2500
  %v2587 = vpop.f32.mrf.mxu0
  %v2588 = vadd.f32 0.0, %v2587
  %v2589 = vpop.f32.mrf.mxu0
  %v2590 = vpop.f32.mrf.mxu0
  %v2591 = vadd.f32 0.0, %v2590
  %v2592 = vpop.f32.mrf.mxu0
  %2593 = vmatprep.mubr.bf16.mxu0 0
  %2594 = vmatmul.mubr.bf16.gmra.mxu0 %v2503
  %v2595 = vpop.f32.mrf.mxu0
  %v2596 = vadd.f32 0.0, %v2595
  %v2597 = vpop.f32.mrf.mxu0
  %v2598 = vpop.f32.mrf.mxu0
  %v2599 = vadd.f32 0.0, %v2598
  %v2600 = vpop.f32.mrf.mxu0
  %2601 = vdwg.mxu0
  %v2606 = vunpack.c.l.b16 %v1544
  %v2607 = vunpack.c.l.b16 %v1545
  %v2608 = vunpack.c.l.b16 %v1546
  %v2609 = vunpack.c.l.b16 %v1547
  %v2610 = vpack.c.b16 %v2607, %v2606
  %v2611 = vpack.c.b16 %v2609, %v2608
  %v2615 = vsel %vm1568, %v2027, 0
  %v2618 = vsel %vm1568, %v2028, 0
  %v2621 = vsel %vm1568, %v2029, 0
  %v2624 = vsel %vm1568, %v2030, 0
  %v2627 = vsel %vm1568, %v2031, 0
  %v2630 = vsel %vm1568, %v2032, 0
  %v2633 = vsel %vm1568, %v2033, 0
  %v2636 = vsel %vm1568, %v2034, 0
  %2638 = vmatprep.subr.bf16.mxu0 0
  %2639 = vmatpush1.bf16.msra.mxu0 0
  %2640 = vmatprep.subr.bf16.mxu0 0
  %2641 = vmatpush1.bf16.msra.mxu0 0
  %2642 = vmatprep.subr.bf16.mxu0 0
  %2643 = vmatpush1.bf16.msra.mxu0 0
  %2644 = vmatprep.subr.bf16.mxu0 0
  %2645 = vmatpush1.bf16.msra.mxu0 0
  %2646 = vmatprep.subr.bf16.mxu0 0
  %2647 = vmatpush1.bf16.msra.mxu0 0
  %2648 = vmatprep.subr.bf16.mxu0 0
  %2649 = vmatpush1.bf16.msra.mxu0 0
  %2650 = vmatprep.subr.bf16.mxu0 0
  %2651 = vmatpush1.bf16.msra.mxu0 %v2611
  %2652 = vmatprep.subr.bf16.mxu0 0
  %2653 = vmatpush1.bf16.msra.mxu0 %v2610
  %2654 = vmatprep.subr.bf16.mxu0 0
  %2655 = vmatpush2.bf16.msra.mxu0 0
  %2656 = vmatprep.subr.bf16.mxu0 0
  %2657 = vmatpush2.bf16.msra.mxu0 0
  %2658 = vmatprep.subr.bf16.mxu0 0
  %2659 = vmatpush2.bf16.msra.mxu0 0
  %2660 = vmatprep.subr.bf16.mxu0 0
  %2661 = vmatpush2.bf16.msra.mxu0 0
  %2662 = vmatprep.subr.bf16.mxu0 0
  %2663 = vmatpush2.bf16.msra.mxu0 0
  %2664 = vmatprep.subr.bf16.mxu0 0
  %2665 = vmatpush2.bf16.msra.mxu0 0
  %2666 = vmatprep.subr.bf16.mxu0 0
  %2667 = vmatpush2.bf16.msra.mxu0 0
  %2668 = vmatprep.subr.bf16.mxu0 0
  %2669 = vmatpush2.bf16.msra.mxu0 0
  %2670 = vmatprep.mubr.bf16.mxu0 0
  %2671 = vmatmul.mubr.bf16.gmra.mxu0 %v2615
  %v2672 = vpop.f32.mrf.mxu0
  %v2673 = vadd.f32 %v2540, %v2672
  %v2674 = vpop.f32.mrf.mxu0
  %v2675 = vpop.f32.mrf.mxu0
  %v2676 = vadd.f32 %v2543, %v2675
  %v2677 = vpop.f32.mrf.mxu0
  %2678 = vmatprep.mubr.bf16.mxu0 0
  %2679 = vmatmul.mubr.bf16.gmra.mxu0 %v2618
  %v2680 = vpop.f32.mrf.mxu0
  %v2681 = vadd.f32 %v2548, %v2680
  %v2682 = vpop.f32.mrf.mxu0
  %v2683 = vpop.f32.mrf.mxu0
  %v2684 = vadd.f32 %v2551, %v2683
  %v2685 = vpop.f32.mrf.mxu0
  %2686 = vmatprep.mubr.bf16.mxu0 0
  %2687 = vmatmul.mubr.bf16.gmra.mxu0 %v2621
  %v2688 = vpop.f32.mrf.mxu0
  %v2689 = vadd.f32 %v2556, %v2688
  %v2690 = vpop.f32.mrf.mxu0
  %v2691 = vpop.f32.mrf.mxu0
  %v2692 = vadd.f32 %v2559, %v2691
  %v2693 = vpop.f32.mrf.mxu0
  %2694 = vmatprep.mubr.bf16.mxu0 0
  %2695 = vmatmul.mubr.bf16.gmra.mxu0 %v2624
  %v2696 = vpop.f32.mrf.mxu0
  %v2697 = vadd.f32 %v2564, %v2696
  %v2698 = vpop.f32.mrf.mxu0
  %v2699 = vpop.f32.mrf.mxu0
  %v2700 = vadd.f32 %v2567, %v2699
  %v2701 = vpop.f32.mrf.mxu0
  %2702 = vmatprep.mubr.bf16.mxu0 0
  %2703 = vmatmul.mubr.bf16.gmra.mxu0 %v2627
  %v2704 = vpop.f32.mrf.mxu0
  %v2705 = vadd.f32 %v2572, %v2704
  %v2706 = vpop.f32.mrf.mxu0
  %v2707 = vpop.f32.mrf.mxu0
  %v2708 = vadd.f32 %v2575, %v2707
  %v2709 = vpop.f32.mrf.mxu0
  %2710 = vmatprep.mubr.bf16.mxu0 0
  %2711 = vmatmul.mubr.bf16.gmra.mxu0 %v2630
  %v2712 = vpop.f32.mrf.mxu0
  %v2713 = vadd.f32 %v2580, %v2712
  %v2714 = vpop.f32.mrf.mxu0
  %v2715 = vpop.f32.mrf.mxu0
  %v2716 = vadd.f32 %v2583, %v2715
  %v2717 = vpop.f32.mrf.mxu0
  %2718 = vmatprep.mubr.bf16.mxu0 0
  %2719 = vmatmul.mubr.bf16.gmra.mxu0 %v2633
  %v2720 = vpop.f32.mrf.mxu0
  %v2721 = vadd.f32 %v2588, %v2720
  %v2722 = vpop.f32.mrf.mxu0
  %v2723 = vpop.f32.mrf.mxu0
  %v2724 = vadd.f32 %v2591, %v2723
  %v2725 = vpop.f32.mrf.mxu0
  %2726 = vmatprep.mubr.bf16.mxu0 0
  %2727 = vmatmul.mubr.bf16.gmra.mxu0 %v2636
  %v2728 = vpop.f32.mrf.mxu0
  %v2729 = vadd.f32 %v2596, %v2728
  %v2730 = vpop.f32.mrf.mxu0
  %v2731 = vpop.f32.mrf.mxu0
  %v2732 = vadd.f32 %v2599, %v2731
  %v2733 = vpop.f32.mrf.mxu0
  %2734 = vdwg.mxu0
  %2735 = vrot.lane.b32.xlu0 %v1560, 64
  %v2736 = vpop.permute.xlu0 %2735
  %2737 = vrot.lane.b32.xlu0 %v1561, 64
  %v2738 = vpop.permute.xlu0 %2737
  %2739 = vrot.lane.b32.xlu0 %v1562, 64
  %v2740 = vpop.permute.xlu0 %2739
  %2741 = vrot.lane.b32.xlu0 %v1563, 64
  %v2742 = vpop.permute.xlu0 %2741
  %2743 = vrot.lane.b32.xlu0 %v1564, 64
  %v2744 = vpop.permute.xlu0 %2743
  %2745 = vrot.lane.b32.xlu0 %v1565, 64
  %v2746 = vpop.permute.xlu0 %2745
  %2747 = vrot.lane.b32.xlu0 %v1566, 64
  %v2748 = vpop.permute.xlu0 %2747
  %2749 = vrot.lane.b32.xlu0 %v1567, 64
  %v2750 = vpop.permute.xlu0 %2749
  %2759 = vrot.lane.b32.xlu0 %v1528, 96
  %v2760 = vpop.permute.xlu0 %2759
  %2761 = vrot.lane.b32.xlu0 %v1529, 96
  %v2762 = vpop.permute.xlu0 %2761
  %2763 = vrot.lane.b32.xlu0 %v1530, 96
  %v2764 = vpop.permute.xlu0 %2763
  %2765 = vrot.lane.b32.xlu0 %v1531, 96
  %v2766 = vpop.permute.xlu0 %2765
  %2767 = vrot.lane.b32.xlu0 %v1532, 96
  %v2768 = vpop.permute.xlu0 %2767
  %2769 = vrot.lane.b32.xlu0 %v1533, 96
  %v2770 = vpop.permute.xlu0 %2769
  %2771 = vrot.lane.b32.xlu0 %v1534, 96
  %v2772 = vpop.permute.xlu0 %2771
  %2773 = vrot.lane.b32.xlu0 %v1535, 96
  %v2774 = vpop.permute.xlu0 %2773
  %v2776 = vsel %vm1568, %v2736, 0
  %v2779 = vsel %vm1568, %v2738, 0
  %v2782 = vsel %vm1568, %v2740, 0
  %v2785 = vsel %vm1568, %v2742, 0
  %v2788 = vsel %vm1568, %v2744, 0
  %v2791 = vsel %vm1568, %v2746, 0
  %v2794 = vsel %vm1568, %v2748, 0
  %v2797 = vsel %vm1568, %v2750, 0
  %v2800 = vsel %vm1568, %v2760, 0
  %v2803 = vsel %vm1568, %v2762, 0
  %v2806 = vsel %vm1568, %v2764, 0
  %v2809 = vsel %vm1568, %v2766, 0
  %v2812 = vsel %vm1568, %v2768, 0
  %v2815 = vsel %vm1568, %v2770, 0
  %v2818 = vsel %vm1568, %v2772, 0
  %v2821 = vsel %vm1568, %v2774, 0
  %2823 = vmatprep.subr.bf16.mxu0 0
  %2824 = vmatpush1.bf16.xpose.msra.mxu0 %v2821
  %2825 = vmatprep.subr.bf16.mxu0 0
  %2826 = vmatpush1.bf16.xpose.msra.mxu0 %v2818
  %2827 = vmatprep.subr.bf16.mxu0 0
  %2828 = vmatpush1.bf16.xpose.msra.mxu0 %v2815
  %2829 = vmatprep.subr.bf16.mxu0 0
  %2830 = vmatpush1.bf16.xpose.msra.mxu0 %v2812
  %2831 = vmatprep.subr.bf16.mxu0 0
  %2832 = vmatpush1.bf16.xpose.msra.mxu0 %v2809
  %2833 = vmatprep.subr.bf16.mxu0 0
  %2834 = vmatpush1.bf16.xpose.msra.mxu0 %v2806
  %2835 = vmatprep.subr.bf16.mxu0 0
  %2836 = vmatpush1.bf16.xpose.msra.mxu0 %v2803
  %2837 = vmatprep.subr.bf16.mxu0 0
  %2838 = vmatpush1.bf16.xpose.msra.mxu0 %v2800
  %2839 = vmatprep.subr.bf16.mxu0 0
  %2840 = vmatpush2.bf16.xpose.msra.mxu0 0
  %2841 = vmatprep.subr.bf16.mxu0 0
  %2842 = vmatpush2.bf16.xpose.msra.mxu0 0
  %2843 = vmatprep.subr.bf16.mxu0 0
  %2844 = vmatpush2.bf16.xpose.msra.mxu0 0
  %2845 = vmatprep.subr.bf16.mxu0 0
  %2846 = vmatpush2.bf16.xpose.msra.mxu0 0
  %2847 = vmatprep.subr.bf16.mxu0 0
  %2848 = vmatpush2.bf16.xpose.msra.mxu0 0
  %2849 = vmatprep.subr.bf16.mxu0 0
  %2850 = vmatpush2.bf16.xpose.msra.mxu0 0
  %2851 = vmatprep.subr.bf16.mxu0 0
  %2852 = vmatpush2.bf16.xpose.msra.mxu0 0
  %2853 = vmatprep.subr.bf16.mxu0 0
  %2854 = vmatpush2.bf16.xpose.msra.mxu0 0
  %2855 = vmatprep.mubr.bf16.mxu0 0
  %2856 = vmatmul.mubr.bf16.gmra.mxu0 %v2776
  %v2857 = vpop.f32.mrf.mxu0
  %v2858 = vadd.f32 0.0, %v2857
  %v2859 = vpop.f32.mrf.mxu0
  %v2860 = vpop.f32.mrf.mxu0
  %v2861 = vadd.f32 0.0, %v2860
  %v2862 = vpop.f32.mrf.mxu0
  %2863 = vmatprep.mubr.bf16.mxu0 0
  %2864 = vmatmul.mubr.bf16.gmra.mxu0 %v2779
  %v2865 = vpop.f32.mrf.mxu0
  %v2866 = vadd.f32 0.0, %v2865
  %v2867 = vpop.f32.mrf.mxu0
  %v2868 = vpop.f32.mrf.mxu0
  %v2869 = vadd.f32 0.0, %v2868
  %v2870 = vpop.f32.mrf.mxu0
  %2871 = vmatprep.mubr.bf16.mxu0 0
  %2872 = vmatmul.mubr.bf16.gmra.mxu0 %v2782
  %v2873 = vpop.f32.mrf.mxu0
  %v2874 = vadd.f32 0.0, %v2873
  %v2875 = vpop.f32.mrf.mxu0
  %v2876 = vpop.f32.mrf.mxu0
  %v2877 = vadd.f32 0.0, %v2876
  %v2878 = vpop.f32.mrf.mxu0
  %2879 = vmatprep.mubr.bf16.mxu0 0
  %2880 = vmatmul.mubr.bf16.gmra.mxu0 %v2785
  %v2881 = vpop.f32.mrf.mxu0
  %v2882 = vadd.f32 0.0, %v2881
  %v2883 = vpop.f32.mrf.mxu0
  %v2884 = vpop.f32.mrf.mxu0
  %v2885 = vadd.f32 0.0, %v2884
  %v2886 = vpop.f32.mrf.mxu0
  %2887 = vmatprep.mubr.bf16.mxu0 0
  %2888 = vmatmul.mubr.bf16.gmra.mxu0 %v2788
  %v2889 = vpop.f32.mrf.mxu0
  %v2890 = vadd.f32 0.0, %v2889
  %v2891 = vpop.f32.mrf.mxu0
  %v2892 = vpop.f32.mrf.mxu0
  %v2893 = vadd.f32 0.0, %v2892
  %v2894 = vpop.f32.mrf.mxu0
  %2895 = vmatprep.mubr.bf16.mxu0 0
  %2896 = vmatmul.mubr.bf16.gmra.mxu0 %v2791
  %v2897 = vpop.f32.mrf.mxu0
  %v2898 = vadd.f32 0.0, %v2897
  %v2899 = vpop.f32.mrf.mxu0
  %v2900 = vpop.f32.mrf.mxu0
  %v2901 = vadd.f32 0.0, %v2900
  %v2902 = vpop.f32.mrf.mxu0
  %2903 = vmatprep.mubr.bf16.mxu0 0
  %2904 = vmatmul.mubr.bf16.gmra.mxu0 %v2794
  %v2905 = vpop.f32.mrf.mxu0
  %v2906 = vadd.f32 0.0, %v2905
  %v2907 = vpop.f32.mrf.mxu0
  %v2908 = vpop.f32.mrf.mxu0
  %v2909 = vadd.f32 0.0, %v2908
  %v2910 = vpop.f32.mrf.mxu0
  %2911 = vmatprep.mubr.bf16.mxu0 0
  %2912 = vmatmul.mubr.bf16.gmra.mxu0 %v2797
  %v2913 = vpop.f32.mrf.mxu0
  %v2914 = vadd.f32 0.0, %v2913
  %v2915 = vpop.f32.mrf.mxu0
  %v2916 = vpop.f32.mrf.mxu0
  %v2917 = vadd.f32 0.0, %v2916
  %v2918 = vpop.f32.mrf.mxu0
  %2919 = vdwg.mxu0
  %v2920 = vmul.f32 %v2858, 0.17677669
  %v2921 = vmul.f32 %v2861, 0.17677669
  %v2922 = vmul.f32 %v2866, 0.17677669
  %v2923 = vmul.f32 %v2869, 0.17677669
  %v2924 = vmul.f32 %v2874, 0.17677669
  %v2925 = vmul.f32 %v2877, 0.17677669
  %v2926 = vmul.f32 %v2882, 0.17677669
  %v2927 = vmul.f32 %v2885, 0.17677669
  %v2928 = vmul.f32 %v2890, 0.17677669
  %v2929 = vmul.f32 %v2893, 0.17677669
  %v2930 = vmul.f32 %v2898, 0.17677669
  %v2931 = vmul.f32 %v2901, 0.17677669
  %v2932 = vmul.f32 %v2906, 0.17677669
  %v2933 = vmul.f32 %v2909, 0.17677669
  %v2934 = vmul.f32 %v2914, 0.17677669
  %v2935 = vmul.f32 %v2917, 0.17677669
  %v2936 = vadd.f32 %v2920, %v1512
  %v2937 = vadd.f32 %v2921, %v1513
  %v2938 = vadd.f32 %v2922, %v1514
  %v2939 = vadd.f32 %v2923, %v1515
  %v2940 = vadd.f32 %v2924, %v1516
  %v2941 = vadd.f32 %v2925, %v1517
  %v2942 = vadd.f32 %v2926, %v1518
  %v2943 = vadd.f32 %v2927, %v1519
  %v2944 = vadd.f32 %v2928, %v1520
  %v2945 = vadd.f32 %v2929, %v1521
  %v2946 = vadd.f32 %v2930, %v1522
  %v2947 = vadd.f32 %v2931, %v1523
  %v2948 = vadd.f32 %v2932, %v1524
  %v2949 = vadd.f32 %v2933, %v1525
  %v2950 = vadd.f32 %v2934, %v1526
  %v2951 = vadd.f32 %v2935, %v1527
  %2952 = vmax.xlane.f32.xlu0 %v2936
  %v2953 = vpop.xlane.xlu0 %2952
  %2954 = vmax.xlane.f32.xlu0 %v2937
  %v2955 = vpop.xlane.xlu0 %2954
  %2956 = vmax.xlane.f32.xlu0 %v2938
  %v2957 = vpop.xlane.xlu0 %2956
  %2958 = vmax.xlane.f32.xlu0 %v2939
  %v2959 = vpop.xlane.xlu0 %2958
  %2960 = vmax.xlane.f32.xlu0 %v2940
  %v2961 = vpop.xlane.xlu0 %2960
  %2962 = vmax.xlane.f32.xlu0 %v2941
  %v2963 = vpop.xlane.xlu0 %2962
  %2964 = vmax.xlane.f32.xlu0 %v2942
  %v2965 = vpop.xlane.xlu0 %2964
  %2966 = vmax.xlane.f32.xlu0 %v2943
  %v2967 = vpop.xlane.xlu0 %2966
  %2968 = vmax.xlane.f32.xlu0 %v2944
  %v2969 = vpop.xlane.xlu0 %2968
  %2970 = vmax.xlane.f32.xlu0 %v2945
  %v2971 = vpop.xlane.xlu0 %2970
  %2972 = vmax.xlane.f32.xlu0 %v2946
  %v2973 = vpop.xlane.xlu0 %2972
  %2974 = vmax.xlane.f32.xlu0 %v2947
  %v2975 = vpop.xlane.xlu0 %2974
  %2976 = vmax.xlane.f32.xlu0 %v2948
  %v2977 = vpop.xlane.xlu0 %2976
  %2978 = vmax.xlane.f32.xlu0 %v2949
  %v2979 = vpop.xlane.xlu0 %2978
  %2980 = vmax.xlane.f32.xlu0 %v2950
  %v2981 = vpop.xlane.xlu0 %2980
  %2982 = vmax.xlane.f32.xlu0 %v2951
  %v2983 = vpop.xlane.xlu0 %2982
  %v2984 = vsub.f32 %v2936, %v2953
  %v2985 = vsub.f32 %v2937, %v2955
  %v2986 = vsub.f32 %v2938, %v2957
  %v2987 = vsub.f32 %v2939, %v2959
  %v2988 = vsub.f32 %v2940, %v2961
  %v2989 = vsub.f32 %v2941, %v2963
  %v2990 = vsub.f32 %v2942, %v2965
  %v2991 = vsub.f32 %v2943, %v2967
  %v2992 = vsub.f32 %v2944, %v2969
  %v2993 = vsub.f32 %v2945, %v2971
  %v2994 = vsub.f32 %v2946, %v2973
  %v2995 = vsub.f32 %v2947, %v2975
  %v2996 = vsub.f32 %v2948, %v2977
  %v2997 = vsub.f32 %v2949, %v2979
  %v2998 = vsub.f32 %v2950, %v2981
  %v2999 = vsub.f32 %v2951, %v2983
  %v3000 = vmul.f32 %v2984, 1.442695
  %v3001 = vpow.pop %v3000
  %v3002 = vmul.f32 %v2985, 1.442695
  %v3003 = vpow.pop %v3002
  %v3004 = vmul.f32 %v2986, 1.442695
  %v3005 = vpow.pop %v3004
  %v3006 = vmul.f32 %v2987, 1.442695
  %v3007 = vpow.pop %v3006
  %v3008 = vmul.f32 %v2988, 1.442695
  %v3009 = vpow.pop %v3008
  %v3010 = vmul.f32 %v2989, 1.442695
  %v3011 = vpow.pop %v3010
  %v3012 = vmul.f32 %v2990, 1.442695
  %v3013 = vpow.pop %v3012
  %v3014 = vmul.f32 %v2991, 1.442695
  %v3015 = vpow.pop %v3014
  %v3016 = vmul.f32 %v2992, 1.442695
  %v3017 = vpow.pop %v3016
  %v3018 = vmul.f32 %v2993, 1.442695
  %v3019 = vpow.pop %v3018
  %v3020 = vmul.f32 %v2994, 1.442695
  %v3021 = vpow.pop %v3020
  %v3022 = vmul.f32 %v2995, 1.442695
  %v3023 = vpow.pop %v3022
  %v3024 = vmul.f32 %v2996, 1.442695
  %v3025 = vpow.pop %v3024
  %v3026 = vmul.f32 %v2997, 1.442695
  %v3027 = vpow.pop %v3026
  %v3028 = vmul.f32 %v2998, 1.442695
  %v3029 = vpow.pop %v3028
  %v3030 = vmul.f32 %v2999, 1.442695
  %v3031 = vpow.pop %v3030
  %3032 = vadd.xlane.f32.xlu0 %v3001
  %v3033 = vpop.xlane.xlu0 %3032
  %3034 = vadd.xlane.f32.xlu0 %v3003
  %v3035 = vpop.xlane.xlu0 %3034
  %3036 = vadd.xlane.f32.xlu0 %v3005
  %v3037 = vpop.xlane.xlu0 %3036
  %3038 = vadd.xlane.f32.xlu0 %v3007
  %v3039 = vpop.xlane.xlu0 %3038
  %3040 = vadd.xlane.f32.xlu0 %v3009
  %v3041 = vpop.xlane.xlu0 %3040
  %3042 = vadd.xlane.f32.xlu0 %v3011
  %v3043 = vpop.xlane.xlu0 %3042
  %3044 = vadd.xlane.f32.xlu0 %v3013
  %v3045 = vpop.xlane.xlu0 %3044
  %3046 = vadd.xlane.f32.xlu0 %v3015
  %v3047 = vpop.xlane.xlu0 %3046
  %3048 = vadd.xlane.f32.xlu0 %v3017
  %v3049 = vpop.xlane.xlu0 %3048
  %3050 = vadd.xlane.f32.xlu0 %v3019
  %v3051 = vpop.xlane.xlu0 %3050
  %3052 = vadd.xlane.f32.xlu0 %v3021
  %v3053 = vpop.xlane.xlu0 %3052
  %3054 = vadd.xlane.f32.xlu0 %v3023
  %v3055 = vpop.xlane.xlu0 %3054
  %3056 = vadd.xlane.f32.xlu0 %v3025
  %v3057 = vpop.xlane.xlu0 %3056
  %3058 = vadd.xlane.f32.xlu0 %v3027
  %v3059 = vpop.xlane.xlu0 %3058
  %3060 = vadd.xlane.f32.xlu0 %v3029
  %v3061 = vpop.xlane.xlu0 %3060
  %3062 = vadd.xlane.f32.xlu0 %v3031
  %v3063 = vpop.xlane.xlu0 %3062
  %v3064 = vrcp.pop %v3033
  %v3065 = vrcp.pop %v3035
  %v3066 = vrcp.pop %v3037
  %v3067 = vrcp.pop %v3039
  %v3068 = vrcp.pop %v3041
  %v3069 = vrcp.pop %v3043
  %v3070 = vrcp.pop %v3045
  %v3071 = vrcp.pop %v3047
  %v3072 = vrcp.pop %v3049
  %v3073 = vrcp.pop %v3051
  %v3074 = vrcp.pop %v3053
  %v3075 = vrcp.pop %v3055
  %v3076 = vrcp.pop %v3057
  %v3077 = vrcp.pop %v3059
  %v3078 = vrcp.pop %v3061
  %v3079 = vrcp.pop %v3063
  %v3080 = vmul.f32 %v3001, %v3064
  %v3081 = vmul.f32 %v3003, %v3065
  %v3082 = vmul.f32 %v3005, %v3066
  %v3083 = vmul.f32 %v3007, %v3067
  %v3084 = vmul.f32 %v3009, %v3068
  %v3085 = vmul.f32 %v3011, %v3069
  %v3086 = vmul.f32 %v3013, %v3070
  %v3087 = vmul.f32 %v3015, %v3071
  %v3088 = vmul.f32 %v3017, %v3072
  %v3089 = vmul.f32 %v3019, %v3073
  %v3090 = vmul.f32 %v3021, %v3074
  %v3091 = vmul.f32 %v3023, %v3075
  %v3092 = vmul.f32 %v3025, %v3076
  %v3093 = vmul.f32 %v3027, %v3077
  %v3094 = vmul.f32 %v3029, %v3078
  %v3095 = vmul.f32 %v3031, %v3079
  %v3096 = vpack.c.bf16 %v3081, %v3080
  %v3097 = vpack.c.bf16 %v3083, %v3082
  %v3098 = vpack.c.bf16 %v3085, %v3084
  %v3099 = vpack.c.bf16 %v3087, %v3086
  %v3100 = vpack.c.bf16 %v3089, %v3088
  %v3101 = vpack.c.bf16 %v3091, %v3090
  %v3102 = vpack.c.bf16 %v3093, %v3092
  %v3103 = vpack.c.bf16 %v3095, %v3094
  %3104 = vrot.lane.b32.xlu0 %v1536, 32
  %v3105 = vpop.permute.xlu0 %3104
  %3106 = vrot.lane.b32.xlu0 %v1537, 32
  %v3107 = vpop.permute.xlu0 %3106
  %3108 = vrot.lane.b32.xlu0 %v1538, 32
  %v3109 = vpop.permute.xlu0 %3108
  %3110 = vrot.lane.b32.xlu0 %v1539, 32
  %v3111 = vpop.permute.xlu0 %3110
  %3112 = vrot.lane.b32.xlu0 %v1540, 32
  %v3113 = vpop.permute.xlu0 %3112
  %3114 = vrot.lane.b32.xlu0 %v1541, 32
  %v3115 = vpop.permute.xlu0 %3114
  %3116 = vrot.lane.b32.xlu0 %v1542, 32
  %v3117 = vpop.permute.xlu0 %3116
  %3118 = vrot.lane.b32.xlu0 %v1543, 32
  %v3119 = vpop.permute.xlu0 %3118
  %3128 = vmatprep.subr.bf16.mxu0 0
  %3129 = vmatpush1.bf16.msra.mxu0 %v3119
  %3130 = vmatprep.subr.bf16.mxu0 0
  %3131 = vmatpush1.bf16.msra.mxu0 %v3117
  %3132 = vmatprep.subr.bf16.mxu0 0
  %3133 = vmatpush1.bf16.msra.mxu0 %v3115
  %3134 = vmatprep.subr.bf16.mxu0 0
  %3135 = vmatpush1.bf16.msra.mxu0 %v3113
  %3136 = vmatprep.subr.bf16.mxu0 0
  %3137 = vmatpush1.bf16.msra.mxu0 %v3111
  %3138 = vmatprep.subr.bf16.mxu0 0
  %3139 = vmatpush1.bf16.msra.mxu0 %v3109
  %3140 = vmatprep.subr.bf16.mxu0 0
  %3141 = vmatpush1.bf16.msra.mxu0 %v3107
  %3142 = vmatprep.subr.bf16.mxu0 0
  %3143 = vmatpush1.bf16.msra.mxu0 %v3105
  %3144 = vmatprep.subr.bf16.mxu0 0
  %3145 = vmatpush2.bf16.msra.mxu0 0
  %3146 = vmatprep.subr.bf16.mxu0 0
  %3147 = vmatpush2.bf16.msra.mxu0 0
  %3148 = vmatprep.subr.bf16.mxu0 0
  %3149 = vmatpush2.bf16.msra.mxu0 0
  %3150 = vmatprep.subr.bf16.mxu0 0
  %3151 = vmatpush2.bf16.msra.mxu0 0
  %3152 = vmatprep.subr.bf16.mxu0 0
  %3153 = vmatpush2.bf16.msra.mxu0 0
  %3154 = vmatprep.subr.bf16.mxu0 0
  %3155 = vmatpush2.bf16.msra.mxu0 0
  %3156 = vmatprep.subr.bf16.mxu0 0
  %3157 = vmatpush2.bf16.msra.mxu0 0
  %3158 = vmatprep.subr.bf16.mxu0 0
  %3159 = vmatpush2.bf16.msra.mxu0 0
  %3160 = vmatprep.mubr.bf16.mxu0 0
  %3161 = vmatmul.mubr.bf16.gmra.mxu0 %v3096
  %v3162 = vpop.f32.mrf.mxu0
  %v3163 = vadd.f32 0.0, %v3162
  %v3164 = vpop.f32.mrf.mxu0
  %v3165 = vpop.f32.mrf.mxu0
  %v3166 = vadd.f32 0.0, %v3165
  %v3167 = vpop.f32.mrf.mxu0
  %3168 = vmatprep.mubr.bf16.mxu0 0
  %3169 = vmatmul.mubr.bf16.gmra.mxu0 %v3097
  %v3170 = vpop.f32.mrf.mxu0
  %v3171 = vadd.f32 0.0, %v3170
  %v3172 = vpop.f32.mrf.mxu0
  %v3173 = vpop.f32.mrf.mxu0
  %v3174 = vadd.f32 0.0, %v3173
  %v3175 = vpop.f32.mrf.mxu0
  %3176 = vmatprep.mubr.bf16.mxu0 0
  %3177 = vmatmul.mubr.bf16.gmra.mxu0 %v3098
  %v3178 = vpop.f32.mrf.mxu0
  %v3179 = vadd.f32 0.0, %v3178
  %v3180 = vpop.f32.mrf.mxu0
  %v3181 = vpop.f32.mrf.mxu0
  %v3182 = vadd.f32 0.0, %v3181
  %v3183 = vpop.f32.mrf.mxu0
  %3184 = vmatprep.mubr.bf16.mxu0 0
  %3185 = vmatmul.mubr.bf16.gmra.mxu0 %v3099
  %v3186 = vpop.f32.mrf.mxu0
  %v3187 = vadd.f32 0.0, %v3186
  %v3188 = vpop.f32.mrf.mxu0
  %v3189 = vpop.f32.mrf.mxu0
  %v3190 = vadd.f32 0.0, %v3189
  %v3191 = vpop.f32.mrf.mxu0
  %3192 = vmatprep.mubr.bf16.mxu0 0
  %3193 = vmatmul.mubr.bf16.gmra.mxu0 %v3100
  %v3194 = vpop.f32.mrf.mxu0
  %v3195 = vadd.f32 0.0, %v3194
  %v3196 = vpop.f32.mrf.mxu0
  %v3197 = vpop.f32.mrf.mxu0
  %v3198 = vadd.f32 0.0, %v3197
  %v3199 = vpop.f32.mrf.mxu0
  %3200 = vmatprep.mubr.bf16.mxu0 0
  %3201 = vmatmul.mubr.bf16.gmra.mxu0 %v3101
  %v3202 = vpop.f32.mrf.mxu0
  %v3203 = vadd.f32 0.0, %v3202
  %v3204 = vpop.f32.mrf.mxu0
  %v3205 = vpop.f32.mrf.mxu0
  %v3206 = vadd.f32 0.0, %v3205
  %v3207 = vpop.f32.mrf.mxu0
  %3208 = vmatprep.mubr.bf16.mxu0 0
  %3209 = vmatmul.mubr.bf16.gmra.mxu0 %v3102
  %v3210 = vpop.f32.mrf.mxu0
  %v3211 = vadd.f32 0.0, %v3210
  %v3212 = vpop.f32.mrf.mxu0
  %v3213 = vpop.f32.mrf.mxu0
  %v3214 = vadd.f32 0.0, %v3213
  %v3215 = vpop.f32.mrf.mxu0
  %3216 = vmatprep.mubr.bf16.mxu0 0
  %3217 = vmatmul.mubr.bf16.gmra.mxu0 %v3103
  %v3218 = vpop.f32.mrf.mxu0
  %v3219 = vadd.f32 0.0, %v3218
  %v3220 = vpop.f32.mrf.mxu0
  %v3221 = vpop.f32.mrf.mxu0
  %v3222 = vadd.f32 0.0, %v3221
  %v3223 = vpop.f32.mrf.mxu0
  %3224 = vdwg.mxu0
  %v3225 = vpack.c.bf16 %v3166, %v3163
  %v3226 = vpack.c.bf16 %v3174, %v3171
  %v3227 = vpack.c.bf16 %v3182, %v3179
  %v3228 = vpack.c.bf16 %v3190, %v3187
  %v3229 = vpack.c.bf16 %v3198, %v3195
  %v3230 = vpack.c.bf16 %v3206, %v3203
  %v3231 = vpack.c.bf16 %v3214, %v3211
  %v3232 = vpack.c.bf16 %v3222, %v3219
  %v3237 = vunpack.c.l.b16 %v1552
  %v3238 = vunpack.c.l.b16 %v1553
  %v3239 = vunpack.c.l.b16 %v1554
  %v3240 = vunpack.c.l.b16 %v1555
  %v3241 = vpack.c.b16 %v3238, %v3237
  %v3242 = vpack.c.b16 %v3240, %v3239
  %v3246 = vsel %vm1568, %v3225, 0
  %v3249 = vsel %vm1568, %v3226, 0
  %v3252 = vsel %vm1568, %v3227, 0
  %v3255 = vsel %vm1568, %v3228, 0
  %v3258 = vsel %vm1568, %v3229, 0
  %v3261 = vsel %vm1568, %v3230, 0
  %v3264 = vsel %vm1568, %v3231, 0
  %v3267 = vsel %vm1568, %v3232, 0
  %3269 = vmatprep.subr.bf16.mxu0 0
  %3270 = vmatpush1.bf16.msra.mxu0 0
  %3271 = vmatprep.subr.bf16.mxu0 0
  %3272 = vmatpush1.bf16.msra.mxu0 0
  %3273 = vmatprep.subr.bf16.mxu0 0
  %3274 = vmatpush1.bf16.msra.mxu0 0
  %3275 = vmatprep.subr.bf16.mxu0 0
  %3276 = vmatpush1.bf16.msra.mxu0 0
  %3277 = vmatprep.subr.bf16.mxu0 0
  %3278 = vmatpush1.bf16.msra.mxu0 0
  %3279 = vmatprep.subr.bf16.mxu0 0
  %3280 = vmatpush1.bf16.msra.mxu0 0
  %3281 = vmatprep.subr.bf16.mxu0 0
  %3282 = vmatpush1.bf16.msra.mxu0 %v3242
  %3283 = vmatprep.subr.bf16.mxu0 0
  %3284 = vmatpush1.bf16.msra.mxu0 %v3241
  %3285 = vmatprep.subr.bf16.mxu0 0
  %3286 = vmatpush2.bf16.msra.mxu0 0
  %3287 = vmatprep.subr.bf16.mxu0 0
  %3288 = vmatpush2.bf16.msra.mxu0 0
  %3289 = vmatprep.subr.bf16.mxu0 0
  %3290 = vmatpush2.bf16.msra.mxu0 0
  %3291 = vmatprep.subr.bf16.mxu0 0
  %3292 = vmatpush2.bf16.msra.mxu0 0
  %3293 = vmatprep.subr.bf16.mxu0 0
  %3294 = vmatpush2.bf16.msra.mxu0 0
  %3295 = vmatprep.subr.bf16.mxu0 0
  %3296 = vmatpush2.bf16.msra.mxu0 0
  %3297 = vmatprep.subr.bf16.mxu0 0
  %3298 = vmatpush2.bf16.msra.mxu0 0
  %3299 = vmatprep.subr.bf16.mxu0 0
  %3300 = vmatpush2.bf16.msra.mxu0 0
  %3301 = vmatprep.mubr.bf16.mxu0 0
  %3302 = vmatmul.mubr.bf16.gmra.mxu0 %v3246
  %v3303 = vpop.f32.mrf.mxu0
  %v3304 = vadd.f32 0.0, %v3303
  %v3305 = vpop.f32.mrf.mxu0
  %v3306 = vpop.f32.mrf.mxu0
  %v3307 = vadd.f32 0.0, %v3306
  %v3308 = vpop.f32.mrf.mxu0
  %3309 = vmatprep.mubr.bf16.mxu0 0
  %3310 = vmatmul.mubr.bf16.gmra.mxu0 %v3249
  %v3311 = vpop.f32.mrf.mxu0
  %v3312 = vadd.f32 0.0, %v3311
  %v3313 = vpop.f32.mrf.mxu0
  %v3314 = vpop.f32.mrf.mxu0
  %v3315 = vadd.f32 0.0, %v3314
  %v3316 = vpop.f32.mrf.mxu0
  %3317 = vmatprep.mubr.bf16.mxu0 0
  %3318 = vmatmul.mubr.bf16.gmra.mxu0 %v3252
  %v3319 = vpop.f32.mrf.mxu0
  %v3320 = vadd.f32 0.0, %v3319
  %v3321 = vpop.f32.mrf.mxu0
  %v3322 = vpop.f32.mrf.mxu0
  %v3323 = vadd.f32 0.0, %v3322
  %v3324 = vpop.f32.mrf.mxu0
  %3325 = vmatprep.mubr.bf16.mxu0 0
  %3326 = vmatmul.mubr.bf16.gmra.mxu0 %v3255
  %v3327 = vpop.f32.mrf.mxu0
  %v3328 = vadd.f32 0.0, %v3327
  %v3329 = vpop.f32.mrf.mxu0
  %v3330 = vpop.f32.mrf.mxu0
  %v3331 = vadd.f32 0.0, %v3330
  %v3332 = vpop.f32.mrf.mxu0
  %3333 = vmatprep.mubr.bf16.mxu0 0
  %3334 = vmatmul.mubr.bf16.gmra.mxu0 %v3258
  %v3335 = vpop.f32.mrf.mxu0
  %v3336 = vadd.f32 0.0, %v3335
  %v3337 = vpop.f32.mrf.mxu0
  %v3338 = vpop.f32.mrf.mxu0
  %v3339 = vadd.f32 0.0, %v3338
  %v3340 = vpop.f32.mrf.mxu0
  %3341 = vmatprep.mubr.bf16.mxu0 0
  %3342 = vmatmul.mubr.bf16.gmra.mxu0 %v3261
  %v3343 = vpop.f32.mrf.mxu0
  %v3344 = vadd.f32 0.0, %v3343
  %v3345 = vpop.f32.mrf.mxu0
  %v3346 = vpop.f32.mrf.mxu0
  %v3347 = vadd.f32 0.0, %v3346
  %v3348 = vpop.f32.mrf.mxu0
  %3349 = vmatprep.mubr.bf16.mxu0 0
  %3350 = vmatmul.mubr.bf16.gmra.mxu0 %v3264
  %v3351 = vpop.f32.mrf.mxu0
  %v3352 = vadd.f32 0.0, %v3351
  %v3353 = vpop.f32.mrf.mxu0
  %v3354 = vpop.f32.mrf.mxu0
  %v3355 = vadd.f32 0.0, %v3354
  %v3356 = vpop.f32.mrf.mxu0
  %3357 = vmatprep.mubr.bf16.mxu0 0
  %3358 = vmatmul.mubr.bf16.gmra.mxu0 %v3267
  %v3359 = vpop.f32.mrf.mxu0
  %v3360 = vadd.f32 0.0, %v3359
  %v3361 = vpop.f32.mrf.mxu0
  %v3362 = vpop.f32.mrf.mxu0
  %v3363 = vadd.f32 0.0, %v3362
  %v3364 = vpop.f32.mrf.mxu0
  %3365 = vdwg.mxu0
  %v3366 = vadd.f32 %v2673, %v3304
  %v3367 = vadd.f32 %v2676, %v3307
  %v3368 = vadd.f32 %v2681, %v3312
  %v3369 = vadd.f32 %v2684, %v3315
  %v3370 = vadd.f32 %v2689, %v3320
  %v3371 = vadd.f32 %v2692, %v3323
  %v3372 = vadd.f32 %v2697, %v3328
  %v3373 = vadd.f32 %v2700, %v3331
  %v3374 = vadd.f32 %v2705, %v3336
  %v3375 = vadd.f32 %v2708, %v3339
  %v3376 = vadd.f32 %v2713, %v3344
  %v3377 = vadd.f32 %v2716, %v3347
  %v3378 = vadd.f32 %v2721, %v3352
  %v3379 = vadd.f32 %v2724, %v3355
  %v3380 = vadd.f32 %v2729, %v3360
  %v3381 = vadd.f32 %v2732, %v3363
  %3382 = vrot.lane.b32.xlu0 %v1560, 32
  %v3383 = vpop.permute.xlu0 %3382
  %3384 = vrot.lane.b32.xlu0 %v1561, 32
  %v3385 = vpop.permute.xlu0 %3384
  %3386 = vrot.lane.b32.xlu0 %v1562, 32
  %v3387 = vpop.permute.xlu0 %3386
  %3388 = vrot.lane.b32.xlu0 %v1563, 32
  %v3389 = vpop.permute.xlu0 %3388
  %3390 = vrot.lane.b32.xlu0 %v1564, 32
  %v3391 = vpop.permute.xlu0 %3390
  %3392 = vrot.lane.b32.xlu0 %v1565, 32
  %v3393 = vpop.permute.xlu0 %3392
  %3394 = vrot.lane.b32.xlu0 %v1566, 32
  %v3395 = vpop.permute.xlu0 %3394
  %3396 = vrot.lane.b32.xlu0 %v1567, 32
  %v3397 = vpop.permute.xlu0 %3396
  %v3399 = vsel %vm1568, %v3383, 0
  %v3402 = vsel %vm1568, %v3385, 0
  %v3405 = vsel %vm1568, %v3387, 0
  %v3408 = vsel %vm1568, %v3389, 0
  %v3411 = vsel %vm1568, %v3391, 0
  %v3414 = vsel %vm1568, %v3393, 0
  %v3417 = vsel %vm1568, %v3395, 0
  %v3420 = vsel %vm1568, %v3397, 0
  %3422 = vmatprep.subr.bf16.mxu0 0
  %3423 = vmatpush1.bf16.xpose.msra.mxu0 %v2821
  %3424 = vmatprep.subr.bf16.mxu0 0
  %3425 = vmatpush1.bf16.xpose.msra.mxu0 %v2818
  %3426 = vmatprep.subr.bf16.mxu0 0
  %3427 = vmatpush1.bf16.xpose.msra.mxu0 %v2815
  %3428 = vmatprep.subr.bf16.mxu0 0
  %3429 = vmatpush1.bf16.xpose.msra.mxu0 %v2812
  %3430 = vmatprep.subr.bf16.mxu0 0
  %3431 = vmatpush1.bf16.xpose.msra.mxu0 %v2809
  %3432 = vmatprep.subr.bf16.mxu0 0
  %3433 = vmatpush1.bf16.xpose.msra.mxu0 %v2806
  %3434 = vmatprep.subr.bf16.mxu0 0
  %3435 = vmatpush1.bf16.xpose.msra.mxu0 %v2803
  %3436 = vmatprep.subr.bf16.mxu0 0
  %3437 = vmatpush1.bf16.xpose.msra.mxu0 %v2800
  %3438 = vmatprep.subr.bf16.mxu0 0
  %3439 = vmatpush2.bf16.xpose.msra.mxu0 0
  %3440 = vmatprep.subr.bf16.mxu0 0
  %3441 = vmatpush2.bf16.xpose.msra.mxu0 0
  %3442 = vmatprep.subr.bf16.mxu0 0
  %3443 = vmatpush2.bf16.xpose.msra.mxu0 0
  %3444 = vmatprep.subr.bf16.mxu0 0
  %3445 = vmatpush2.bf16.xpose.msra.mxu0 0
  %3446 = vmatprep.subr.bf16.mxu0 0
  %3447 = vmatpush2.bf16.xpose.msra.mxu0 0
  %3448 = vmatprep.subr.bf16.mxu0 0
  %3449 = vmatpush2.bf16.xpose.msra.mxu0 0
  %3450 = vmatprep.subr.bf16.mxu0 0
  %3451 = vmatpush2.bf16.xpose.msra.mxu0 0
  %3452 = vmatprep.subr.bf16.mxu0 0
  %3453 = vmatpush2.bf16.xpose.msra.mxu0 0
  %3454 = vmatprep.mubr.bf16.mxu0 0
  %3455 = vmatmul.mubr.bf16.gmra.mxu0 %v3399
  %v3456 = vpop.f32.mrf.mxu0
  %v3457 = vadd.f32 0.0, %v3456
  %v3458 = vpop.f32.mrf.mxu0
  %v3459 = vpop.f32.mrf.mxu0
  %v3460 = vadd.f32 0.0, %v3459
  %v3461 = vpop.f32.mrf.mxu0
  %3462 = vmatprep.mubr.bf16.mxu0 0
  %3463 = vmatmul.mubr.bf16.gmra.mxu0 %v3402
  %v3464 = vpop.f32.mrf.mxu0
  %v3465 = vadd.f32 0.0, %v3464
  %v3466 = vpop.f32.mrf.mxu0
  %v3467 = vpop.f32.mrf.mxu0
  %v3468 = vadd.f32 0.0, %v3467
  %v3469 = vpop.f32.mrf.mxu0
  %3470 = vmatprep.mubr.bf16.mxu0 0
  %3471 = vmatmul.mubr.bf16.gmra.mxu0 %v3405
  %v3472 = vpop.f32.mrf.mxu0
  %v3473 = vadd.f32 0.0, %v3472
  %v3474 = vpop.f32.mrf.mxu0
  %v3475 = vpop.f32.mrf.mxu0
  %v3476 = vadd.f32 0.0, %v3475
  %v3477 = vpop.f32.mrf.mxu0
  %3478 = vmatprep.mubr.bf16.mxu0 0
  %3479 = vmatmul.mubr.bf16.gmra.mxu0 %v3408
  %v3480 = vpop.f32.mrf.mxu0
  %v3481 = vadd.f32 0.0, %v3480
  %v3482 = vpop.f32.mrf.mxu0
  %v3483 = vpop.f32.mrf.mxu0
  %v3484 = vadd.f32 0.0, %v3483
  %v3485 = vpop.f32.mrf.mxu0
  %3486 = vmatprep.mubr.bf16.mxu0 0
  %3487 = vmatmul.mubr.bf16.gmra.mxu0 %v3411
  %v3488 = vpop.f32.mrf.mxu0
  %v3489 = vadd.f32 0.0, %v3488
  %v3490 = vpop.f32.mrf.mxu0
  %v3491 = vpop.f32.mrf.mxu0
  %v3492 = vadd.f32 0.0, %v3491
  %v3493 = vpop.f32.mrf.mxu0
  %3494 = vmatprep.mubr.bf16.mxu0 0
  %3495 = vmatmul.mubr.bf16.gmra.mxu0 %v3414
  %v3496 = vpop.f32.mrf.mxu0
  %v3497 = vadd.f32 0.0, %v3496
  %v3498 = vpop.f32.mrf.mxu0
  %v3499 = vpop.f32.mrf.mxu0
  %v3500 = vadd.f32 0.0, %v3499
  %v3501 = vpop.f32.mrf.mxu0
  %3502 = vmatprep.mubr.bf16.mxu0 0
  %3503 = vmatmul.mubr.bf16.gmra.mxu0 %v3417
  %v3504 = vpop.f32.mrf.mxu0
  %v3505 = vadd.f32 0.0, %v3504
  %v3506 = vpop.f32.mrf.mxu0
  %v3507 = vpop.f32.mrf.mxu0
  %v3508 = vadd.f32 0.0, %v3507
  %v3509 = vpop.f32.mrf.mxu0
  %3510 = vmatprep.mubr.bf16.mxu0 0
  %3511 = vmatmul.mubr.bf16.gmra.mxu0 %v3420
  %v3512 = vpop.f32.mrf.mxu0
  %v3513 = vadd.f32 0.0, %v3512
  %v3514 = vpop.f32.mrf.mxu0
  %v3515 = vpop.f32.mrf.mxu0
  %v3516 = vadd.f32 0.0, %v3515
  %v3517 = vpop.f32.mrf.mxu0
  %3518 = vdwg.mxu0
  %v3519 = vmul.f32 %v3457, 0.17677669
  %v3520 = vmul.f32 %v3460, 0.17677669
  %v3521 = vmul.f32 %v3465, 0.17677669
  %v3522 = vmul.f32 %v3468, 0.17677669
  %v3523 = vmul.f32 %v3473, 0.17677669
  %v3524 = vmul.f32 %v3476, 0.17677669
  %v3525 = vmul.f32 %v3481, 0.17677669
  %v3526 = vmul.f32 %v3484, 0.17677669
  %v3527 = vmul.f32 %v3489, 0.17677669
  %v3528 = vmul.f32 %v3492, 0.17677669
  %v3529 = vmul.f32 %v3497, 0.17677669
  %v3530 = vmul.f32 %v3500, 0.17677669
  %v3531 = vmul.f32 %v3505, 0.17677669
  %v3532 = vmul.f32 %v3508, 0.17677669
  %v3533 = vmul.f32 %v3513, 0.17677669
  %v3534 = vmul.f32 %v3516, 0.17677669
  %v3535 = vadd.f32 %v3519, %v1512
  %v3536 = vadd.f32 %v3520, %v1513
  %v3537 = vadd.f32 %v3521, %v1514
  %v3538 = vadd.f32 %v3522, %v1515
  %v3539 = vadd.f32 %v3523, %v1516
  %v3540 = vadd.f32 %v3524, %v1517
  %v3541 = vadd.f32 %v3525, %v1518
  %v3542 = vadd.f32 %v3526, %v1519
  %v3543 = vadd.f32 %v3527, %v1520
  %v3544 = vadd.f32 %v3528, %v1521
  %v3545 = vadd.f32 %v3529, %v1522
  %v3546 = vadd.f32 %v3530, %v1523
  %v3547 = vadd.f32 %v3531, %v1524
  %v3548 = vadd.f32 %v3532, %v1525
  %v3549 = vadd.f32 %v3533, %v1526
  %v3550 = vadd.f32 %v3534, %v1527
  %3551 = vmax.xlane.f32.xlu0 %v3535
  %v3552 = vpop.xlane.xlu0 %3551
  %3553 = vmax.xlane.f32.xlu0 %v3536
  %v3554 = vpop.xlane.xlu0 %3553
  %3555 = vmax.xlane.f32.xlu0 %v3537
  %v3556 = vpop.xlane.xlu0 %3555
  %3557 = vmax.xlane.f32.xlu0 %v3538
  %v3558 = vpop.xlane.xlu0 %3557
  %3559 = vmax.xlane.f32.xlu0 %v3539
  %v3560 = vpop.xlane.xlu0 %3559
  %3561 = vmax.xlane.f32.xlu0 %v3540
  %v3562 = vpop.xlane.xlu0 %3561
  %3563 = vmax.xlane.f32.xlu0 %v3541
  %v3564 = vpop.xlane.xlu0 %3563
  %3565 = vmax.xlane.f32.xlu0 %v3542
  %v3566 = vpop.xlane.xlu0 %3565
  %3567 = vmax.xlane.f32.xlu0 %v3543
  %v3568 = vpop.xlane.xlu0 %3567
  %3569 = vmax.xlane.f32.xlu0 %v3544
  %v3570 = vpop.xlane.xlu0 %3569
  %3571 = vmax.xlane.f32.xlu0 %v3545
  %v3572 = vpop.xlane.xlu0 %3571
  %3573 = vmax.xlane.f32.xlu0 %v3546
  %v3574 = vpop.xlane.xlu0 %3573
  %3575 = vmax.xlane.f32.xlu0 %v3547
  %v3576 = vpop.xlane.xlu0 %3575
  %3577 = vmax.xlane.f32.xlu0 %v3548
  %v3578 = vpop.xlane.xlu0 %3577
  %3579 = vmax.xlane.f32.xlu0 %v3549
  %v3580 = vpop.xlane.xlu0 %3579
  %3581 = vmax.xlane.f32.xlu0 %v3550
  %v3582 = vpop.xlane.xlu0 %3581
  %v3583 = vsub.f32 %v3535, %v3552
  %v3584 = vsub.f32 %v3536, %v3554
  %v3585 = vsub.f32 %v3537, %v3556
  %v3586 = vsub.f32 %v3538, %v3558
  %v3587 = vsub.f32 %v3539, %v3560
  %v3588 = vsub.f32 %v3540, %v3562
  %v3589 = vsub.f32 %v3541, %v3564
  %v3590 = vsub.f32 %v3542, %v3566
  %v3591 = vsub.f32 %v3543, %v3568
  %v3592 = vsub.f32 %v3544, %v3570
  %v3593 = vsub.f32 %v3545, %v3572
  %v3594 = vsub.f32 %v3546, %v3574
  %v3595 = vsub.f32 %v3547, %v3576
  %v3596 = vsub.f32 %v3548, %v3578
  %v3597 = vsub.f32 %v3549, %v3580
  %v3598 = vsub.f32 %v3550, %v3582
  %v3599 = vmul.f32 %v3583, 1.442695
  %v3600 = vpow.pop %v3599
  %v3601 = vmul.f32 %v3584, 1.442695
  %v3602 = vpow.pop %v3601
  %v3603 = vmul.f32 %v3585, 1.442695
  %v3604 = vpow.pop %v3603
  %v3605 = vmul.f32 %v3586, 1.442695
  %v3606 = vpow.pop %v3605
  %v3607 = vmul.f32 %v3587, 1.442695
  %v3608 = vpow.pop %v3607
  %v3609 = vmul.f32 %v3588, 1.442695
  %v3610 = vpow.pop %v3609
  %v3611 = vmul.f32 %v3589, 1.442695
  %v3612 = vpow.pop %v3611
  %v3613 = vmul.f32 %v3590, 1.442695
  %v3614 = vpow.pop %v3613
  %v3615 = vmul.f32 %v3591, 1.442695
  %v3616 = vpow.pop %v3615
  %v3617 = vmul.f32 %v3592, 1.442695
  %v3618 = vpow.pop %v3617
  %v3619 = vmul.f32 %v3593, 1.442695
  %v3620 = vpow.pop %v3619
  %v3621 = vmul.f32 %v3594, 1.442695
  %v3622 = vpow.pop %v3621
  %v3623 = vmul.f32 %v3595, 1.442695
  %v3624 = vpow.pop %v3623
  %v3625 = vmul.f32 %v3596, 1.442695
  %v3626 = vpow.pop %v3625
  %v3627 = vmul.f32 %v3597, 1.442695
  %v3628 = vpow.pop %v3627
  %v3629 = vmul.f32 %v3598, 1.442695
  %v3630 = vpow.pop %v3629
  %3631 = vadd.xlane.f32.xlu0 %v3600
  %v3632 = vpop.xlane.xlu0 %3631
  %3633 = vadd.xlane.f32.xlu0 %v3602
  %v3634 = vpop.xlane.xlu0 %3633
  %3635 = vadd.xlane.f32.xlu0 %v3604
  %v3636 = vpop.xlane.xlu0 %3635
  %3637 = vadd.xlane.f32.xlu0 %v3606
  %v3638 = vpop.xlane.xlu0 %3637
  %3639 = vadd.xlane.f32.xlu0 %v3608
  %v3640 = vpop.xlane.xlu0 %3639
  %3641 = vadd.xlane.f32.xlu0 %v3610
  %v3642 = vpop.xlane.xlu0 %3641
  %3643 = vadd.xlane.f32.xlu0 %v3612
  %v3644 = vpop.xlane.xlu0 %3643
  %3645 = vadd.xlane.f32.xlu0 %v3614
  %v3646 = vpop.xlane.xlu0 %3645
  %3647 = vadd.xlane.f32.xlu0 %v3616
  %v3648 = vpop.xlane.xlu0 %3647
  %3649 = vadd.xlane.f32.xlu0 %v3618
  %v3650 = vpop.xlane.xlu0 %3649
  %3651 = vadd.xlane.f32.xlu0 %v3620
  %v3652 = vpop.xlane.xlu0 %3651
  %3653 = vadd.xlane.f32.xlu0 %v3622
  %v3654 = vpop.xlane.xlu0 %3653
  %3655 = vadd.xlane.f32.xlu0 %v3624
  %v3656 = vpop.xlane.xlu0 %3655
  %3657 = vadd.xlane.f32.xlu0 %v3626
  %v3658 = vpop.xlane.xlu0 %3657
  %3659 = vadd.xlane.f32.xlu0 %v3628
  %v3660 = vpop.xlane.xlu0 %3659
  %3661 = vadd.xlane.f32.xlu0 %v3630
  %v3662 = vpop.xlane.xlu0 %3661
  %v3663 = vrcp.pop %v3632
  %v3664 = vrcp.pop %v3634
  %v3665 = vrcp.pop %v3636
  %v3666 = vrcp.pop %v3638
  %v3667 = vrcp.pop %v3640
  %v3668 = vrcp.pop %v3642
  %v3669 = vrcp.pop %v3644
  %v3670 = vrcp.pop %v3646
  %v3671 = vrcp.pop %v3648
  %v3672 = vrcp.pop %v3650
  %v3673 = vrcp.pop %v3652
  %v3674 = vrcp.pop %v3654
  %v3675 = vrcp.pop %v3656
  %v3676 = vrcp.pop %v3658
  %v3677 = vrcp.pop %v3660
  %v3678 = vrcp.pop %v3662
  %v3679 = vmul.f32 %v3600, %v3663
  %v3680 = vmul.f32 %v3602, %v3664
  %v3681 = vmul.f32 %v3604, %v3665
  %v3682 = vmul.f32 %v3606, %v3666
  %v3683 = vmul.f32 %v3608, %v3667
  %v3684 = vmul.f32 %v3610, %v3668
  %v3685 = vmul.f32 %v3612, %v3669
  %v3686 = vmul.f32 %v3614, %v3670
  %v3687 = vmul.f32 %v3616, %v3671
  %v3688 = vmul.f32 %v3618, %v3672
  %v3689 = vmul.f32 %v3620, %v3673
  %v3690 = vmul.f32 %v3622, %v3674
  %v3691 = vmul.f32 %v3624, %v3675
  %v3692 = vmul.f32 %v3626, %v3676
  %v3693 = vmul.f32 %v3628, %v3677
  %v3694 = vmul.f32 %v3630, %v3678
  %v3695 = vpack.c.bf16 %v3680, %v3679
  %v3696 = vpack.c.bf16 %v3682, %v3681
  %v3697 = vpack.c.bf16 %v3684, %v3683
  %v3698 = vpack.c.bf16 %v3686, %v3685
  %v3699 = vpack.c.bf16 %v3688, %v3687
  %v3700 = vpack.c.bf16 %v3690, %v3689
  %v3701 = vpack.c.bf16 %v3692, %v3691
  %v3702 = vpack.c.bf16 %v3694, %v3693
  %3703 = vmatprep.subr.bf16.mxu0 0
  %3704 = vmatpush1.bf16.msra.mxu0 %v3119
  %3705 = vmatprep.subr.bf16.mxu0 0
  %3706 = vmatpush1.bf16.msra.mxu0 %v3117
  %3707 = vmatprep.subr.bf16.mxu0 0
  %3708 = vmatpush1.bf16.msra.mxu0 %v3115
  %3709 = vmatprep.subr.bf16.mxu0 0
  %3710 = vmatpush1.bf16.msra.mxu0 %v3113
  %3711 = vmatprep.subr.bf16.mxu0 0
  %3712 = vmatpush1.bf16.msra.mxu0 %v3111
  %3713 = vmatprep.subr.bf16.mxu0 0
  %3714 = vmatpush1.bf16.msra.mxu0 %v3109
  %3715 = vmatprep.subr.bf16.mxu0 0
  %3716 = vmatpush1.bf16.msra.mxu0 %v3107
  %3717 = vmatprep.subr.bf16.mxu0 0
  %3718 = vmatpush1.bf16.msra.mxu0 %v3105
  %3719 = vmatprep.subr.bf16.mxu0 0
  %3720 = vmatpush2.bf16.msra.mxu0 0
  %3721 = vmatprep.subr.bf16.mxu0 0
  %3722 = vmatpush2.bf16.msra.mxu0 0
  %3723 = vmatprep.subr.bf16.mxu0 0
  %3724 = vmatpush2.bf16.msra.mxu0 0
  %3725 = vmatprep.subr.bf16.mxu0 0
  %3726 = vmatpush2.bf16.msra.mxu0 0
  %3727 = vmatprep.subr.bf16.mxu0 0
  %3728 = vmatpush2.bf16.msra.mxu0 0
  %3729 = vmatprep.subr.bf16.mxu0 0
  %3730 = vmatpush2.bf16.msra.mxu0 0
  %3731 = vmatprep.subr.bf16.mxu0 0
  %3732 = vmatpush2.bf16.msra.mxu0 0
  %3733 = vmatprep.subr.bf16.mxu0 0
  %3734 = vmatpush2.bf16.msra.mxu0 0
  %3735 = vmatprep.mubr.bf16.mxu0 0
  %3736 = vmatmul.mubr.bf16.gmra.mxu0 %v3695
  %v3737 = vpop.f32.mrf.mxu0
  %v3738 = vadd.f32 0.0, %v3737
  %v3739 = vpop.f32.mrf.mxu0
  %v3740 = vpop.f32.mrf.mxu0
  %v3741 = vadd.f32 0.0, %v3740
  %v3742 = vpop.f32.mrf.mxu0
  %3743 = vmatprep.mubr.bf16.mxu0 0
  %3744 = vmatmul.mubr.bf16.gmra.mxu0 %v3696
  %v3745 = vpop.f32.mrf.mxu0
  %v3746 = vadd.f32 0.0, %v3745
  %v3747 = vpop.f32.mrf.mxu0
  %v3748 = vpop.f32.mrf.mxu0
  %v3749 = vadd.f32 0.0, %v3748
  %v3750 = vpop.f32.mrf.mxu0
  %3751 = vmatprep.mubr.bf16.mxu0 0
  %3752 = vmatmul.mubr.bf16.gmra.mxu0 %v3697
  %v3753 = vpop.f32.mrf.mxu0
  %v3754 = vadd.f32 0.0, %v3753
  %v3755 = vpop.f32.mrf.mxu0
  %v3756 = vpop.f32.mrf.mxu0
  %v3757 = vadd.f32 0.0, %v3756
  %v3758 = vpop.f32.mrf.mxu0
  %3759 = vmatprep.mubr.bf16.mxu0 0
  %3760 = vmatmul.mubr.bf16.gmra.mxu0 %v3698
  %v3761 = vpop.f32.mrf.mxu0
  %v3762 = vadd.f32 0.0, %v3761
  %v3763 = vpop.f32.mrf.mxu0
  %v3764 = vpop.f32.mrf.mxu0
  %v3765 = vadd.f32 0.0, %v3764
  %v3766 = vpop.f32.mrf.mxu0
  %3767 = vmatprep.mubr.bf16.mxu0 0
  %3768 = vmatmul.mubr.bf16.gmra.mxu0 %v3699
  %v3769 = vpop.f32.mrf.mxu0
  %v3770 = vadd.f32 0.0, %v3769
  %v3771 = vpop.f32.mrf.mxu0
  %v3772 = vpop.f32.mrf.mxu0
  %v3773 = vadd.f32 0.0, %v3772
  %v3774 = vpop.f32.mrf.mxu0
  %3775 = vmatprep.mubr.bf16.mxu0 0
  %3776 = vmatmul.mubr.bf16.gmra.mxu0 %v3700
  %v3777 = vpop.f32.mrf.mxu0
  %v3778 = vadd.f32 0.0, %v3777
  %v3779 = vpop.f32.mrf.mxu0
  %v3780 = vpop.f32.mrf.mxu0
  %v3781 = vadd.f32 0.0, %v3780
  %v3782 = vpop.f32.mrf.mxu0
  %3783 = vmatprep.mubr.bf16.mxu0 0
  %3784 = vmatmul.mubr.bf16.gmra.mxu0 %v3701
  %v3785 = vpop.f32.mrf.mxu0
  %v3786 = vadd.f32 0.0, %v3785
  %v3787 = vpop.f32.mrf.mxu0
  %v3788 = vpop.f32.mrf.mxu0
  %v3789 = vadd.f32 0.0, %v3788
  %v3790 = vpop.f32.mrf.mxu0
  %3791 = vmatprep.mubr.bf16.mxu0 0
  %3792 = vmatmul.mubr.bf16.gmra.mxu0 %v3702
  %v3793 = vpop.f32.mrf.mxu0
  %v3794 = vadd.f32 0.0, %v3793
  %v3795 = vpop.f32.mrf.mxu0
  %v3796 = vpop.f32.mrf.mxu0
  %v3797 = vadd.f32 0.0, %v3796
  %v3798 = vpop.f32.mrf.mxu0
  %3799 = vdwg.mxu0
  %v3800 = vpack.c.bf16 %v3741, %v3738
  %v3801 = vpack.c.bf16 %v3749, %v3746
  %v3802 = vpack.c.bf16 %v3757, %v3754
  %v3803 = vpack.c.bf16 %v3765, %v3762
  %v3804 = vpack.c.bf16 %v3773, %v3770
  %v3805 = vpack.c.bf16 %v3781, %v3778
  %v3806 = vpack.c.bf16 %v3789, %v3786
  %v3807 = vpack.c.bf16 %v3797, %v3794
  %v3812 = vunpack.c.l.b16 %v1556
  %v3813 = vunpack.c.l.b16 %v1557
  %v3814 = vunpack.c.l.b16 %v1558
  %v3815 = vunpack.c.l.b16 %v1559
  %v3816 = vpack.c.b16 %v3813, %v3812
  %v3817 = vpack.c.b16 %v3815, %v3814
  %v3821 = vsel %vm1568, %v3800, 0
  %v3824 = vsel %vm1568, %v3801, 0
  %v3827 = vsel %vm1568, %v3802, 0
  %v3830 = vsel %vm1568, %v3803, 0
  %v3833 = vsel %vm1568, %v3804, 0
  %v3836 = vsel %vm1568, %v3805, 0
  %v3839 = vsel %vm1568, %v3806, 0
  %v3842 = vsel %vm1568, %v3807, 0
  %3844 = vmatprep.subr.bf16.mxu0 0
  %3845 = vmatpush1.bf16.msra.mxu0 0
  %3846 = vmatprep.subr.bf16.mxu0 0
  %3847 = vmatpush1.bf16.msra.mxu0 0
  %3848 = vmatprep.subr.bf16.mxu0 0
  %3849 = vmatpush1.bf16.msra.mxu0 0
  %3850 = vmatprep.subr.bf16.mxu0 0
  %3851 = vmatpush1.bf16.msra.mxu0 0
  %3852 = vmatprep.subr.bf16.mxu0 0
  %3853 = vmatpush1.bf16.msra.mxu0 0
  %3854 = vmatprep.subr.bf16.mxu0 0
  %3855 = vmatpush1.bf16.msra.mxu0 0
  %3856 = vmatprep.subr.bf16.mxu0 0
  %3857 = vmatpush1.bf16.msra.mxu0 %v3817
  %3858 = vmatprep.subr.bf16.mxu0 0
  %3859 = vmatpush1.bf16.msra.mxu0 %v3816
  %3860 = vmatprep.subr.bf16.mxu0 0
  %3861 = vmatpush2.bf16.msra.mxu0 0
  %3862 = vmatprep.subr.bf16.mxu0 0
  %3863 = vmatpush2.bf16.msra.mxu0 0
  %3864 = vmatprep.subr.bf16.mxu0 0
  %3865 = vmatpush2.bf16.msra.mxu0 0
  %3866 = vmatprep.subr.bf16.mxu0 0
  %3867 = vmatpush2.bf16.msra.mxu0 0
  %3868 = vmatprep.subr.bf16.mxu0 0
  %3869 = vmatpush2.bf16.msra.mxu0 0
  %3870 = vmatprep.subr.bf16.mxu0 0
  %3871 = vmatpush2.bf16.msra.mxu0 0
  %3872 = vmatprep.subr.bf16.mxu0 0
  %3873 = vmatpush2.bf16.msra.mxu0 0
  %3874 = vmatprep.subr.bf16.mxu0 0
  %3875 = vmatpush2.bf16.msra.mxu0 0
  %3876 = vmatprep.mubr.bf16.mxu0 0
  %3877 = vmatmul.mubr.bf16.gmra.mxu0 %v3821
  %v3878 = vpop.f32.mrf.mxu0
  %v3879 = vadd.f32 0.0, %v3878
  %v3880 = vpop.f32.mrf.mxu0
  %v3881 = vpop.f32.mrf.mxu0
  %v3882 = vadd.f32 0.0, %v3881
  %v3883 = vpop.f32.mrf.mxu0
  %3884 = vmatprep.mubr.bf16.mxu0 0
  %3885 = vmatmul.mubr.bf16.gmra.mxu0 %v3824
  %v3886 = vpop.f32.mrf.mxu0
  %v3887 = vadd.f32 0.0, %v3886
  %v3888 = vpop.f32.mrf.mxu0
  %v3889 = vpop.f32.mrf.mxu0
  %v3890 = vadd.f32 0.0, %v3889
  %v3891 = vpop.f32.mrf.mxu0
  %3892 = vmatprep.mubr.bf16.mxu0 0
  %3893 = vmatmul.mubr.bf16.gmra.mxu0 %v3827
  %v3894 = vpop.f32.mrf.mxu0
  %v3895 = vadd.f32 0.0, %v3894
  %v3896 = vpop.f32.mrf.mxu0
  %v3897 = vpop.f32.mrf.mxu0
  %v3898 = vadd.f32 0.0, %v3897
  %v3899 = vpop.f32.mrf.mxu0
  %3900 = vmatprep.mubr.bf16.mxu0 0
  %3901 = vmatmul.mubr.bf16.gmra.mxu0 %v3830
  %v3902 = vpop.f32.mrf.mxu0
  %v3903 = vadd.f32 0.0, %v3902
  %v3904 = vpop.f32.mrf.mxu0
  %v3905 = vpop.f32.mrf.mxu0
  %v3906 = vadd.f32 0.0, %v3905
  %v3907 = vpop.f32.mrf.mxu0
  %3908 = vmatprep.mubr.bf16.mxu0 0
  %3909 = vmatmul.mubr.bf16.gmra.mxu0 %v3833
  %v3910 = vpop.f32.mrf.mxu0
  %v3911 = vadd.f32 0.0, %v3910
  %v3912 = vpop.f32.mrf.mxu0
  %v3913 = vpop.f32.mrf.mxu0
  %v3914 = vadd.f32 0.0, %v3913
  %v3915 = vpop.f32.mrf.mxu0
  %3916 = vmatprep.mubr.bf16.mxu0 0
  %3917 = vmatmul.mubr.bf16.gmra.mxu0 %v3836
  %v3918 = vpop.f32.mrf.mxu0
  %v3919 = vadd.f32 0.0, %v3918
  %v3920 = vpop.f32.mrf.mxu0
  %v3921 = vpop.f32.mrf.mxu0
  %v3922 = vadd.f32 0.0, %v3921
  %v3923 = vpop.f32.mrf.mxu0
  %3924 = vmatprep.mubr.bf16.mxu0 0
  %3925 = vmatmul.mubr.bf16.gmra.mxu0 %v3839
  %v3926 = vpop.f32.mrf.mxu0
  %v3927 = vadd.f32 0.0, %v3926
  %v3928 = vpop.f32.mrf.mxu0
  %v3929 = vpop.f32.mrf.mxu0
  %v3930 = vadd.f32 0.0, %v3929
  %v3931 = vpop.f32.mrf.mxu0
  %3932 = vmatprep.mubr.bf16.mxu0 0
  %3933 = vmatmul.mubr.bf16.gmra.mxu0 %v3842
  %v3934 = vpop.f32.mrf.mxu0
  %v3935 = vadd.f32 0.0, %v3934
  %v3936 = vpop.f32.mrf.mxu0
  %v3937 = vpop.f32.mrf.mxu0
  %v3938 = vadd.f32 0.0, %v3937
  %v3939 = vpop.f32.mrf.mxu0
  %3940 = vdwg.mxu0
  %v3941 = vadd.f32 %v3366, %v3879
  %v3942 = vadd.f32 %v3367, %v3882
  %v3943 = vadd.f32 %v3368, %v3887
  %v3944 = vadd.f32 %v3369, %v3890
  %v3945 = vadd.f32 %v3370, %v3895
  %v3946 = vadd.f32 %v3371, %v3898
  %v3947 = vadd.f32 %v3372, %v3903
  %v3948 = vadd.f32 %v3373, %v3906
  %v3949 = vadd.f32 %v3374, %v3911
  %v3950 = vadd.f32 %v3375, %v3914
  %v3951 = vadd.f32 %v3376, %v3919
  %v3952 = vadd.f32 %v3377, %v3922
  %v3953 = vadd.f32 %v3378, %v3927
  %v3954 = vadd.f32 %v3379, %v3930
  %v3955 = vadd.f32 %v3380, %v3935
  %v3956 = vadd.f32 %v3381, %v3938
  %v3957 = vadd.f32 %v3941, %v60
  %v3958 = vadd.f32 %v3942, %v61
  %v3959 = vadd.f32 %v3943, %v62
  %v3960 = vadd.f32 %v3944, %v63
  %v3961 = vadd.f32 %v3945, %v64
  %v3962 = vadd.f32 %v3946, %v65
  %v3963 = vadd.f32 %v3947, %v66
  %v3964 = vadd.f32 %v3948, %v67
  %v3965 = vadd.f32 %v3949, %v68
  %v3966 = vadd.f32 %v3950, %v69
  %v3967 = vadd.f32 %v3951, %v70
  %v3968 = vadd.f32 %v3952, %v71
  %v3969 = vadd.f32 %v3953, %v72
  %v3970 = vadd.f32 %v3954, %v73
  %v3971 = vadd.f32 %v3955, %v74
  %v3972 = vadd.f32 %v3956, %v75
  %v3973 = vld [vmem:[%s15] sm:$0x1]
  %v3974 = vmul.f32 %v3957, %v3957
  %v3975 = vmul.f32 %v3958, %v3958
  %v3976 = vmul.f32 %v3959, %v3959
  %v3977 = vmul.f32 %v3960, %v3960
  %v3978 = vmul.f32 %v3961, %v3961
  %v3979 = vmul.f32 %v3962, %v3962
  %v3980 = vmul.f32 %v3963, %v3963
  %v3981 = vmul.f32 %v3964, %v3964
  %v3982 = vmul.f32 %v3965, %v3965
  %v3983 = vmul.f32 %v3966, %v3966
  %v3984 = vmul.f32 %v3967, %v3967
  %v3985 = vmul.f32 %v3968, %v3968
  %v3986 = vmul.f32 %v3969, %v3969
  %v3987 = vmul.f32 %v3970, %v3970
  %v3988 = vmul.f32 %v3971, %v3971
  %v3989 = vmul.f32 %v3972, %v3972
  %v3990 = vsel %vm93, %v3974, 0.0
  %3991 = vadd.xlane.f32.xlu0 %v3990
  %v3992 = vpop.xlane.xlu0 %3991
  %v3993 = vsel %vm93, %v3975, 0.0
  %3994 = vadd.xlane.f32.xlu0 %v3993
  %v3995 = vpop.xlane.xlu0 %3994
  %v3996 = vsel %vm93, %v3976, 0.0
  %3997 = vadd.xlane.f32.xlu0 %v3996
  %v3998 = vpop.xlane.xlu0 %3997
  %v3999 = vsel %vm93, %v3977, 0.0
  %4000 = vadd.xlane.f32.xlu0 %v3999
  %v4001 = vpop.xlane.xlu0 %4000
  %v4002 = vsel %vm93, %v3978, 0.0
  %4003 = vadd.xlane.f32.xlu0 %v4002
  %v4004 = vpop.xlane.xlu0 %4003
  %v4005 = vsel %vm93, %v3979, 0.0
  %4006 = vadd.xlane.f32.xlu0 %v4005
  %v4007 = vpop.xlane.xlu0 %4006
  %v4008 = vsel %vm93, %v3980, 0.0
  %4009 = vadd.xlane.f32.xlu0 %v4008
  %v4010 = vpop.xlane.xlu0 %4009
  %v4011 = vsel %vm93, %v3981, 0.0
  %4012 = vadd.xlane.f32.xlu0 %v4011
  %v4013 = vpop.xlane.xlu0 %4012
  %v4014 = vsel %vm93, %v3982, 0.0
  %4015 = vadd.xlane.f32.xlu0 %v4014
  %v4016 = vpop.xlane.xlu0 %4015
  %v4017 = vsel %vm93, %v3983, 0.0
  %4018 = vadd.xlane.f32.xlu0 %v4017
  %v4019 = vpop.xlane.xlu0 %4018
  %v4020 = vsel %vm93, %v3984, 0.0
  %4021 = vadd.xlane.f32.xlu0 %v4020
  %v4022 = vpop.xlane.xlu0 %4021
  %v4023 = vsel %vm93, %v3985, 0.0
  %4024 = vadd.xlane.f32.xlu0 %v4023
  %v4025 = vpop.xlane.xlu0 %4024
  %v4026 = vsel %vm93, %v3986, 0.0
  %4027 = vadd.xlane.f32.xlu0 %v4026
  %v4028 = vpop.xlane.xlu0 %4027
  %v4029 = vsel %vm93, %v3987, 0.0
  %4030 = vadd.xlane.f32.xlu0 %v4029
  %v4031 = vpop.xlane.xlu0 %4030
  %v4032 = vsel %vm93, %v3988, 0.0
  %4033 = vadd.xlane.f32.xlu0 %v4032
  %v4034 = vpop.xlane.xlu0 %4033
  %v4035 = vsel %vm93, %v3989, 0.0
  %4036 = vadd.xlane.f32.xlu0 %v4035
  %v4037 = vpop.xlane.xlu0 %4036
  %v4038 = vmul.f32 %v3992, %v142
  %v4039 = vmul.f32 %v3995, %v142
  %v4040 = vmul.f32 %v3998, %v142
  %v4041 = vmul.f32 %v4001, %v142
  %v4042 = vmul.f32 %v4004, %v142
  %v4043 = vmul.f32 %v4007, %v142
  %v4044 = vmul.f32 %v4010, %v142
  %v4045 = vmul.f32 %v4013, %v142
  %v4046 = vmul.f32 %v4016, %v142
  %v4047 = vmul.f32 %v4019, %v142
  %v4048 = vmul.f32 %v4022, %v142
  %v4049 = vmul.f32 %v4025, %v142
  %v4050 = vmul.f32 %v4028, %v142
  %v4051 = vmul.f32 %v4031, %v142
  %v4052 = vmul.f32 %v4034, %v142
  %v4053 = vmul.f32 %v4037, %v142
  %v4054 = vadd.f32 %v4038, 1e-06
  %v4055 = vadd.f32 %v4039, 1e-06
  %v4056 = vadd.f32 %v4040, 1e-06
  %v4057 = vadd.f32 %v4041, 1e-06
  %v4058 = vadd.f32 %v4042, 1e-06
  %v4059 = vadd.f32 %v4043, 1e-06
  %v4060 = vadd.f32 %v4044, 1e-06
  %v4061 = vadd.f32 %v4045, 1e-06
  %v4062 = vadd.f32 %v4046, 1e-06
  %v4063 = vadd.f32 %v4047, 1e-06
  %v4064 = vadd.f32 %v4048, 1e-06
  %v4065 = vadd.f32 %v4049, 1e-06
  %v4066 = vadd.f32 %v4050, 1e-06
  %v4067 = vadd.f32 %v4051, 1e-06
  %v4068 = vadd.f32 %v4052, 1e-06
  %v4069 = vadd.f32 %v4053, 1e-06
  %v4070 = vrsqrt.pop %v4054
  %v4071 = vrsqrt.pop %v4055
  %v4072 = vrsqrt.pop %v4056
  %v4073 = vrsqrt.pop %v4057
  %v4074 = vrsqrt.pop %v4058
  %v4075 = vrsqrt.pop %v4059
  %v4076 = vrsqrt.pop %v4060
  %v4077 = vrsqrt.pop %v4061
  %v4078 = vrsqrt.pop %v4062
  %v4079 = vrsqrt.pop %v4063
  %v4080 = vrsqrt.pop %v4064
  %v4081 = vrsqrt.pop %v4065
  %v4082 = vrsqrt.pop %v4066
  %v4083 = vrsqrt.pop %v4067
  %v4084 = vrsqrt.pop %v4068
  %v4085 = vrsqrt.pop %v4069
  %v4086 = vmul.f32 %v3957, %v4070
  %v4087 = vmul.f32 %v3958, %v4071
  %v4088 = vmul.f32 %v3959, %v4072
  %v4089 = vmul.f32 %v3960, %v4073
  %v4090 = vmul.f32 %v3961, %v4074
  %v4091 = vmul.f32 %v3962, %v4075
  %v4092 = vmul.f32 %v3963, %v4076
  %v4093 = vmul.f32 %v3964, %v4077
  %v4094 = vmul.f32 %v3965, %v4078
  %v4095 = vmul.f32 %v3966, %v4079
  %v4096 = vmul.f32 %v3967, %v4080
  %v4097 = vmul.f32 %v3968, %v4081
  %v4098 = vmul.f32 %v3969, %v4082
  %v4099 = vmul.f32 %v3970, %v4083
  %v4100 = vmul.f32 %v3971, %v4084
  %v4101 = vmul.f32 %v3972, %v4085
  %v4103 = vlaneseq
  %v4104 = vshrl.u32 %v4103, 7
  %v4105 = vsub.s32 0, %v4104
  %v4106 = vrot.slane %v3973, %v4105
  %v4108 = vmul.f32 %v4086, %v4106
  %v4109 = vmul.f32 %v4087, %v4106
  %v4110 = vmul.f32 %v4088, %v4106
  %v4111 = vmul.f32 %v4089, %v4106
  %v4112 = vmul.f32 %v4090, %v4106
  %v4113 = vmul.f32 %v4091, %v4106
  %v4114 = vmul.f32 %v4092, %v4106
  %v4115 = vmul.f32 %v4093, %v4106
  %v4116 = vmul.f32 %v4094, %v4106
  %v4117 = vmul.f32 %v4095, %v4106
  %v4118 = vmul.f32 %v4096, %v4106
  %v4119 = vmul.f32 %v4097, %v4106
  %v4120 = vmul.f32 %v4098, %v4106
  %v4121 = vmul.f32 %v4099, %v4106
  %v4122 = vmul.f32 %v4100, %v4106
  %v4123 = vmul.f32 %v4101, %v4106
  %v4124 = vpack.c.bf16 %v4109, %v4108
  %v4125 = vpack.c.bf16 %v4111, %v4110
  %v4126 = vpack.c.bf16 %v4113, %v4112
  %v4127 = vpack.c.bf16 %v4115, %v4114
  %v4128 = vpack.c.bf16 %v4117, %v4116
  %v4129 = vpack.c.bf16 %v4119, %v4118
  %v4130 = vpack.c.bf16 %v4121, %v4120
  %v4131 = vpack.c.bf16 %v4123, %v4122
  %v4132 = vld [vmem:[%s16] sm:$0xff]
  %v4133 = vld [vmem:[%s16 + $0x8] sm:$0xff]
  %v4134 = vld [vmem:[%s16 + $0x10] sm:$0xff]
  %v4135 = vld [vmem:[%s16 + $0x18] sm:$0xff]
  %v4136 = vld [vmem:[%s16 + $0x20] sm:$0xff]
  %v4137 = vld [vmem:[%s16 + $0x28] sm:$0xff]
  %v4138 = vld [vmem:[%s16 + $0x30] sm:$0xff]
  %v4139 = vld [vmem:[%s16 + $0x38] sm:$0xff]
  %v4148 = vunpack.c.l.b16 %v4132
  %v4149 = vunpack.c.h.b16 %v4132
  %v4150 = vunpack.c.l.b16 %v4133
  %v4151 = vunpack.c.h.b16 %v4133
  %v4152 = vunpack.c.l.b16 %v4134
  %v4153 = vunpack.c.h.b16 %v4134
  %v4154 = vunpack.c.l.b16 %v4135
  %v4155 = vunpack.c.h.b16 %v4135
  %v4156 = vunpack.c.l.b16 %v4136
  %v4157 = vunpack.c.h.b16 %v4136
  %v4158 = vunpack.c.l.b16 %v4137
  %v4159 = vunpack.c.h.b16 %v4137
  %v4160 = vunpack.c.l.b16 %v4138
  %v4161 = vunpack.c.h.b16 %v4138
  %v4162 = vunpack.c.l.b16 %v4139
  %v4163 = vunpack.c.h.b16 %v4139
  %v4164 = vpack.c.b16 %v4150, %v4148
  %v4165 = vpack.c.b16 %v4151, %v4149
  %v4166 = vpack.c.b16 %v4154, %v4152
  %v4167 = vpack.c.b16 %v4155, %v4153
  %v4168 = vpack.c.b16 %v4158, %v4156
  %v4169 = vpack.c.b16 %v4159, %v4157
  %v4170 = vpack.c.b16 %v4162, %v4160
  %v4171 = vpack.c.b16 %v4163, %v4161
  %v4181 = vsel %vm93, %v4124, 0
  %v4184 = vsel %vm93, %v4125, 0
  %v4187 = vsel %vm93, %v4126, 0
  %v4190 = vsel %vm93, %v4127, 0
  %v4193 = vsel %vm93, %v4128, 0
  %v4196 = vsel %vm93, %v4129, 0
  %v4199 = vsel %vm93, %v4130, 0
  %v4202 = vsel %vm93, %v4131, 0
  %4204 = vmatprep.subr.bf16.mxu0 0
  %4205 = vmatpush1.bf16.msra.mxu0 0
  %4206 = vmatprep.subr.bf16.mxu0 0
  %4207 = vmatpush1.bf16.msra.mxu0 0
  %4208 = vmatprep.subr.bf16.mxu0 0
  %4209 = vmatpush1.bf16.msra.mxu0 0
  %4210 = vmatprep.subr.bf16.mxu0 0
  %4211 = vmatpush1.bf16.msra.mxu0 0
  %4212 = vmatprep.subr.bf16.mxu0 %v4171
  %4213 = vmatpush1.bf16.msra.mxu0 %v4170
  %4214 = vmatprep.subr.bf16.mxu0 %v4169
  %4215 = vmatpush1.bf16.msra.mxu0 %v4168
  %4216 = vmatprep.subr.bf16.mxu0 %v4167
  %4217 = vmatpush1.bf16.msra.mxu0 %v4166
  %4218 = vmatprep.subr.bf16.mxu0 %v4165
  %4219 = vmatpush1.bf16.msra.mxu0 %v4164
  %4220 = vmatprep.subr.bf16.mxu0 0
  %4221 = vmatpush2.bf16.msra.mxu0 0
  %4222 = vmatprep.subr.bf16.mxu0 0
  %4223 = vmatpush2.bf16.msra.mxu0 0
  %4224 = vmatprep.subr.bf16.mxu0 0
  %4225 = vmatpush2.bf16.msra.mxu0 0
  %4226 = vmatprep.subr.bf16.mxu0 0
  %4227 = vmatpush2.bf16.msra.mxu0 0
  %4228 = vmatprep.subr.bf16.mxu0 0
  %4229 = vmatpush2.bf16.msra.mxu0 0
  %4230 = vmatprep.subr.bf16.mxu0 0
  %4231 = vmatpush2.bf16.msra.mxu0 0
  %4232 = vmatprep.subr.bf16.mxu0 0
  %4233 = vmatpush2.bf16.msra.mxu0 0
  %4234 = vmatprep.subr.bf16.mxu0 0
  %4235 = vmatpush2.bf16.msra.mxu0 0
  %4236 = vmatprep.mubr.bf16.mxu0 0
  %4237 = vmatmul.mubr.bf16.gmra.mxu0 %v4181
  %v4238 = vpop.f32.mrf.mxu0
  %v4239 = vadd.f32 0.0, %v4238
  %v4240 = vpop.f32.mrf.mxu0
  %v4241 = vadd.f32 0.0, %v4240
  %v4242 = vpop.f32.mrf.mxu0
  %v4243 = vadd.f32 0.0, %v4242
  %v4244 = vpop.f32.mrf.mxu0
  %v4245 = vadd.f32 0.0, %v4244
  %4246 = vmatprep.mubr.bf16.mxu0 0
  %4247 = vmatmul.mubr.bf16.gmra.mxu0 %v4184
  %v4248 = vpop.f32.mrf.mxu0
  %v4249 = vadd.f32 0.0, %v4248
  %v4250 = vpop.f32.mrf.mxu0
  %v4251 = vadd.f32 0.0, %v4250
  %v4252 = vpop.f32.mrf.mxu0
  %v4253 = vadd.f32 0.0, %v4252
  %v4254 = vpop.f32.mrf.mxu0
  %v4255 = vadd.f32 0.0, %v4254
  %4256 = vmatprep.mubr.bf16.mxu0 0
  %4257 = vmatmul.mubr.bf16.gmra.mxu0 %v4187
  %v4258 = vpop.f32.mrf.mxu0
  %v4259 = vadd.f32 0.0, %v4258
  %v4260 = vpop.f32.mrf.mxu0
  %v4261 = vadd.f32 0.0, %v4260
  %v4262 = vpop.f32.mrf.mxu0
  %v4263 = vadd.f32 0.0, %v4262
  %v4264 = vpop.f32.mrf.mxu0
  %v4265 = vadd.f32 0.0, %v4264
  %4266 = vmatprep.mubr.bf16.mxu0 0
  %4267 = vmatmul.mubr.bf16.gmra.mxu0 %v4190
  %v4268 = vpop.f32.mrf.mxu0
  %v4269 = vadd.f32 0.0, %v4268
  %v4270 = vpop.f32.mrf.mxu0
  %v4271 = vadd.f32 0.0, %v4270
  %v4272 = vpop.f32.mrf.mxu0
  %v4273 = vadd.f32 0.0, %v4272
  %v4274 = vpop.f32.mrf.mxu0
  %v4275 = vadd.f32 0.0, %v4274
  %4276 = vmatprep.mubr.bf16.mxu0 0
  %4277 = vmatmul.mubr.bf16.gmra.mxu0 %v4193
  %v4278 = vpop.f32.mrf.mxu0
  %v4279 = vadd.f32 0.0, %v4278
  %v4280 = vpop.f32.mrf.mxu0
  %v4281 = vadd.f32 0.0, %v4280
  %v4282 = vpop.f32.mrf.mxu0
  %v4283 = vadd.f32 0.0, %v4282
  %v4284 = vpop.f32.mrf.mxu0
  %v4285 = vadd.f32 0.0, %v4284
  %4286 = vmatprep.mubr.bf16.mxu0 0
  %4287 = vmatmul.mubr.bf16.gmra.mxu0 %v4196
  %v4288 = vpop.f32.mrf.mxu0
  %v4289 = vadd.f32 0.0, %v4288
  %v4290 = vpop.f32.mrf.mxu0
  %v4291 = vadd.f32 0.0, %v4290
  %v4292 = vpop.f32.mrf.mxu0
  %v4293 = vadd.f32 0.0, %v4292
  %v4294 = vpop.f32.mrf.mxu0
  %v4295 = vadd.f32 0.0, %v4294
  %4296 = vmatprep.mubr.bf16.mxu0 0
  %4297 = vmatmul.mubr.bf16.gmra.mxu0 %v4199
  %v4298 = vpop.f32.mrf.mxu0
  %v4299 = vadd.f32 0.0, %v4298
  %v4300 = vpop.f32.mrf.mxu0
  %v4301 = vadd.f32 0.0, %v4300
  %v4302 = vpop.f32.mrf.mxu0
  %v4303 = vadd.f32 0.0, %v4302
  %v4304 = vpop.f32.mrf.mxu0
  %v4305 = vadd.f32 0.0, %v4304
  %4306 = vmatprep.mubr.bf16.mxu0 0
  %4307 = vmatmul.mubr.bf16.gmra.mxu0 %v4202
  %v4308 = vpop.f32.mrf.mxu0
  %v4309 = vadd.f32 0.0, %v4308
  %v4310 = vpop.f32.mrf.mxu0
  %v4311 = vadd.f32 0.0, %v4310
  %v4312 = vpop.f32.mrf.mxu0
  %v4313 = vadd.f32 0.0, %v4312
  %v4314 = vpop.f32.mrf.mxu0
  %v4315 = vadd.f32 0.0, %v4314
  %4316 = vdwg.mxu0
  %v4317 = vxor.u32 %v4239, 2147483648
  %v4318 = vxor.u32 %v4243, 2147483648
  %v4319 = vxor.u32 %v4249, 2147483648
  %v4320 = vxor.u32 %v4253, 2147483648
  %v4321 = vxor.u32 %v4259, 2147483648
  %v4322 = vxor.u32 %v4263, 2147483648
  %v4323 = vxor.u32 %v4269, 2147483648
  %v4324 = vxor.u32 %v4273, 2147483648
  %v4325 = vxor.u32 %v4279, 2147483648
  %v4326 = vxor.u32 %v4283, 2147483648
  %v4327 = vxor.u32 %v4289, 2147483648
  %v4328 = vxor.u32 %v4293, 2147483648
  %v4329 = vxor.u32 %v4299, 2147483648
  %v4330 = vxor.u32 %v4303, 2147483648
  %v4331 = vxor.u32 %v4309, 2147483648
  %v4332 = vxor.u32 %v4313, 2147483648
  %v4333 = vmul.f32 %v4317, 1.442695
  %v4334 = vpow.pop %v4333
  %v4335 = vmul.f32 %v4318, 1.442695
  %v4336 = vpow.pop %v4335
  %v4337 = vmul.f32 %v4319, 1.442695
  %v4338 = vpow.pop %v4337
  %v4339 = vmul.f32 %v4320, 1.442695
  %v4340 = vpow.pop %v4339
  %v4341 = vmul.f32 %v4321, 1.442695
  %v4342 = vpow.pop %v4341
  %v4343 = vmul.f32 %v4322, 1.442695
  %v4344 = vpow.pop %v4343
  %v4345 = vmul.f32 %v4323, 1.442695
  %v4346 = vpow.pop %v4345
  %v4347 = vmul.f32 %v4324, 1.442695
  %v4348 = vpow.pop %v4347
  %v4349 = vmul.f32 %v4325, 1.442695
  %v4350 = vpow.pop %v4349
  %v4351 = vmul.f32 %v4326, 1.442695
  %v4352 = vpow.pop %v4351
  %v4353 = vmul.f32 %v4327, 1.442695
  %v4354 = vpow.pop %v4353
  %v4355 = vmul.f32 %v4328, 1.442695
  %v4356 = vpow.pop %v4355
  %v4357 = vmul.f32 %v4329, 1.442695
  %v4358 = vpow.pop %v4357
  %v4359 = vmul.f32 %v4330, 1.442695
  %v4360 = vpow.pop %v4359
  %v4361 = vmul.f32 %v4331, 1.442695
  %v4362 = vpow.pop %v4361
  %v4363 = vmul.f32 %v4332, 1.442695
  %v4364 = vpow.pop %v4363
  %v4365 = vadd.f32 %v4334, 1.0
  %v4366 = vadd.f32 %v4336, 1.0
  %v4367 = vadd.f32 %v4338, 1.0
  %v4368 = vadd.f32 %v4340, 1.0
  %v4369 = vadd.f32 %v4342, 1.0
  %v4370 = vadd.f32 %v4344, 1.0
  %v4371 = vadd.f32 %v4346, 1.0
  %v4372 = vadd.f32 %v4348, 1.0
  %v4373 = vadd.f32 %v4350, 1.0
  %v4374 = vadd.f32 %v4352, 1.0
  %v4375 = vadd.f32 %v4354, 1.0
  %v4376 = vadd.f32 %v4356, 1.0
  %v4377 = vadd.f32 %v4358, 1.0
  %v4378 = vadd.f32 %v4360, 1.0
  %v4379 = vadd.f32 %v4362, 1.0
  %v4380 = vadd.f32 %v4364, 1.0
  %v4381 = vrcp.pop %v4365
  %v4382 = vmul.f32 1.0, %v4381
  %v4383 = vrcp.pop %v4366
  %v4384 = vmul.f32 1.0, %v4383
  %v4385 = vrcp.pop %v4367
  %v4386 = vmul.f32 1.0, %v4385
  %v4387 = vrcp.pop %v4368
  %v4388 = vmul.f32 1.0, %v4387
  %v4389 = vrcp.pop %v4369
  %v4390 = vmul.f32 1.0, %v4389
  %v4391 = vrcp.pop %v4370
  %v4392 = vmul.f32 1.0, %v4391
  %v4393 = vrcp.pop %v4371
  %v4394 = vmul.f32 1.0, %v4393
  %v4395 = vrcp.pop %v4372
  %v4396 = vmul.f32 1.0, %v4395
  %v4397 = vrcp.pop %v4373
  %v4398 = vmul.f32 1.0, %v4397
  %v4399 = vrcp.pop %v4374
  %v4400 = vmul.f32 1.0, %v4399
  %v4401 = vrcp.pop %v4375
  %v4402 = vmul.f32 1.0, %v4401
  %v4403 = vrcp.pop %v4376
  %v4404 = vmul.f32 1.0, %v4403
  %v4405 = vrcp.pop %v4377
  %v4406 = vmul.f32 1.0, %v4405
  %v4407 = vrcp.pop %v4378
  %v4408 = vmul.f32 1.0, %v4407
  %v4409 = vrcp.pop %v4379
  %v4410 = vmul.f32 1.0, %v4409
  %v4411 = vrcp.pop %v4380
  %v4412 = vmul.f32 1.0, %v4411
  %v4413 = vmul.f32 %v4239, %v4382
  %v4414 = vmul.f32 %v4243, %v4384
  %v4415 = vmul.f32 %v4249, %v4386
  %v4416 = vmul.f32 %v4253, %v4388
  %v4417 = vmul.f32 %v4259, %v4390
  %v4418 = vmul.f32 %v4263, %v4392
  %v4419 = vmul.f32 %v4269, %v4394
  %v4420 = vmul.f32 %v4273, %v4396
  %v4421 = vmul.f32 %v4279, %v4398
  %v4422 = vmul.f32 %v4283, %v4400
  %v4423 = vmul.f32 %v4289, %v4402
  %v4424 = vmul.f32 %v4293, %v4404
  %v4425 = vmul.f32 %v4299, %v4406
  %v4426 = vmul.f32 %v4303, %v4408
  %v4427 = vmul.f32 %v4309, %v4410
  %v4428 = vmul.f32 %v4313, %v4412
  %v4429 = vmul.f32 %v4413, %v4241
  %v4430 = vmul.f32 %v4414, %v4245
  %v4431 = vmul.f32 %v4415, %v4251
  %v4432 = vmul.f32 %v4416, %v4255
  %v4433 = vmul.f32 %v4417, %v4261
  %v4434 = vmul.f32 %v4418, %v4265
  %v4435 = vmul.f32 %v4419, %v4271
  %v4436 = vmul.f32 %v4420, %v4275
  %v4437 = vmul.f32 %v4421, %v4281
  %v4438 = vmul.f32 %v4422, %v4285
  %v4439 = vmul.f32 %v4423, %v4291
  %v4440 = vmul.f32 %v4424, %v4295
  %v4441 = vmul.f32 %v4425, %v4301
  %v4442 = vmul.f32 %v4426, %v4305
  %v4443 = vmul.f32 %v4427, %v4311
  %v4444 = vmul.f32 %v4428, %v4315
  %v4445 = vpack.c.bf16 %v4430, %v4429
  %v4446 = vpack.c.bf16 %v4432, %v4431
  %v4447 = vpack.c.bf16 %v4434, %v4433
  %v4448 = vpack.c.bf16 %v4436, %v4435
  %v4449 = vpack.c.bf16 %v4438, %v4437
  %v4450 = vpack.c.bf16 %v4440, %v4439
  %v4451 = vpack.c.bf16 %v4442, %v4441
  %v4452 = vpack.c.bf16 %v4444, %v4443
  %v4453 = vld [vmem:[%s17] sm:$0xf]
  %v4454 = vld [vmem:[%s17 + $0x4] sm:$0xf]
  %v4455 = vld [vmem:[%s17 + $0x8] sm:$0xf]
  %v4456 = vld [vmem:[%s17 + $0xc] sm:$0xf]
  %v4457 = vld [vmem:[%s17 + $0x10] sm:$0xf]
  %v4458 = vld [vmem:[%s17 + $0x14] sm:$0xf]
  %v4459 = vld [vmem:[%s17 + $0x18] sm:$0xf]
  %v4460 = vld [vmem:[%s17 + $0x1c] sm:$0xf]
  %v4461 = vld [vmem:[%s17 + $0x20] sm:$0xf]
  %v4462 = vld [vmem:[%s17 + $0x24] sm:$0xf]
  %v4463 = vld [vmem:[%s17 + $0x28] sm:$0xf]
  %v4464 = vld [vmem:[%s17 + $0x2c] sm:$0xf]
  %v4465 = vld [vmem:[%s17 + $0x30] sm:$0xf]
  %v4466 = vld [vmem:[%s17 + $0x34] sm:$0xf]
  %v4467 = vld [vmem:[%s17 + $0x38] sm:$0xf]
  %v4468 = vld [vmem:[%s17 + $0x3c] sm:$0xf]
  %v4485 = vunpack.c.l.b16 %v4453
  %v4486 = vunpack.c.l.b16 %v4454
  %v4487 = vunpack.c.l.b16 %v4455
  %v4488 = vunpack.c.l.b16 %v4456
  %v4489 = vunpack.c.l.b16 %v4457
  %v4490 = vunpack.c.l.b16 %v4458
  %v4491 = vunpack.c.l.b16 %v4459
  %v4492 = vunpack.c.l.b16 %v4460
  %v4493 = vunpack.c.l.b16 %v4461
  %v4494 = vunpack.c.l.b16 %v4462
  %v4495 = vunpack.c.l.b16 %v4463
  %v4496 = vunpack.c.l.b16 %v4464
  %v4497 = vunpack.c.l.b16 %v4465
  %v4498 = vunpack.c.l.b16 %v4466
  %v4499 = vunpack.c.l.b16 %v4467
  %v4500 = vunpack.c.l.b16 %v4468
  %v4501 = vpack.c.b16 %v4486, %v4485
  %v4502 = vpack.c.b16 %v4488, %v4487
  %v4503 = vpack.c.b16 %v4490, %v4489
  %v4504 = vpack.c.b16 %v4492, %v4491
  %v4505 = vpack.c.b16 %v4494, %v4493
  %v4506 = vpack.c.b16 %v4496, %v4495
  %v4507 = vpack.c.b16 %v4498, %v4497
  %v4508 = vpack.c.b16 %v4500, %v4499
  %4517 = vmatprep.subr.bf16.mxu0 0
  %4518 = vmatpush1.bf16.msra.mxu0 %v4508
  %4519 = vmatprep.subr.bf16.mxu0 0
  %4520 = vmatpush1.bf16.msra.mxu0 %v4507
  %4521 = vmatprep.subr.bf16.mxu0 0
  %4522 = vmatpush1.bf16.msra.mxu0 %v4506
  %4523 = vmatprep.subr.bf16.mxu0 0
  %4524 = vmatpush1.bf16.msra.mxu0 %v4505
  %4525 = vmatprep.subr.bf16.mxu0 0
  %4526 = vmatpush1.bf16.msra.mxu0 %v4504
  %4527 = vmatprep.subr.bf16.mxu0 0
  %4528 = vmatpush1.bf16.msra.mxu0 %v4503
  %4529 = vmatprep.subr.bf16.mxu0 0
  %4530 = vmatpush1.bf16.msra.mxu0 %v4502
  %4531 = vmatprep.subr.bf16.mxu0 0
  %4532 = vmatpush1.bf16.msra.mxu0 %v4501
  %4533 = vmatprep.subr.bf16.mxu0 0
  %4534 = vmatpush2.bf16.msra.mxu0 0
  %4535 = vmatprep.subr.bf16.mxu0 0
  %4536 = vmatpush2.bf16.msra.mxu0 0
  %4537 = vmatprep.subr.bf16.mxu0 0
  %4538 = vmatpush2.bf16.msra.mxu0 0
  %4539 = vmatprep.subr.bf16.mxu0 0
  %4540 = vmatpush2.bf16.msra.mxu0 0
  %4541 = vmatprep.subr.bf16.mxu0 0
  %4542 = vmatpush2.bf16.msra.mxu0 0
  %4543 = vmatprep.subr.bf16.mxu0 0
  %4544 = vmatpush2.bf16.msra.mxu0 0
  %4545 = vmatprep.subr.bf16.mxu0 0
  %4546 = vmatpush2.bf16.msra.mxu0 0
  %4547 = vmatprep.subr.bf16.mxu0 0
  %4548 = vmatpush2.bf16.msra.mxu0 0
  %4549 = vmatprep.mubr.bf16.mxu0 0
  %4550 = vmatmul.mubr.bf16.gmra.mxu0 %v4445
  %v4551 = vpop.f32.mrf.mxu0
  %v4552 = vadd.f32 0.0, %v4551
  %v4553 = vpop.f32.mrf.mxu0
  %v4554 = vpop.f32.mrf.mxu0
  %v4555 = vadd.f32 0.0, %v4554
  %v4556 = vpop.f32.mrf.mxu0
  %4557 = vmatprep.mubr.bf16.mxu0 0
  %4558 = vmatmul.mubr.bf16.gmra.mxu0 %v4446
  %v4559 = vpop.f32.mrf.mxu0
  %v4560 = vadd.f32 0.0, %v4559
  %v4561 = vpop.f32.mrf.mxu0
  %v4562 = vpop.f32.mrf.mxu0
  %v4563 = vadd.f32 0.0, %v4562
  %v4564 = vpop.f32.mrf.mxu0
  %4565 = vmatprep.mubr.bf16.mxu0 0
  %4566 = vmatmul.mubr.bf16.gmra.mxu0 %v4447
  %v4567 = vpop.f32.mrf.mxu0
  %v4568 = vadd.f32 0.0, %v4567
  %v4569 = vpop.f32.mrf.mxu0
  %v4570 = vpop.f32.mrf.mxu0
  %v4571 = vadd.f32 0.0, %v4570
  %v4572 = vpop.f32.mrf.mxu0
  %4573 = vmatprep.mubr.bf16.mxu0 0
  %4574 = vmatmul.mubr.bf16.gmra.mxu0 %v4448
  %v4575 = vpop.f32.mrf.mxu0
  %v4576 = vadd.f32 0.0, %v4575
  %v4577 = vpop.f32.mrf.mxu0
  %v4578 = vpop.f32.mrf.mxu0
  %v4579 = vadd.f32 0.0, %v4578
  %v4580 = vpop.f32.mrf.mxu0
  %4581 = vmatprep.mubr.bf16.mxu0 0
  %4582 = vmatmul.mubr.bf16.gmra.mxu0 %v4449
  %v4583 = vpop.f32.mrf.mxu0
  %v4584 = vadd.f32 0.0, %v4583
  %v4585 = vpop.f32.mrf.mxu0
  %v4586 = vpop.f32.mrf.mxu0
  %v4587 = vadd.f32 0.0, %v4586
  %v4588 = vpop.f32.mrf.mxu0
  %4589 = vmatprep.mubr.bf16.mxu0 0
  %4590 = vmatmul.mubr.bf16.gmra.mxu0 %v4450
  %v4591 = vpop.f32.mrf.mxu0
  %v4592 = vadd.f32 0.0, %v4591
  %v4593 = vpop.f32.mrf.mxu0
  %v4594 = vpop.f32.mrf.mxu0
  %v4595 = vadd.f32 0.0, %v4594
  %v4596 = vpop.f32.mrf.mxu0
  %4597 = vmatprep.mubr.bf16.mxu0 0
  %4598 = vmatmul.mubr.bf16.gmra.mxu0 %v4451
  %v4599 = vpop.f32.mrf.mxu0
  %v4600 = vadd.f32 0.0, %v4599
  %v4601 = vpop.f32.mrf.mxu0
  %v4602 = vpop.f32.mrf.mxu0
  %v4603 = vadd.f32 0.0, %v4602
  %v4604 = vpop.f32.mrf.mxu0
  %4605 = vmatprep.mubr.bf16.mxu0 0
  %4606 = vmatmul.mubr.bf16.gmra.mxu0 %v4452
  %v4607 = vpop.f32.mrf.mxu0
  %v4608 = vadd.f32 0.0, %v4607
  %v4609 = vpop.f32.mrf.mxu0
  %v4610 = vpop.f32.mrf.mxu0
  %v4611 = vadd.f32 0.0, %v4610
  %v4612 = vpop.f32.mrf.mxu0
  %4613 = vdwg.mxu0
  %4630 = vrot.lane.b32.xlu0 %v3957, 64
  %v4631 = vpop.permute.xlu0 %4630
  %4632 = vrot.lane.b32.xlu0 %v3958, 64
  %v4633 = vpop.permute.xlu0 %4632
  %4634 = vrot.lane.b32.xlu0 %v3959, 64
  %v4635 = vpop.permute.xlu0 %4634
  %4636 = vrot.lane.b32.xlu0 %v3960, 64
  %v4637 = vpop.permute.xlu0 %4636
  %4638 = vrot.lane.b32.xlu0 %v3961, 64
  %v4639 = vpop.permute.xlu0 %4638
  %4640 = vrot.lane.b32.xlu0 %v3962, 64
  %v4641 = vpop.permute.xlu0 %4640
  %4642 = vrot.lane.b32.xlu0 %v3963, 64
  %v4643 = vpop.permute.xlu0 %4642
  %4644 = vrot.lane.b32.xlu0 %v3964, 64
  %v4645 = vpop.permute.xlu0 %4644
  %4646 = vrot.lane.b32.xlu0 %v3965, 64
  %v4647 = vpop.permute.xlu0 %4646
  %4648 = vrot.lane.b32.xlu0 %v3966, 64
  %v4649 = vpop.permute.xlu0 %4648
  %4650 = vrot.lane.b32.xlu0 %v3967, 64
  %v4651 = vpop.permute.xlu0 %4650
  %4652 = vrot.lane.b32.xlu0 %v3968, 64
  %v4653 = vpop.permute.xlu0 %4652
  %4654 = vrot.lane.b32.xlu0 %v3969, 64
  %v4655 = vpop.permute.xlu0 %4654
  %4656 = vrot.lane.b32.xlu0 %v3970, 64
  %v4657 = vpop.permute.xlu0 %4656
  %4658 = vrot.lane.b32.xlu0 %v3971, 64
  %v4659 = vpop.permute.xlu0 %4658
  %4660 = vrot.lane.b32.xlu0 %v3972, 64
  %v4661 = vpop.permute.xlu0 %4660
  %v4678 = vsel %vm93, %v4552, %v4631
  %v4679 = vsel %vm93, %v4555, %v4633
  %v4680 = vsel %vm93, %v4560, %v4635
  %v4681 = vsel %vm93, %v4563, %v4637
  %v4682 = vsel %vm93, %v4568, %v4639
  %v4683 = vsel %vm93, %v4571, %v4641
  %v4684 = vsel %vm93, %v4576, %v4643
  %v4685 = vsel %vm93, %v4579, %v4645
  %v4686 = vsel %vm93, %v4584, %v4647
  %v4687 = vsel %vm93, %v4587, %v4649
  %v4688 = vsel %vm93, %v4592, %v4651
  %v4689 = vsel %vm93, %v4595, %v4653
  %v4690 = vsel %vm93, %v4600, %v4655
  %v4691 = vsel %vm93, %v4603, %v4657
  %v4692 = vsel %vm93, %v4608, %v4659
  %v4693 = vsel %vm93, %v4611, %v4661
  %4694 = vst [vmem:[%s18] sm:$0xff] %v4678
  %4695 = vst [vmem:[%s18 + $0x8] sm:$0xff] %v4679
  %4696 = vst [vmem:[%s18 + $0x10] sm:$0xff] %v4680
  %4697 = vst [vmem:[%s18 + $0x18] sm:$0xff] %v4681
  %4698 = vst [vmem:[%s18 + $0x20] sm:$0xff] %v4682
  %4699 = vst [vmem:[%s18 + $0x28] sm:$0xff] %v4683
  %4700 = vst [vmem:[%s18 + $0x30] sm:$0xff] %v4684
  %4701 = vst [vmem:[%s18 + $0x38] sm:$0xff] %v4685
  %4702 = vst [vmem:[%s18 + $0x40] sm:$0xff] %v4686
  %4703 = vst [vmem:[%s18 + $0x48] sm:$0xff] %v4687
  %4704 = vst [vmem:[%s18 + $0x50] sm:$0xff] %v4688
  %4705 = vst [vmem:[%s18 + $0x58] sm:$0xff] %v4689
  %4706 = vst [vmem:[%s18 + $0x60] sm:$0xff] %v4690
  %4707 = vst [vmem:[%s18 + $0x68] sm:$0xff] %v4691
  %4708 = vst [vmem:[%s18 + $0x70] sm:$0xff] %v4692
  %4709 = vst [vmem:[%s18 + $0x78] sm:$0xff] %v4693
  // Predicated region
  $region74: #{qwen3_decoder_layer.1} parent=0 // pred_check
    _
  $region75: #{qwen3_decoder_layer.1} parent=0 // pred_check_branch
    %4711 = sbr.rel (0) target = $region77
  $region76: #{qwen3_decoder_layer.1} parent=0 // pred_region
    _
  $region77: #{qwen3_decoder_layer.1} parent=0 // pred_fallthru
    _
  // Predicated region
  $region78: #{qwen3_decoder_layer.1} parent=0 // pred_check
    _
  $region79: #{qwen3_decoder_layer.1} parent=0 // pred_check_branch
    %4713 = sbr.rel (0) target = $region81
  $region80: #{qwen3_decoder_layer.1} parent=0 // pred_region
    _
  $region81: #{qwen3_decoder_layer.1} parent=0 // pred_fallthru
    _

</llo_original>
